<compile_context>
chip_gen: v7x
topology: tpu7x:2x2x1
jax: 0.10.0
libtpu: 0.0.40
codegen_flags: <defaults>
</compile_context>

<pallas_src>
import jax
import jax.numpy as jnp
from jax.experimental import pallas as pl
from jax.experimental.pallas import tpu as pltpu

_EPS = 1e-5
_VMEM = pl.BlockSpec(memory_space=pltpu.MemorySpace.VMEM)


def _round_up(x, m):
    return (x + m - 1) // m * m


# ----------------------------- Pallas kernel -------------------------------

def _fused_downsample_kernel(x_ref, w1_ref, g1_ref, be1_ref,
                             w2_ref, g2_ref, be2_ref,
                             o_ref, pad1_ref, pad2_ref):
    # x_ref : (2, 2, N, Ho, Wo, Cin) bf16  -- 2x2 pool candidates on leading dims
    # w*_ref: (3, 3*Ci, Cout) bf16         -- dy-major, (dx, ci)-flattened weights
    # g/be  : (1, Cout) f32                -- BN affine (conv2's Cout lane-padded)
    # o_ref : (N*Ho*Wo, Cout_pad) f32      -- lane-dense output slab
    # pad*  : (N, Ho+2, Wp, Ci) f32        -- zero-halo'd activations, Wp 8-aligned
    _, _, N, Ho, Wo, Cin = x_ref.shape
    C = pad2_ref.shape[-1]
    M = N * Ho * Wo

    # ---- fused 2x2 max-pool: 4 leading-index loads + elementwise max --------
    p = jnp.maximum(jnp.maximum(x_ref[0, 0], x_ref[0, 1]),
                    jnp.maximum(x_ref[1, 0], x_ref[1, 1]))   # (N, Ho, Wo, Cin)

    # ---- zero ONLY the 1-px halo border (not the whole buffer) --------------
    def zero_halo(pad_ref):
        n, hp, wp, ci = pad_ref.shape
        zr = jnp.zeros((n, 1, wp, ci), pad_ref.dtype)
        zc = jnp.zeros((n, hp, 1, ci), pad_ref.dtype)
        pad_ref[:, 0:1, :, :] = zr
        pad_ref[:, Ho + 1:Ho + 2, :, :] = zr
        pad_ref[:, :, 0:1, :] = zc
        pad_ref[:, :, Wo + 1:Wo + 2, :] = zc

    zero_halo(pad1_ref)
    zero_halo(pad2_ref)
    pad1_ref[:, 1:1 + Ho, 1:1 + Wo, :] = p.astype(pad1_ref.dtype)

    def conv3x3_bn_relu(pad_ref, col_ref, w_ref, g_ref, be_ref):
        # Per-dy accumulating matmuls on a 3-tap bf16 slab (K = 3*Ci): 3x less
        # im2col VMEM than a full 9-tap slab, f32 accumulation on the MXU.
        # Conv bias is dropped: it cancels exactly against the training-mode
        # BatchNorm mean subtraction.
        ci = pad_ref.shape[-1]
        acc = None
        for dy in range(3):
            for dx in range(3):
                col_ref[:, :, :, dx * ci:(dx + 1) * ci] = \
                    pad_ref[:, dy:dy + Ho, dx:dx + Wo, :].astype(col_ref.dtype)
            part = jnp.dot(col_ref[...].reshape(M, 3 * ci), w_ref[dy],
                           preferred_element_type=jnp.float32)
            acc = part if acc is None else acc + part

        # training-mode BatchNorm over (N, H, W); two-pass variance, all f32.
        mu = jnp.mean(acc, axis=0, keepdims=True)
        d = acc - mu
        var = jnp.mean(d * d, axis=0, keepdims=True)
        y = d * jax.lax.rsqrt(var + _EPS) * g_ref[...] + be_ref[...]
        return jnp.maximum(y, 0.0)                            # (M, Cout) f32

    # Two sequential run_scoped scopes reuse the same VMEM offset, so peak
    # slab scratch = max(conv1, conv2), not their sum.
    def conv1_scope(col_ref):
        y1 = conv3x3_bn_relu(pad1_ref, col_ref, w1_ref, g1_ref, be1_ref)
        # hand conv1 -> conv2 through VMEM (pad2 interior), not live registers
        pad2_ref[:, 1:1 + Ho, 1:1 + Wo, :] = \
            y1.reshape(N, Ho, Wo, C).astype(pad2_ref.dtype)

    def conv2_scope(col_ref):
        # conv2 params are lane-padded to a 128-multiple of output channels so
        # this store is fully lane-dense (unmasked vst); padded channels are
        # exactly zero and get sliced off in the wrapper.
        o_ref[...] = conv3x3_bn_relu(pad2_ref, col_ref, w2_ref, g2_ref, be2_ref)

    pl.run_scoped(conv1_scope, pltpu.VMEM((N, Ho, Wo, 3 * Cin), jnp.bfloat16))
    pl.run_scoped(conv2_scope, pltpu.VMEM((N, Ho, Wo, 3 * C), jnp.bfloat16))


# ------------------------------ JAX wrapper --------------------------------

def downsample_forward(x_nchw, params):
    """MaxPool2d(2) -> (Conv3x3 -> BN(train) -> ReLU) x 2, one fused pallas_call.

    Input/output in NCHW to match the PyTorch module boundary.
    """
    N, Cin, H, W = x_nchw.shape
    Ho, Wo = H // 2, W // 2              # MaxPool2d(2) floors odd sizes
    C = params["w1"].shape[-1]
    M = N * Ho * Wo
    Cpad = _round_up(C, 128)             # lane-dense output store
    Wp = _round_up(Wo + 2, 8)            # 8-aligned sublane dim for halo bufs

    # Single fused relayout: NCHW -> (h_off, w_off, N, Ho, Wo, Cin), bf16.
    # TODO(synk): in a full UNet keep activations NHWC between blocks so this
    #   and the final transpose-back (both HBM copies) disappear.
    xq = (x_nchw[:, :, :2 * Ho, :2 * Wo]
          .reshape(N, Cin, Ho, 2, Wo, 2)
          .transpose(3, 5, 0, 2, 4, 1)
          .astype(jnp.bfloat16))                        # (2, 2, N, Ho, Wo, Cin)

    # dy-major, (dx, ci)-flattened weights; conv biases are intentionally NOT
    # passed (they cancel against training-mode BN's mean subtraction).
    w1 = params["w1"].astype(jnp.float32).reshape(3, 3 * Cin, C).astype(jnp.bfloat16)
    w2 = jnp.pad(params["w2"].astype(jnp.float32),
                 ((0, 0), (0, 0), (0, 0), (0, Cpad - C)))
    w2 = w2.reshape(3, 3 * C, Cpad).astype(jnp.bfloat16)
    g1 = params["g1"].reshape(1, C).astype(jnp.float32)
    be1 = params["be1"].reshape(1, C).astype(jnp.float32)
    g2 = jnp.pad(params["g2"].astype(jnp.float32), (0, Cpad - C),
                 constant_values=1.0).reshape(1, Cpad)
    be2 = jnp.pad(params["be2"].astype(jnp.float32),
                  (0, Cpad - C)).reshape(1, Cpad)

    # VMEM budget computed from actual sizes (not hard-coded); cap with
    # headroom.  TODO(synk): keep <= ~56 MiB per core once gridded for v7x.
    scratch_bytes = (N * (Ho + 2) * Wp * Cin * 4          # pad1 (f32 halo buf)
                     + N * (Ho + 2) * Wp * C * 4          # pad2 (f32 halo buf)
                     + N * Ho * Wo * 3 * max(Cin, C) * 2)  # max im2col scope (bf16)
    io_bytes = (xq.size * 2 + (w1.size + w2.size) * 2
                + (g1.size + be1.size + g2.size + be2.size) * 4
                + M * Cpad * 4)
    vmem_limit = int(min(96 * 1024 * 1024,
                         max(16 * 1024 * 1024,
                             2 * (scratch_bytes + io_bytes) + (4 << 20))))

    flops = 2 * M * (9 * Cin) * C + 2 * M * (9 * C) * Cpad + 20 * M * (C + Cpad)

    out2d = pl.pallas_call(
        _fused_downsample_kernel,
        out_shape=jax.ShapeDtypeStruct((M, Cpad), jnp.float32),
        in_specs=[_VMEM] * 7,
        out_specs=_VMEM,
        scratch_shapes=[
            pltpu.VMEM((N, Ho + 2, Wp, Cin), jnp.float32),   # pad1 (zero halo)
            pltpu.VMEM((N, Ho + 2, Wp, C), jnp.float32),     # pad2 (conv1->conv2)
        ],
        compiler_params=pltpu.CompilerParams(vmem_limit_bytes=vmem_limit),
        cost_estimate=pl.CostEstimate(flops=int(flops),
                                      transcendentals=int(C + Cpad),
                                      bytes_accessed=int(io_bytes)),
    )(xq, w1, g1, be1, w2, g2, be2)

    # strip lane padding, (M, C) -> (N, Ho, Wo, C) -> NCHW
    return out2d[:, :C].reshape(N, Ho, Wo, C).transpose(0, 3, 1, 2)


# -------------------------- pure-JAX reference -----------------------------

def _ref_forward(x_nchw, params):
    x = jnp.transpose(x_nchw, (0, 2, 3, 1))
    N, H, W, C = x.shape
    x = x.reshape(N, H // 2, 2, W // 2, 2, C).max(axis=(2, 4))

    def cbr(x, w, b, g, be):
        y = jax.lax.conv_general_dilated(
            x, w, (1, 1), ((1, 1), (1, 1)),
            dimension_numbers=("NHWC", "HWIO", "NHWC")) + b
        mu = y.mean(axis=(0, 1, 2), keepdims=True)
        var = ((y - mu) ** 2).mean(axis=(0, 1, 2), keepdims=True)
        y = (y - mu) * jax.lax.rsqrt(var + _EPS) * g + be
        return jnp.maximum(y, 0.0)

    x = cbr(x, params["w1"], params["b1"], params["g1"], params["be1"])
    x = cbr(x, params["w2"], params["b2"], params["g2"], params["be2"])
    return jnp.transpose(x, (0, 3, 1, 2))


# --------------------------------- main -------------------------------------

if __name__ == "__main__":
    N, Cin, H, W = 2, 4, 16, 16       # input  (NCHW)
    P = 8                             # planes (output channels)

    key = jax.random.PRNGKey(0)
    ks = jax.random.split(key, 10)

    x = jax.random.normal(ks[0], (N, Cin, H, W), jnp.float32)

    params = {
        # conv1: Conv2d(Cin, P, 3, padding=1)  -> HWIO weights
        "w1": 0.1 * jax.random.normal(ks[1], (3, 3, Cin, P), jnp.float32),
        "b1": 0.1 * jax.random.normal(ks[2], (P,), jnp.float32),
        "g1": 1.0 + 0.1 * jax.random.normal(ks[3], (P,), jnp.float32),
        "be1": 0.1 * jax.random.normal(ks[4], (P,), jnp.float32),
        # conv2: Conv2d(P, P, 3, padding=1)
        "w2": 0.1 * jax.random.normal(ks[5], (3, 3, P, P), jnp.float32),
        "b2": 0.1 * jax.random.normal(ks[6], (P,), jnp.float32),
        "g2": 1.0 + 0.1 * jax.random.normal(ks[7], (P,), jnp.float32),
        "be2": 0.1 * jax.random.normal(ks[8], (P,), jnp.float32),
    }

    out = jax.jit(downsample_forward)(x, params)
    out = jax.block_until_ready(out)
    assert out.shape == (N, P, H // 2, W // 2), out.shape

    ref = _ref_forward(x, params)
    err = float(jnp.max(jnp.abs(out - ref)))
    assert err < 0.1, f"max abs err too large: {err}"

    print("KERNEL_OK")
</pallas_src>

<mosaic_0001>
module attributes {stable_mosaic.version = 11 : i64} {
  func.func @_fused_downsample_kernel(%arg0: memref<2x2x2x8x8x4xbf16, #tpu.memory_space<vmem>>, %arg1: memref<3x12x8xbf16, #tpu.memory_space<vmem>>, %arg2: memref<1x8xf32, #tpu.memory_space<vmem>>, %arg3: memref<1x8xf32, #tpu.memory_space<vmem>>, %arg4: memref<3x24x128xbf16, #tpu.memory_space<vmem>>, %arg5: memref<1x128xf32, #tpu.memory_space<vmem>>, %arg6: memref<1x128xf32, #tpu.memory_space<vmem>>, %arg7: memref<128x128xf32, #tpu.memory_space<vmem>>, %arg8: memref<2x10x16x4xf32, #tpu.memory_space<vmem>>, %arg9: memref<2x10x16x8xf32, #tpu.memory_space<vmem>>) attributes {dimension_semantics = [], scalar_prefetch = 0 : i64, scratch_operands = 2 : i64, tpu.core_type = #tpu.core_type<tc>} {
    %c0 = arith.constant 0 : index
    %c0_0 = arith.constant 0 : index
    %c0_1 = arith.constant 0 : index
    %c0_2 = arith.constant 0 : index
    %c0_3 = arith.constant 0 : index
    %c0_4 = arith.constant 0 : index
    %0 = vector.load %arg0[%c0, %c0_0, %c0_1, %c0_2, %c0_3, %c0_4] : memref<2x2x2x8x8x4xbf16, #tpu.memory_space<vmem>>, vector<1x1x2x8x8x4xbf16>
    %1 = vector.shape_cast %0 : vector<1x1x2x8x8x4xbf16> to vector<2x8x8x4xbf16>
    %c0_5 = arith.constant 0 : index
    %c1 = arith.constant 1 : index
    %c0_6 = arith.constant 0 : index
    %c0_7 = arith.constant 0 : index
    %c0_8 = arith.constant 0 : index
    %c0_9 = arith.constant 0 : index
    %2 = vector.load %arg0[%c0_5, %c1, %c0_6, %c0_7, %c0_8, %c0_9] : memref<2x2x2x8x8x4xbf16, #tpu.memory_space<vmem>>, vector<1x1x2x8x8x4xbf16>
    %3 = vector.shape_cast %2 : vector<1x1x2x8x8x4xbf16> to vector<2x8x8x4xbf16>
    %4 = arith.maximumf %1, %3 : vector<2x8x8x4xbf16>
    %c1_10 = arith.constant 1 : index
    %c0_11 = arith.constant 0 : index
    %c0_12 = arith.constant 0 : index
    %c0_13 = arith.constant 0 : index
    %c0_14 = arith.constant 0 : index
    %c0_15 = arith.constant 0 : index
    %5 = vector.load %arg0[%c1_10, %c0_11, %c0_12, %c0_13, %c0_14, %c0_15] : memref<2x2x2x8x8x4xbf16, #tpu.memory_space<vmem>>, vector<1x1x2x8x8x4xbf16>
    %6 = vector.shape_cast %5 : vector<1x1x2x8x8x4xbf16> to vector<2x8x8x4xbf16>
    %c1_16 = arith.constant 1 : index
    %c1_17 = arith.constant 1 : index
    %c0_18 = arith.constant 0 : index
    %c0_19 = arith.constant 0 : index
    %c0_20 = arith.constant 0 : index
    %c0_21 = arith.constant 0 : index
    %7 = vector.load %arg0[%c1_16, %c1_17, %c0_18, %c0_19, %c0_20, %c0_21] : memref<2x2x2x8x8x4xbf16, #tpu.memory_space<vmem>>, vector<1x1x2x8x8x4xbf16>
    %8 = vector.shape_cast %7 : vector<1x1x2x8x8x4xbf16> to vector<2x8x8x4xbf16>
    %9 = arith.maximumf %6, %8 : vector<2x8x8x4xbf16>
    %10 = arith.maximumf %4, %9 : vector<2x8x8x4xbf16>
    %cst = arith.constant 0.000000e+00 : f32
    %11 = vector.broadcast %cst : f32 to vector<2x1x16x4xf32>
    %cst_22 = arith.constant 0.000000e+00 : f32
    %12 = vector.broadcast %cst_22 : f32 to vector<2x10x1x4xf32>
    %c0_23 = arith.constant 0 : index
    %c0_24 = arith.constant 0 : index
    %c0_25 = arith.constant 0 : index
    %c0_26 = arith.constant 0 : index
    %13 = vector.load %arg8[%c0_23, %c0_24, %c0_25, %c0_26] : memref<2x10x16x4xf32, #tpu.memory_space<vmem>>, vector<2x1x16x4xf32>
    tpu.vector_store %arg8[%c0_23, %c0_24, %c0_25, %c0_26], %11 {strides = array<i32>} : memref<2x10x16x4xf32, #tpu.memory_space<vmem>>, vector<2x1x16x4xf32>,
    %c0_27 = arith.constant 0 : index
    %c9 = arith.constant 9 : index
    %c0_28 = arith.constant 0 : index
    %c0_29 = arith.constant 0 : index
    %14 = vector.load %arg8[%c0_27, %c9, %c0_28, %c0_29] : memref<2x10x16x4xf32, #tpu.memory_space<vmem>>, vector<2x1x16x4xf32>
    tpu.vector_store %arg8[%c0_27, %c9, %c0_28, %c0_29], %11 {strides = array<i32>} : memref<2x10x16x4xf32, #tpu.memory_space<vmem>>, vector<2x1x16x4xf32>,
    %c0_30 = arith.constant 0 : index
    %c0_31 = arith.constant 0 : index
    %c0_32 = arith.constant 0 : index
    %c0_33 = arith.constant 0 : index
    %15 = vector.load %arg8[%c0_30, %c0_31, %c0_32, %c0_33] : memref<2x10x16x4xf32, #tpu.memory_space<vmem>>, vector<2x10x1x4xf32>
    tpu.vector_store %arg8[%c0_30, %c0_31, %c0_32, %c0_33], %12 {strides = array<i32>} : memref<2x10x16x4xf32, #tpu.memory_space<vmem>>, vector<2x10x1x4xf32>,
    %c0_34 = arith.constant 0 : index
    %c0_35 = arith.constant 0 : index
    %c9_36 = arith.constant 9 : index
    %c0_37 = arith.constant 0 : index
    %16 = vector.load %arg8[%c0_34, %c0_35, %c9_36, %c0_37] : memref<2x10x16x4xf32, #tpu.memory_space<vmem>>, vector<2x10x1x4xf32>
    tpu.vector_store %arg8[%c0_34, %c0_35, %c9_36, %c0_37], %12 {strides = array<i32>} : memref<2x10x16x4xf32, #tpu.memory_space<vmem>>, vector<2x10x1x4xf32>,
    %cst_38 = arith.constant 0.000000e+00 : f32
    %17 = vector.broadcast %cst_38 : f32 to vector<2x1x16x8xf32>
    %cst_39 = arith.constant 0.000000e+00 : f32
    %18 = vector.broadcast %cst_39 : f32 to vector<2x10x1x8xf32>
    %c0_40 = arith.constant 0 : index
    %c0_41 = arith.constant 0 : index
    %c0_42 = arith.constant 0 : index
    %c0_43 = arith.constant 0 : index
    %19 = vector.load %arg9[%c0_40, %c0_41, %c0_42, %c0_43] : memref<2x10x16x8xf32, #tpu.memory_space<vmem>>, vector<2x1x16x8xf32>
    tpu.vector_store %arg9[%c0_40, %c0_41, %c0_42, %c0_43], %17 {strides = array<i32>} : memref<2x10x16x8xf32, #tpu.memory_space<vmem>>, vector<2x1x16x8xf32>,
    %c0_44 = arith.constant 0 : index
    %c9_45 = arith.constant 9 : index
    %c0_46 = arith.constant 0 : index
    %c0_47 = arith.constant 0 : index
    %20 = vector.load %arg9[%c0_44, %c9_45, %c0_46, %c0_47] : memref<2x10x16x8xf32, #tpu.memory_space<vmem>>, vector<2x1x16x8xf32>
    tpu.vector_store %arg9[%c0_44, %c9_45, %c0_46, %c0_47], %17 {strides = array<i32>} : memref<2x10x16x8xf32, #tpu.memory_space<vmem>>, vector<2x1x16x8xf32>,
    %c0_48 = arith.constant 0 : index
    %c0_49 = arith.constant 0 : index
    %c0_50 = arith.constant 0 : index
    %c0_51 = arith.constant 0 : index
    %21 = vector.load %arg9[%c0_48, %c0_49, %c0_50, %c0_51] : memref<2x10x16x8xf32, #tpu.memory_space<vmem>>, vector<2x10x1x8xf32>
    tpu.vector_store %arg9[%c0_48, %c0_49, %c0_50, %c0_51], %18 {strides = array<i32>} : memref<2x10x16x8xf32, #tpu.memory_space<vmem>>, vector<2x10x1x8xf32>,
    %c0_52 = arith.constant 0 : index
    %c0_53 = arith.constant 0 : index
    %c9_54 = arith.constant 9 : index
    %c0_55 = arith.constant 0 : index
    %22 = vector.load %arg9[%c0_52, %c0_53, %c9_54, %c0_55] : memref<2x10x16x8xf32, #tpu.memory_space<vmem>>, vector<2x10x1x8xf32>
    tpu.vector_store %arg9[%c0_52, %c0_53, %c9_54, %c0_55], %18 {strides = array<i32>} : memref<2x10x16x8xf32, #tpu.memory_space<vmem>>, vector<2x10x1x8xf32>,
    %23 = arith.extf %10 : vector<2x8x8x4xbf16> to vector<2x8x8x4xf32>
    %c0_56 = arith.constant 0 : index
    %c1_57 = arith.constant 1 : index
    %c1_58 = arith.constant 1 : index
    %c0_59 = arith.constant 0 : index
    %24 = vector.load %arg8[%c0_56, %c1_57, %c1_58, %c0_59] : memref<2x10x16x4xf32, #tpu.memory_space<vmem>>, vector<2x8x8x4xf32>
    tpu.vector_store %arg8[%c0_56, %c1_57, %c1_58, %c0_59], %23 {strides = array<i32>} : memref<2x10x16x4xf32, #tpu.memory_space<vmem>>, vector<2x8x8x4xf32>,
    "tpu.region"() ({
      %alloca = memref.alloca() : memref<2x8x8x12xbf16, #tpu.memory_space<vmem>>
      %c0_60 = arith.constant 0 : index
      %c0_61 = arith.constant 0 : index
      %c0_62 = arith.constant 0 : index
      %c0_63 = arith.constant 0 : index
      %25 = vector.load %arg8[%c0_60, %c0_61, %c0_62, %c0_63] : memref<2x10x16x4xf32, #tpu.memory_space<vmem>>, vector<2x8x8x4xf32>
      %26 = arith.truncf %25 : vector<2x8x8x4xf32> to vector<2x8x8x4xbf16>
      %c0_64 = arith.constant 0 : index
      %c0_65 = arith.constant 0 : index
      %c0_66 = arith.constant 0 : index
      %c0_67 = arith.constant 0 : index
      %27 = vector.load %alloca[%c0_64, %c0_65, %c0_66, %c0_67] : memref<2x8x8x12xbf16, #tpu.memory_space<vmem>>, vector<2x8x8x4xbf16>
      tpu.vector_store %alloca[%c0_64, %c0_65, %c0_66, %c0_67], %26 {strides = array<i32>} : memref<2x8x8x12xbf16, #tpu.memory_space<vmem>>, vector<2x8x8x4xbf16>,
      %c0_68 = arith.constant 0 : index
      %c0_69 = arith.constant 0 : index
      %c1_70 = arith.constant 1 : index
      %c0_71 = arith.constant 0 : index
      %28 = vector.load %arg8[%c0_68, %c0_69, %c1_70, %c0_71] : memref<2x10x16x4xf32, #tpu.memory_space<vmem>>, vector<2x8x8x4xf32>
      %29 = arith.truncf %28 : vector<2x8x8x4xf32> to vector<2x8x8x4xbf16>
      %c0_72 = arith.constant 0 : index
      %c0_73 = arith.constant 0 : index
      %c0_74 = arith.constant 0 : index
      %c4 = arith.constant 4 : index
      %30 = vector.load %alloca[%c0_72, %c0_73, %c0_74, %c4] : memref<2x8x8x12xbf16, #tpu.memory_space<vmem>>, vector<2x8x8x4xbf16>
      tpu.vector_store %alloca[%c0_72, %c0_73, %c0_74, %c4], %29 {strides = array<i32>} : memref<2x8x8x12xbf16, #tpu.memory_space<vmem>>, vector<2x8x8x4xbf16>,
      %c0_75 = arith.constant 0 : index
      %c0_76 = arith.constant 0 : index
      %c2 = arith.constant 2 : index
      %c0_77 = arith.constant 0 : index
      %31 = vector.load %arg8[%c0_75, %c0_76, %c2, %c0_77] : memref<2x10x16x4xf32, #tpu.memory_space<vmem>>, vector<2x8x8x4xf32>
      %32 = arith.truncf %31 : vector<2x8x8x4xf32> to vector<2x8x8x4xbf16>
      %c0_78 = arith.constant 0 : index
      %c0_79 = arith.constant 0 : index
      %c0_80 = arith.constant 0 : index
      %c8 = arith.constant 8 : index
      %33 = vector.load %alloca[%c0_78, %c0_79, %c0_80, %c8] : memref<2x8x8x12xbf16, #tpu.memory_space<vmem>>, vector<2x8x8x4xbf16>
      tpu.vector_store %alloca[%c0_78, %c0_79, %c0_80, %c8], %32 {strides = array<i32>} : memref<2x8x8x12xbf16, #tpu.memory_space<vmem>>, vector<2x8x8x4xbf16>,
      %c0_81 = arith.constant 0 : index
      %c0_82 = arith.constant 0 : index
      %c0_83 = arith.constant 0 : index
      %c0_84 = arith.constant 0 : index
      %34 = vector.load %alloca[%c0_81, %c0_82, %c0_83, %c0_84] : memref<2x8x8x12xbf16, #tpu.memory_space<vmem>>, vector<2x8x8x12xbf16>
      %35 = vector.shape_cast %34 : vector<2x8x8x12xbf16> to vector<128x12xbf16>
      %c0_85 = arith.constant 0 : index
      %c0_86 = arith.constant 0 : index
      %c0_87 = arith.constant 0 : index
      %36 = vector.load %arg1[%c0_85, %c0_86, %c0_87] : memref<3x12x8xbf16, #tpu.memory_space<vmem>>, vector<1x12x8xbf16>
      %37 = vector.shape_cast %36 : vector<1x12x8xbf16> to vector<12x8xbf16>
      %cst_88 = arith.constant dense<0.000000e+00> : vector<128x8xf32>
      %38 = tpu.matmul %35, %37, %cst_88 {dimension_numbers = #tpu.dot_dimension_numbers<[1], [0], [0], [1], [0, 0, 1, 1], [], []>} : vector<128x12xbf16>, vector<12x8xbf16>, vector<128x8xf32> -> vector<128x8xf32>
      %c0_89 = arith.constant 0 : index
      %c1_90 = arith.constant 1 : index
      %c0_91 = arith.constant 0 : index
      %c0_92 = arith.constant 0 : index
      %39 = vector.load %arg8[%c0_89, %c1_90, %c0_91, %c0_92] : memref<2x10x16x4xf32, #tpu.memory_space<vmem>>, vector<2x8x8x4xf32>
      %40 = arith.truncf %39 : vector<2x8x8x4xf32> to vector<2x8x8x4xbf16>
      %c0_93 = arith.constant 0 : index
      %c0_94 = arith.constant 0 : index
      %c0_95 = arith.constant 0 : index
      %c0_96 = arith.constant 0 : index
      %41 = vector.load %alloca[%c0_93, %c0_94, %c0_95, %c0_96] : memref<2x8x8x12xbf16, #tpu.memory_space<vmem>>, vector<2x8x8x4xbf16>
      tpu.vector_store %alloca[%c0_93, %c0_94, %c0_95, %c0_96], %40 {strides = array<i32>} : memref<2x8x8x12xbf16, #tpu.memory_space<vmem>>, vector<2x8x8x4xbf16>,
      %c0_97 = arith.constant 0 : index
      %c1_98 = arith.constant 1 : index
      %c1_99 = arith.constant 1 : index
      %c0_100 = arith.constant 0 : index
      %42 = vector.load %arg8[%c0_97, %c1_98, %c1_99, %c0_100] : memref<2x10x16x4xf32, #tpu.memory_space<vmem>>, vector<2x8x8x4xf32>
      %43 = arith.truncf %42 : vector<2x8x8x4xf32> to vector<2x8x8x4xbf16>
      %c0_101 = arith.constant 0 : index
      %c0_102 = arith.constant 0 : index
      %c0_103 = arith.constant 0 : index
      %c4_104 = arith.constant 4 : index
      %44 = vector.load %alloca[%c0_101, %c0_102, %c0_103, %c4_104] : memref<2x8x8x12xbf16, #tpu.memory_space<vmem>>, vector<2x8x8x4xbf16>
      tpu.vector_store %alloca[%c0_101, %c0_102, %c0_103, %c4_104], %43 {strides = array<i32>} : memref<2x8x8x12xbf16, #tpu.memory_space<vmem>>, vector<2x8x8x4xbf16>,
      %c0_105 = arith.constant 0 : index
      %c1_106 = arith.constant 1 : index
      %c2_107 = arith.constant 2 : index
      %c0_108 = arith.constant 0 : index
      %45 = vector.load %arg8[%c0_105, %c1_106, %c2_107, %c0_108] : memref<2x10x16x4xf32, #tpu.memory_space<vmem>>, vector<2x8x8x4xf32>
      %46 = arith.truncf %45 : vector<2x8x8x4xf32> to vector<2x8x8x4xbf16>
      %c0_109 = arith.constant 0 : index
      %c0_110 = arith.constant 0 : index
      %c0_111 = arith.constant 0 : index
      %c8_112 = arith.constant 8 : index
      %47 = vector.load %alloca[%c0_109, %c0_110, %c0_111, %c8_112] : memref<2x8x8x12xbf16, #tpu.memory_space<vmem>>, vector<2x8x8x4xbf16>
      tpu.vector_store %alloca[%c0_109, %c0_110, %c0_111, %c8_112], %46 {strides = array<i32>} : memref<2x8x8x12xbf16, #tpu.memory_space<vmem>>, vector<2x8x8x4xbf16>,
      %c0_113 = arith.constant 0 : index
      %c0_114 = arith.constant 0 : index
      %c0_115 = arith.constant 0 : index
      %c0_116 = arith.constant 0 : index
      %48 = vector.load %alloca[%c0_113, %c0_114, %c0_115, %c0_116] : memref<2x8x8x12xbf16, #tpu.memory_space<vmem>>, vector<2x8x8x12xbf16>
      %49 = vector.shape_cast %48 : vector<2x8x8x12xbf16> to vector<128x12xbf16>
      %c1_117 = arith.constant 1 : index
      %c0_118 = arith.constant 0 : index
      %c0_119 = arith.constant 0 : index
      %50 = vector.load %arg1[%c1_117, %c0_118, %c0_119] : memref<3x12x8xbf16, #tpu.memory_space<vmem>>, vector<1x12x8xbf16>
      %51 = vector.shape_cast %50 : vector<1x12x8xbf16> to vector<12x8xbf16>
      %cst_120 = arith.constant dense<0.000000e+00> : vector<128x8xf32>
      %52 = tpu.matmul %49, %51, %cst_120 {dimension_numbers = #tpu.dot_dimension_numbers<[1], [0], [0], [1], [0, 0, 1, 1], [], []>} : vector<128x12xbf16>, vector<12x8xbf16>, vector<128x8xf32> -> vector<128x8xf32>
      %53 = arith.addf %38, %52 : vector<128x8xf32>
      %c0_121 = arith.constant 0 : index
      %c2_122 = arith.constant 2 : index
      %c0_123 = arith.constant 0 : index
      %c0_124 = arith.constant 0 : index
      %54 = vector.load %arg8[%c0_121, %c2_122, %c0_123, %c0_124] : memref<2x10x16x4xf32, #tpu.memory_space<vmem>>, vector<2x8x8x4xf32>
      %55 = arith.truncf %54 : vector<2x8x8x4xf32> to vector<2x8x8x4xbf16>
      %c0_125 = arith.constant 0 : index
      %c0_126 = arith.constant 0 : index
      %c0_127 = arith.constant 0 : index
      %c0_128 = arith.constant 0 : index
      %56 = vector.load %alloca[%c0_125, %c0_126, %c0_127, %c0_128] : memref<2x8x8x12xbf16, #tpu.memory_space<vmem>>, vector<2x8x8x4xbf16>
      tpu.vector_store %alloca[%c0_125, %c0_126, %c0_127, %c0_128], %55 {strides = array<i32>} : memref<2x8x8x12xbf16, #tpu.memory_space<vmem>>, vector<2x8x8x4xbf16>,
      %c0_129 = arith.constant 0 : index
      %c2_130 = arith.constant 2 : index
      %c1_131 = arith.constant 1 : index
      %c0_132 = arith.constant 0 : index
      %57 = vector.load %arg8[%c0_129, %c2_130, %c1_131, %c0_132] : memref<2x10x16x4xf32, #tpu.memory_space<vmem>>, vector<2x8x8x4xf32>
      %58 = arith.truncf %57 : vector<2x8x8x4xf32> to vector<2x8x8x4xbf16>
      %c0_133 = arith.constant 0 : index
      %c0_134 = arith.constant 0 : index
      %c0_135 = arith.constant 0 : index
      %c4_136 = arith.constant 4 : index
      %59 = vector.load %alloca[%c0_133, %c0_134, %c0_135, %c4_136] : memref<2x8x8x12xbf16, #tpu.memory_space<vmem>>, vector<2x8x8x4xbf16>
      tpu.vector_store %alloca[%c0_133, %c0_134, %c0_135, %c4_136], %58 {strides = array<i32>} : memref<2x8x8x12xbf16, #tpu.memory_space<vmem>>, vector<2x8x8x4xbf16>,
      %c0_137 = arith.constant 0 : index
      %c2_138 = arith.constant 2 : index
      %c2_139 = arith.constant 2 : index
      %c0_140 = arith.constant 0 : index
      %60 = vector.load %arg8[%c0_137, %c2_138, %c2_139, %c0_140] : memref<2x10x16x4xf32, #tpu.memory_space<vmem>>, vector<2x8x8x4xf32>
      %61 = arith.truncf %60 : vector<2x8x8x4xf32> to vector<2x8x8x4xbf16>
      %c0_141 = arith.constant 0 : index
      %c0_142 = arith.constant 0 : index
      %c0_143 = arith.constant 0 : index
      %c8_144 = arith.constant 8 : index
      %62 = vector.load %alloca[%c0_141, %c0_142, %c0_143, %c8_144] : memref<2x8x8x12xbf16, #tpu.memory_space<vmem>>, vector<2x8x8x4xbf16>
      tpu.vector_store %alloca[%c0_141, %c0_142, %c0_143, %c8_144], %61 {strides = array<i32>} : memref<2x8x8x12xbf16, #tpu.memory_space<vmem>>, vector<2x8x8x4xbf16>,
      %c0_145 = arith.constant 0 : index
      %c0_146 = arith.constant 0 : index
      %c0_147 = arith.constant 0 : index
      %c0_148 = arith.constant 0 : index
      %63 = vector.load %alloca[%c0_145, %c0_146, %c0_147, %c0_148] : memref<2x8x8x12xbf16, #tpu.memory_space<vmem>>, vector<2x8x8x12xbf16>
      %64 = vector.shape_cast %63 : vector<2x8x8x12xbf16> to vector<128x12xbf16>
      %c2_149 = arith.constant 2 : index
      %c0_150 = arith.constant 0 : index
      %c0_151 = arith.constant 0 : index
      %65 = vector.load %arg1[%c2_149, %c0_150, %c0_151] : memref<3x12x8xbf16, #tpu.memory_space<vmem>>, vector<1x12x8xbf16>
      %66 = vector.shape_cast %65 : vector<1x12x8xbf16> to vector<12x8xbf16>
      %cst_152 = arith.constant dense<0.000000e+00> : vector<128x8xf32>
      %67 = tpu.matmul %64, %66, %cst_152 {dimension_numbers = #tpu.dot_dimension_numbers<[1], [0], [0], [1], [0, 0, 1, 1], [], []>} : vector<128x12xbf16>, vector<12x8xbf16>, vector<128x8xf32> -> vector<128x8xf32>
      %68 = arith.addf %53, %67 : vector<128x8xf32>
      %cst_153 = arith.constant dense<0.000000e+00> : vector<8xf32>
      %69 = vector.multi_reduction <add>, %68, %cst_153 [0] : vector<128x8xf32> to vector<8xf32>
      %70 = vector.shape_cast %69 : vector<8xf32> to vector<1x8xf32>
      %cst_154 = arith.constant 1.280000e+02 : f32
      %71 = vector.broadcast %cst_154 : f32 to vector<1x8xf32>
      %72 = arith.divf %70, %71 : vector<1x8xf32>
      %73 = vector.broadcast %72 : vector<1x8xf32> to vector<128x8xf32>
      %74 = arith.subf %68, %73 : vector<128x8xf32>
      %75 = arith.mulf %74, %74 : vector<128x8xf32>
      %cst_155 = arith.constant dense<0.000000e+00> : vector<8xf32>
      %76 = vector.multi_reduction <add>, %75, %cst_155 [0] : vector<128x8xf32> to vector<8xf32>
      %77 = vector.shape_cast %76 : vector<8xf32> to vector<1x8xf32>
      %cst_156 = arith.constant 1.280000e+02 : f32
      %78 = vector.broadcast %cst_156 : f32 to vector<1x8xf32>
      %79 = arith.divf %77, %78 : vector<1x8xf32>
      %cst_157 = arith.constant 9.99999974E-6 : f32
      %80 = vector.broadcast %cst_157 : f32 to vector<1x8xf32>
      %81 = arith.addf %79, %80 : vector<1x8xf32>
      %82 = math.rsqrt %81 : vector<1x8xf32>
      %83 = vector.broadcast %82 : vector<1x8xf32> to vector<128x8xf32>
      %84 = arith.mulf %74, %83 : vector<128x8xf32>
      %c0_158 = arith.constant 0 : index
      %c0_159 = arith.constant 0 : index
      %85 = vector.load %arg2[%c0_158, %c0_159] : memref<1x8xf32, #tpu.memory_space<vmem>>, vector<1x8xf32>
      %86 = vector.broadcast %85 : vector<1x8xf32> to vector<128x8xf32>
      %87 = arith.mulf %84, %86 : vector<128x8xf32>
      %c0_160 = arith.constant 0 : index
      %c0_161 = arith.constant 0 : index
      %88 = vector.load %arg3[%c0_160, %c0_161] : memref<1x8xf32, #tpu.memory_space<vmem>>, vector<1x8xf32>
      %89 = vector.broadcast %88 : vector<1x8xf32> to vector<128x8xf32>
      %90 = arith.addf %87, %89 : vector<128x8xf32>
      %cst_162 = arith.constant 0.000000e+00 : f32
      %91 = vector.broadcast %cst_162 : f32 to vector<128x8xf32>
      %92 = arith.maximumf %90, %91 : vector<128x8xf32>
      %93 = vector.shape_cast %92 : vector<128x8xf32> to vector<2x8x8x8xf32>
      %c0_163 = arith.constant 0 : index
      %c1_164 = arith.constant 1 : index
      %c1_165 = arith.constant 1 : index
      %c0_166 = arith.constant 0 : index
      %94 = vector.load %arg9[%c0_163, %c1_164, %c1_165, %c0_166] : memref<2x10x16x8xf32, #tpu.memory_space<vmem>>, vector<2x8x8x8xf32>
      tpu.vector_store %arg9[%c0_163, %c1_164, %c1_165, %c0_166], %93 {strides = array<i32>} : memref<2x10x16x8xf32, #tpu.memory_space<vmem>>, vector<2x8x8x8xf32>,
      tpu.yield
    }) : () -> ()
    "tpu.region"() ({
      %alloca = memref.alloca() : memref<2x8x8x24xbf16, #tpu.memory_space<vmem>>
      %c0_60 = arith.constant 0 : index
      %c0_61 = arith.constant 0 : index
      %c0_62 = arith.constant 0 : index
      %c0_63 = arith.constant 0 : index
      %25 = vector.load %arg9[%c0_60, %c0_61, %c0_62, %c0_63] : memref<2x10x16x8xf32, #tpu.memory_space<vmem>>, vector<2x8x8x8xf32>
      %26 = arith.truncf %25 : vector<2x8x8x8xf32> to vector<2x8x8x8xbf16>
      %c0_64 = arith.constant 0 : index
      %c0_65 = arith.constant 0 : index
      %c0_66 = arith.constant 0 : index
      %c0_67 = arith.constant 0 : index
      %27 = vector.load %alloca[%c0_64, %c0_65, %c0_66, %c0_67] : memref<2x8x8x24xbf16, #tpu.memory_space<vmem>>, vector<2x8x8x8xbf16>
      tpu.vector_store %alloca[%c0_64, %c0_65, %c0_66, %c0_67], %26 {strides = array<i32>} : memref<2x8x8x24xbf16, #tpu.memory_space<vmem>>, vector<2x8x8x8xbf16>,
      %c0_68 = arith.constant 0 : index
      %c0_69 = arith.constant 0 : index
      %c1_70 = arith.constant 1 : index
      %c0_71 = arith.constant 0 : index
      %28 = vector.load %arg9[%c0_68, %c0_69, %c1_70, %c0_71] : memref<2x10x16x8xf32, #tpu.memory_space<vmem>>, vector<2x8x8x8xf32>
      %29 = arith.truncf %28 : vector<2x8x8x8xf32> to vector<2x8x8x8xbf16>
      %c0_72 = arith.constant 0 : index
      %c0_73 = arith.constant 0 : index
      %c0_74 = arith.constant 0 : index
      %c8 = arith.constant 8 : index
      %30 = vector.load %alloca[%c0_72, %c0_73, %c0_74, %c8] : memref<2x8x8x24xbf16, #tpu.memory_space<vmem>>, vector<2x8x8x8xbf16>
      tpu.vector_store %alloca[%c0_72, %c0_73, %c0_74, %c8], %29 {strides = array<i32>} : memref<2x8x8x24xbf16, #tpu.memory_space<vmem>>, vector<2x8x8x8xbf16>,
      %c0_75 = arith.constant 0 : index
      %c0_76 = arith.constant 0 : index
      %c2 = arith.constant 2 : index
      %c0_77 = arith.constant 0 : index
      %31 = vector.load %arg9[%c0_75, %c0_76, %c2, %c0_77] : memref<2x10x16x8xf32, #tpu.memory_space<vmem>>, vector<2x8x8x8xf32>
      %32 = arith.truncf %31 : vector<2x8x8x8xf32> to vector<2x8x8x8xbf16>
      %c0_78 = arith.constant 0 : index
      %c0_79 = arith.constant 0 : index
      %c0_80 = arith.constant 0 : index
      %c16 = arith.constant 16 : index
      %33 = vector.load %alloca[%c0_78, %c0_79, %c0_80, %c16] : memref<2x8x8x24xbf16, #tpu.memory_space<vmem>>, vector<2x8x8x8xbf16>
      tpu.vector_store %alloca[%c0_78, %c0_79, %c0_80, %c16], %32 {strides = array<i32>} : memref<2x8x8x24xbf16, #tpu.memory_space<vmem>>, vector<2x8x8x8xbf16>,
      %c0_81 = arith.constant 0 : index
      %c0_82 = arith.constant 0 : index
      %c0_83 = arith.constant 0 : index
      %c0_84 = arith.constant 0 : index
      %34 = vector.load %alloca[%c0_81, %c0_82, %c0_83, %c0_84] : memref<2x8x8x24xbf16, #tpu.memory_space<vmem>>, vector<2x8x8x24xbf16>
      %35 = vector.shape_cast %34 : vector<2x8x8x24xbf16> to vector<128x24xbf16>
      %c0_85 = arith.constant 0 : index
      %c0_86 = arith.constant 0 : index
      %c0_87 = arith.constant 0 : index
      %36 = vector.load %arg4[%c0_85, %c0_86, %c0_87] : memref<3x24x128xbf16, #tpu.memory_space<vmem>>, vector<1x24x128xbf16>
      %37 = vector.shape_cast %36 : vector<1x24x128xbf16> to vector<24x128xbf16>
      %cst_88 = arith.constant dense<0.000000e+00> : vector<128x128xf32>
      %38 = tpu.matmul %35, %37, %cst_88 {dimension_numbers = #tpu.dot_dimension_numbers<[1], [0], [0], [1], [0, 0, 1, 1], [], []>} : vector<128x24xbf16>, vector<24x128xbf16>, vector<128x128xf32> -> vector<128x128xf32>
      %c0_89 = arith.constant 0 : index
      %c1_90 = arith.constant 1 : index
      %c0_91 = arith.constant 0 : index
      %c0_92 = arith.constant 0 : index
      %39 = vector.load %arg9[%c0_89, %c1_90, %c0_91, %c0_92] : memref<2x10x16x8xf32, #tpu.memory_space<vmem>>, vector<2x8x8x8xf32>
      %40 = arith.truncf %39 : vector<2x8x8x8xf32> to vector<2x8x8x8xbf16>
      %c0_93 = arith.constant 0 : index
      %c0_94 = arith.constant 0 : index
      %c0_95 = arith.constant 0 : index
      %c0_96 = arith.constant 0 : index
      %41 = vector.load %alloca[%c0_93, %c0_94, %c0_95, %c0_96] : memref<2x8x8x24xbf16, #tpu.memory_space<vmem>>, vector<2x8x8x8xbf16>
      tpu.vector_store %alloca[%c0_93, %c0_94, %c0_95, %c0_96], %40 {strides = array<i32>} : memref<2x8x8x24xbf16, #tpu.memory_space<vmem>>, vector<2x8x8x8xbf16>,
      %c0_97 = arith.constant 0 : index
      %c1_98 = arith.constant 1 : index
      %c1_99 = arith.constant 1 : index
      %c0_100 = arith.constant 0 : index
      %42 = vector.load %arg9[%c0_97, %c1_98, %c1_99, %c0_100] : memref<2x10x16x8xf32, #tpu.memory_space<vmem>>, vector<2x8x8x8xf32>
      %43 = arith.truncf %42 : vector<2x8x8x8xf32> to vector<2x8x8x8xbf16>
      %c0_101 = arith.constant 0 : index
      %c0_102 = arith.constant 0 : index
      %c0_103 = arith.constant 0 : index
      %c8_104 = arith.constant 8 : index
      %44 = vector.load %alloca[%c0_101, %c0_102, %c0_103, %c8_104] : memref<2x8x8x24xbf16, #tpu.memory_space<vmem>>, vector<2x8x8x8xbf16>
      tpu.vector_store %alloca[%c0_101, %c0_102, %c0_103, %c8_104], %43 {strides = array<i32>} : memref<2x8x8x24xbf16, #tpu.memory_space<vmem>>, vector<2x8x8x8xbf16>,
      %c0_105 = arith.constant 0 : index
      %c1_106 = arith.constant 1 : index
      %c2_107 = arith.constant 2 : index
      %c0_108 = arith.constant 0 : index
      %45 = vector.load %arg9[%c0_105, %c1_106, %c2_107, %c0_108] : memref<2x10x16x8xf32, #tpu.memory_space<vmem>>, vector<2x8x8x8xf32>
      %46 = arith.truncf %45 : vector<2x8x8x8xf32> to vector<2x8x8x8xbf16>
      %c0_109 = arith.constant 0 : index
      %c0_110 = arith.constant 0 : index
      %c0_111 = arith.constant 0 : index
      %c16_112 = arith.constant 16 : index
      %47 = vector.load %alloca[%c0_109, %c0_110, %c0_111, %c16_112] : memref<2x8x8x24xbf16, #tpu.memory_space<vmem>>, vector<2x8x8x8xbf16>
      tpu.vector_store %alloca[%c0_109, %c0_110, %c0_111, %c16_112], %46 {strides = array<i32>} : memref<2x8x8x24xbf16, #tpu.memory_space<vmem>>, vector<2x8x8x8xbf16>,
      %c0_113 = arith.constant 0 : index
      %c0_114 = arith.constant 0 : index
      %c0_115 = arith.constant 0 : index
      %c0_116 = arith.constant 0 : index
      %48 = vector.load %alloca[%c0_113, %c0_114, %c0_115, %c0_116] : memref<2x8x8x24xbf16, #tpu.memory_space<vmem>>, vector<2x8x8x24xbf16>
      %49 = vector.shape_cast %48 : vector<2x8x8x24xbf16> to vector<128x24xbf16>
      %c1_117 = arith.constant 1 : index
      %c0_118 = arith.constant 0 : index
      %c0_119 = arith.constant 0 : index
      %50 = vector.load %arg4[%c1_117, %c0_118, %c0_119] : memref<3x24x128xbf16, #tpu.memory_space<vmem>>, vector<1x24x128xbf16>
      %51 = vector.shape_cast %50 : vector<1x24x128xbf16> to vector<24x128xbf16>
      %cst_120 = arith.constant dense<0.000000e+00> : vector<128x128xf32>
      %52 = tpu.matmul %49, %51, %cst_120 {dimension_numbers = #tpu.dot_dimension_numbers<[1], [0], [0], [1], [0, 0, 1, 1], [], []>} : vector<128x24xbf16>, vector<24x128xbf16>, vector<128x128xf32> -> vector<128x128xf32>
      %53 = arith.addf %38, %52 : vector<128x128xf32>
      %c0_121 = arith.constant 0 : index
      %c2_122 = arith.constant 2 : index
      %c0_123 = arith.constant 0 : index
      %c0_124 = arith.constant 0 : index
      %54 = vector.load %arg9[%c0_121, %c2_122, %c0_123, %c0_124] : memref<2x10x16x8xf32, #tpu.memory_space<vmem>>, vector<2x8x8x8xf32>
      %55 = arith.truncf %54 : vector<2x8x8x8xf32> to vector<2x8x8x8xbf16>
      %c0_125 = arith.constant 0 : index
      %c0_126 = arith.constant 0 : index
      %c0_127 = arith.constant 0 : index
      %c0_128 = arith.constant 0 : index
      %56 = vector.load %alloca[%c0_125, %c0_126, %c0_127, %c0_128] : memref<2x8x8x24xbf16, #tpu.memory_space<vmem>>, vector<2x8x8x8xbf16>
      tpu.vector_store %alloca[%c0_125, %c0_126, %c0_127, %c0_128], %55 {strides = array<i32>} : memref<2x8x8x24xbf16, #tpu.memory_space<vmem>>, vector<2x8x8x8xbf16>,
      %c0_129 = arith.constant 0 : index
      %c2_130 = arith.constant 2 : index
      %c1_131 = arith.constant 1 : index
      %c0_132 = arith.constant 0 : index
      %57 = vector.load %arg9[%c0_129, %c2_130, %c1_131, %c0_132] : memref<2x10x16x8xf32, #tpu.memory_space<vmem>>, vector<2x8x8x8xf32>
      %58 = arith.truncf %57 : vector<2x8x8x8xf32> to vector<2x8x8x8xbf16>
      %c0_133 = arith.constant 0 : index
      %c0_134 = arith.constant 0 : index
      %c0_135 = arith.constant 0 : index
      %c8_136 = arith.constant 8 : index
      %59 = vector.load %alloca[%c0_133, %c0_134, %c0_135, %c8_136] : memref<2x8x8x24xbf16, #tpu.memory_space<vmem>>, vector<2x8x8x8xbf16>
      tpu.vector_store %alloca[%c0_133, %c0_134, %c0_135, %c8_136], %58 {strides = array<i32>} : memref<2x8x8x24xbf16, #tpu.memory_space<vmem>>, vector<2x8x8x8xbf16>,
      %c0_137 = arith.constant 0 : index
      %c2_138 = arith.constant 2 : index
      %c2_139 = arith.constant 2 : index
      %c0_140 = arith.constant 0 : index
      %60 = vector.load %arg9[%c0_137, %c2_138, %c2_139, %c0_140] : memref<2x10x16x8xf32, #tpu.memory_space<vmem>>, vector<2x8x8x8xf32>
      %61 = arith.truncf %60 : vector<2x8x8x8xf32> to vector<2x8x8x8xbf16>
      %c0_141 = arith.constant 0 : index
      %c0_142 = arith.constant 0 : index
      %c0_143 = arith.constant 0 : index
      %c16_144 = arith.constant 16 : index
      %62 = vector.load %alloca[%c0_141, %c0_142, %c0_143, %c16_144] : memref<2x8x8x24xbf16, #tpu.memory_space<vmem>>, vector<2x8x8x8xbf16>
      tpu.vector_store %alloca[%c0_141, %c0_142, %c0_143, %c16_144], %61 {strides = array<i32>} : memref<2x8x8x24xbf16, #tpu.memory_space<vmem>>, vector<2x8x8x8xbf16>,
      %c0_145 = arith.constant 0 : index
      %c0_146 = arith.constant 0 : index
      %c0_147 = arith.constant 0 : index
      %c0_148 = arith.constant 0 : index
      %63 = vector.load %alloca[%c0_145, %c0_146, %c0_147, %c0_148] : memref<2x8x8x24xbf16, #tpu.memory_space<vmem>>, vector<2x8x8x24xbf16>
      %64 = vector.shape_cast %63 : vector<2x8x8x24xbf16> to vector<128x24xbf16>
      %c2_149 = arith.constant 2 : index
      %c0_150 = arith.constant 0 : index
      %c0_151 = arith.constant 0 : index
      %65 = vector.load %arg4[%c2_149, %c0_150, %c0_151] : memref<3x24x128xbf16, #tpu.memory_space<vmem>>, vector<1x24x128xbf16>
      %66 = vector.shape_cast %65 : vector<1x24x128xbf16> to vector<24x128xbf16>
      %cst_152 = arith.constant dense<0.000000e+00> : vector<128x128xf32>
      %67 = tpu.matmul %64, %66, %cst_152 {dimension_numbers = #tpu.dot_dimension_numbers<[1], [0], [0], [1], [0, 0, 1, 1], [], []>} : vector<128x24xbf16>, vector<24x128xbf16>, vector<128x128xf32> -> vector<128x128xf32>
      %68 = arith.addf %53, %67 : vector<128x128xf32>
      %cst_153 = arith.constant dense<0.000000e+00> : vector<128xf32>
      %69 = vector.multi_reduction <add>, %68, %cst_153 [0] : vector<128x128xf32> to vector<128xf32>
      %70 = vector.shape_cast %69 : vector<128xf32> to vector<1x128xf32>
      %cst_154 = arith.constant 1.280000e+02 : f32
      %71 = vector.broadcast %cst_154 : f32 to vector<1x128xf32>
      %72 = arith.divf %70, %71 : vector<1x128xf32>
      %73 = vector.broadcast %72 : vector<1x128xf32> to vector<128x128xf32>
      %74 = arith.subf %68, %73 : vector<128x128xf32>
      %75 = arith.mulf %74, %74 : vector<128x128xf32>
      %cst_155 = arith.constant dense<0.000000e+00> : vector<128xf32>
      %76 = vector.multi_reduction <add>, %75, %cst_155 [0] : vector<128x128xf32> to vector<128xf32>
      %77 = vector.shape_cast %76 : vector<128xf32> to vector<1x128xf32>
      %cst_156 = arith.constant 1.280000e+02 : f32
      %78 = vector.broadcast %cst_156 : f32 to vector<1x128xf32>
      %79 = arith.divf %77, %78 : vector<1x128xf32>
      %cst_157 = arith.constant 9.99999974E-6 : f32
      %80 = vector.broadcast %cst_157 : f32 to vector<1x128xf32>
      %81 = arith.addf %79, %80 : vector<1x128xf32>
      %82 = math.rsqrt %81 : vector<1x128xf32>
      %83 = vector.broadcast %82 : vector<1x128xf32> to vector<128x128xf32>
      %84 = arith.mulf %74, %83 : vector<128x128xf32>
      %c0_158 = arith.constant 0 : index
      %c0_159 = arith.constant 0 : index
      %85 = vector.load %arg5[%c0_158, %c0_159] : memref<1x128xf32, #tpu.memory_space<vmem>>, vector<1x128xf32>
      %86 = vector.broadcast %85 : vector<1x128xf32> to vector<128x128xf32>
      %87 = arith.mulf %84, %86 : vector<128x128xf32>
      %c0_160 = arith.constant 0 : index
      %c0_161 = arith.constant 0 : index
      %88 = vector.load %arg6[%c0_160, %c0_161] : memref<1x128xf32, #tpu.memory_space<vmem>>, vector<1x128xf32>
      %89 = vector.broadcast %88 : vector<1x128xf32> to vector<128x128xf32>
      %90 = arith.addf %87, %89 : vector<128x128xf32>
      %cst_162 = arith.constant 0.000000e+00 : f32
      %91 = vector.broadcast %cst_162 : f32 to vector<128x128xf32>
      %92 = arith.maximumf %90, %91 : vector<128x128xf32>
      %c0_163 = arith.constant 0 : index
      %c0_164 = arith.constant 0 : index
      %93 = vector.load %arg7[%c0_163, %c0_164] : memref<128x128xf32, #tpu.memory_space<vmem>>, vector<128x128xf32>
      tpu.vector_store %arg7[%c0_163, %c0_164], %92 {strides = array<i32>} : memref<128x128xf32, #tpu.memory_space<vmem>>, vector<128x128xf32>,
      tpu.yield
    }) : () -> ()
    return
  }
}

</mosaic_0001>

<llo_original>
// kernel: downsample_forward.1
$region0: #{downsample_forward.1}
  #allocation0 [shape = 'u32[]', space=smem, size = 0x4, offset = 0x4, fixed_abs, tag = 'smem constant byte address 0x4 - core index']
  #allocation1 [shape = 'u32[144,128]{1,0:T(1,128)}', space=vmem, size = 0x12000, scoped, tag = 'internal scratch']
  #allocation2 [shape = 'f32[2,10,16,4]{3,2,1,0:T(8,128)}', space=vmem, size = 0x28000, scoped, tag = 'scratch operand']
  #allocation3 [shape = 'f32[2,10,16,8]{3,2,1,0:T(8,128)}', space=vmem, size = 0x28000, scoped, tag = 'scratch operand']
  %s0 = inlined_call_operand.vmem [shape: bf16[2,2,2,8,8,4], index: 0, kind: input, shape index: {}]
  %s1 = inlined_call_operand.vmem [shape: bf16[3,12,8], index: 1, kind: input, shape index: {}]
  %s2 = inlined_call_operand.vmem [shape: f32[1,8], index: 2, kind: input, shape index: {}]
  %s3 = inlined_call_operand.vmem [shape: f32[1,8], index: 3, kind: input, shape index: {}]
  %s4 = inlined_call_operand.vmem [shape: bf16[3,24,128], index: 4, kind: input, shape index: {}]
  %s5 = inlined_call_operand.vmem [shape: f32[1,128], index: 5, kind: input, shape index: {}]
  %s6 = inlined_call_operand.vmem [shape: f32[1,128], index: 6, kind: input, shape index: {}]
  %s7 = inlined_call_operand.vmem [shape: f32[128,128], index: 7, kind: output, shape index: {}]
  %s8 = sld [smem:[#allocation0]]
  $region40: #{downsample_forward.1} parent=0
    _
  %s10 = ssub.s32 1, %s8
  %s11 = scalar_select 0, %s10, %s8
  // Predicated region
  $region2: #{downsample_forward.1} parent=0 // pred_check
    _
  $region3: #{downsample_forward.1} parent=0 // pred_check_branch
    %13 = sbr.rel (0) target = $region5
  $region4: #{downsample_forward.1} parent=0 // pred_region
    _
  $region5: #{downsample_forward.1} parent=0 // pred_fallthru
    _
  // Predicated region
  $region6: #{downsample_forward.1} parent=0 // pred_check
    _
  $region7: #{downsample_forward.1} parent=0 // pred_check_branch
    %15 = sbr.rel (0) target = $region9
  $region8: #{downsample_forward.1} parent=0 // pred_region
    _
  $region9: #{downsample_forward.1} parent=0 // pred_fallthru
    _
  // Predicated region
  $region10: #{downsample_forward.1} parent=0 // pred_check
    _
  $region11: #{downsample_forward.1} parent=0 // pred_check_branch
    %17 = sbr.rel (0) target = $region13
  $region12: #{downsample_forward.1} parent=0 // pred_region
    _
  $region13: #{downsample_forward.1} parent=0 // pred_fallthru
    _
  // Predicated region
  $region14: #{downsample_forward.1} parent=0 // pred_check
    _
  $region15: #{downsample_forward.1} parent=0 // pred_check_branch
    %19 = sbr.rel (0) target = $region17
  $region16: #{downsample_forward.1} parent=0 // pred_region
    _
  $region17: #{downsample_forward.1} parent=0 // pred_fallthru
    _
  // Predicated region
  $region18: #{downsample_forward.1} parent=0 // pred_check
    _
  $region19: #{downsample_forward.1} parent=0 // pred_check_branch
    %21 = sbr.rel (0) target = $region21
  $region20: #{downsample_forward.1} parent=0 // pred_region
    _
  $region21: #{downsample_forward.1} parent=0 // pred_fallthru
    _
  // Predicated region
  $region22: #{downsample_forward.1} parent=0 // pred_check
    _
  $region23: #{downsample_forward.1} parent=0 // pred_check_branch
    %23 = sbr.rel (0) target = $region25
  $region24: #{downsample_forward.1} parent=0 // pred_region
    _
  $region25: #{downsample_forward.1} parent=0 // pred_fallthru
    _
  // Predicated region
  $region26: #{downsample_forward.1} parent=0 // pred_check
    _
  $region27: #{downsample_forward.1} parent=0 // pred_check_branch
    %25 = sbr.rel (0) target = $region29
  $region28: #{downsample_forward.1} parent=0 // pred_region
    _
  $region29: #{downsample_forward.1} parent=0 // pred_fallthru
    _
  %v27 = vld [vmem:[%s0] sm:$0xf]
  %v28 = vld [vmem:[%s0 + $0x4] sm:$0xf]
  %v29 = vld [vmem:[%s0 + $0x8] sm:$0xf]
  %v30 = vld [vmem:[%s0 + $0xc] sm:$0xf]
  %v31 = vld [vmem:[%s0 + $0x10] sm:$0xf]
  %v32 = vld [vmem:[%s0 + $0x14] sm:$0xf]
  %v33 = vld [vmem:[%s0 + $0x18] sm:$0xf]
  %v34 = vld [vmem:[%s0 + $0x1c] sm:$0xf]
  %v35 = vld [vmem:[%s0 + $0x20] sm:$0xf]
  %v36 = vld [vmem:[%s0 + $0x24] sm:$0xf]
  %v37 = vld [vmem:[%s0 + $0x28] sm:$0xf]
  %v38 = vld [vmem:[%s0 + $0x2c] sm:$0xf]
  %v39 = vld [vmem:[%s0 + $0x30] sm:$0xf]
  %v40 = vld [vmem:[%s0 + $0x34] sm:$0xf]
  %v41 = vld [vmem:[%s0 + $0x38] sm:$0xf]
  %v42 = vld [vmem:[%s0 + $0x3c] sm:$0xf]
  %s43 = scalar_lea.vmem %s0, 64
  %v44 = vld [vmem:[%s43] sm:$0xf]
  %v45 = vld [vmem:[%s43 + $0x4] sm:$0xf]
  %v46 = vld [vmem:[%s43 + $0x8] sm:$0xf]
  %v47 = vld [vmem:[%s43 + $0xc] sm:$0xf]
  %v48 = vld [vmem:[%s43 + $0x10] sm:$0xf]
  %v49 = vld [vmem:[%s43 + $0x14] sm:$0xf]
  %v50 = vld [vmem:[%s43 + $0x18] sm:$0xf]
  %v51 = vld [vmem:[%s43 + $0x1c] sm:$0xf]
  %v52 = vld [vmem:[%s43 + $0x20] sm:$0xf]
  %v53 = vld [vmem:[%s43 + $0x24] sm:$0xf]
  %v54 = vld [vmem:[%s43 + $0x28] sm:$0xf]
  %v55 = vld [vmem:[%s43 + $0x2c] sm:$0xf]
  %v56 = vld [vmem:[%s43 + $0x30] sm:$0xf]
  %v57 = vld [vmem:[%s43 + $0x34] sm:$0xf]
  %v58 = vld [vmem:[%s43 + $0x38] sm:$0xf]
  %v59 = vld [vmem:[%s43 + $0x3c] sm:$0xf]
  %v60 = vmax.bf16 %v27, %v44
  %v61 = vmax.bf16 %v28, %v45
  %v62 = vmax.bf16 %v29, %v46
  %v63 = vmax.bf16 %v30, %v47
  %v64 = vmax.bf16 %v31, %v48
  %v65 = vmax.bf16 %v32, %v49
  %v66 = vmax.bf16 %v33, %v50
  %v67 = vmax.bf16 %v34, %v51
  %v68 = vmax.bf16 %v35, %v52
  %v69 = vmax.bf16 %v36, %v53
  %v70 = vmax.bf16 %v37, %v54
  %v71 = vmax.bf16 %v38, %v55
  %v72 = vmax.bf16 %v39, %v56
  %v73 = vmax.bf16 %v40, %v57
  %v74 = vmax.bf16 %v41, %v58
  %v75 = vmax.bf16 %v42, %v59
  %s76 = scalar_lea.vmem %s0, 128
  %v77 = vld [vmem:[%s76] sm:$0xf]
  %v78 = vld [vmem:[%s76 + $0x4] sm:$0xf]
  %v79 = vld [vmem:[%s76 + $0x8] sm:$0xf]
  %v80 = vld [vmem:[%s76 + $0xc] sm:$0xf]
  %v81 = vld [vmem:[%s76 + $0x10] sm:$0xf]
  %v82 = vld [vmem:[%s76 + $0x14] sm:$0xf]
  %v83 = vld [vmem:[%s76 + $0x18] sm:$0xf]
  %v84 = vld [vmem:[%s76 + $0x1c] sm:$0xf]
  %v85 = vld [vmem:[%s76 + $0x20] sm:$0xf]
  %v86 = vld [vmem:[%s76 + $0x24] sm:$0xf]
  %v87 = vld [vmem:[%s76 + $0x28] sm:$0xf]
  %v88 = vld [vmem:[%s76 + $0x2c] sm:$0xf]
  %v89 = vld [vmem:[%s76 + $0x30] sm:$0xf]
  %v90 = vld [vmem:[%s76 + $0x34] sm:$0xf]
  %v91 = vld [vmem:[%s76 + $0x38] sm:$0xf]
  %v92 = vld [vmem:[%s76 + $0x3c] sm:$0xf]
  %s93 = scalar_lea.vmem %s0, 192
  %v94 = vld [vmem:[%s93] sm:$0xf]
  %v95 = vld [vmem:[%s93 + $0x4] sm:$0xf]
  %v96 = vld [vmem:[%s93 + $0x8] sm:$0xf]
  %v97 = vld [vmem:[%s93 + $0xc] sm:$0xf]
  %v98 = vld [vmem:[%s93 + $0x10] sm:$0xf]
  %v99 = vld [vmem:[%s93 + $0x14] sm:$0xf]
  %v100 = vld [vmem:[%s93 + $0x18] sm:$0xf]
  %v101 = vld [vmem:[%s93 + $0x1c] sm:$0xf]
  %v102 = vld [vmem:[%s93 + $0x20] sm:$0xf]
  %v103 = vld [vmem:[%s93 + $0x24] sm:$0xf]
  %v104 = vld [vmem:[%s93 + $0x28] sm:$0xf]
  %v105 = vld [vmem:[%s93 + $0x2c] sm:$0xf]
  %v106 = vld [vmem:[%s93 + $0x30] sm:$0xf]
  %v107 = vld [vmem:[%s93 + $0x34] sm:$0xf]
  %v108 = vld [vmem:[%s93 + $0x38] sm:$0xf]
  %v109 = vld [vmem:[%s93 + $0x3c] sm:$0xf]
  %v110 = vmax.bf16 %v77, %v94
  %v111 = vmax.bf16 %v78, %v95
  %v112 = vmax.bf16 %v79, %v96
  %v113 = vmax.bf16 %v80, %v97
  %v114 = vmax.bf16 %v81, %v98
  %v115 = vmax.bf16 %v82, %v99
  %v116 = vmax.bf16 %v83, %v100
  %v117 = vmax.bf16 %v84, %v101
  %v118 = vmax.bf16 %v85, %v102
  %v119 = vmax.bf16 %v86, %v103
  %v120 = vmax.bf16 %v87, %v104
  %v121 = vmax.bf16 %v88, %v105
  %v122 = vmax.bf16 %v89, %v106
  %v123 = vmax.bf16 %v90, %v107
  %v124 = vmax.bf16 %v91, %v108
  %v125 = vmax.bf16 %v92, %v109
  %v126 = vmax.bf16 %v60, %v110
  %v127 = vmax.bf16 %v61, %v111
  %v128 = vmax.bf16 %v62, %v112
  %v129 = vmax.bf16 %v63, %v113
  %v130 = vmax.bf16 %v64, %v114
  %v131 = vmax.bf16 %v65, %v115
  %v132 = vmax.bf16 %v66, %v116
  %v133 = vmax.bf16 %v67, %v117
  %v134 = vmax.bf16 %v68, %v118
  %v135 = vmax.bf16 %v69, %v119
  %v136 = vmax.bf16 %v70, %v120
  %v137 = vmax.bf16 %v71, %v121
  %v138 = vmax.bf16 %v72, %v122
  %v139 = vmax.bf16 %v73, %v123
  %v140 = vmax.bf16 %v74, %v124
  %v141 = vmax.bf16 %v75, %v125
  %vm142 = vcmask 31744
  %143 = vst.msk [vmem:[#allocation2] sm:$0xff] %vm142, 0.0
  %144 = vst.msk [vmem:[#allocation2 + $0x8] sm:$0xff] %vm142, 0.0
  %145 = vst.msk [vmem:[#allocation2 + $0xa0] sm:$0xff] %vm142, 0.0
  %146 = vst.msk [vmem:[#allocation2 + $0xa8] sm:$0xff] %vm142, 0.0
  %s147 = scalar_lea.vmem [#allocation2], 144
  %148 = vst.msk [vmem:[%s147] sm:$0xff] %vm142, 0.0
  %149 = vst.msk [vmem:[%s147 + $0x8] sm:$0xff] %vm142, 0.0
  %150 = vst.msk [vmem:[%s147 + $0xa0] sm:$0xff] %vm142, 0.0
  %151 = vst.msk [vmem:[%s147 + $0xa8] sm:$0xff] %vm142, 0.0
  %vm152 = vcmask 24576
  %153 = vst.msk [vmem:[#allocation2] sm:$0x1] %vm152, 0.0
  %154 = vst.msk [vmem:[#allocation2 + $0x10] sm:$0x1] %vm152, 0.0
  %155 = vst.msk [vmem:[#allocation2 + $0x20] sm:$0x1] %vm152, 0.0
  %156 = vst.msk [vmem:[#allocation2 + $0x30] sm:$0x1] %vm152, 0.0
  %157 = vst.msk [vmem:[#allocation2 + $0x40] sm:$0x1] %vm152, 0.0
  %158 = vst.msk [vmem:[#allocation2 + $0x50] sm:$0x1] %vm152, 0.0
  %159 = vst.msk [vmem:[#allocation2 + $0x60] sm:$0x1] %vm152, 0.0
  %160 = vst.msk [vmem:[#allocation2 + $0x70] sm:$0x1] %vm152, 0.0
  %161 = vst.msk [vmem:[#allocation2 + $0x80] sm:$0x1] %vm152, 0.0
  %162 = vst.msk [vmem:[#allocation2 + $0x90] sm:$0x1] %vm152, 0.0
  %163 = vst.msk [vmem:[#allocation2 + $0xa0] sm:$0x1] %vm152, 0.0
  %164 = vst.msk [vmem:[#allocation2 + $0xb0] sm:$0x1] %vm152, 0.0
  %165 = vst.msk [vmem:[#allocation2 + $0xc0] sm:$0x1] %vm152, 0.0
  %166 = vst.msk [vmem:[#allocation2 + $0xd0] sm:$0x1] %vm152, 0.0
  %167 = vst.msk [vmem:[#allocation2 + $0xe0] sm:$0x1] %vm152, 0.0
  %168 = vst.msk [vmem:[#allocation2 + $0xf0] sm:$0x1] %vm152, 0.0
  %169 = vst.msk [vmem:[#allocation2 + $0x100] sm:$0x1] %vm152, 0.0
  %170 = vst.msk [vmem:[#allocation2 + $0x110] sm:$0x1] %vm152, 0.0
  %171 = vst.msk [vmem:[#allocation2 + $0x120] sm:$0x1] %vm152, 0.0
  %172 = vst.msk [vmem:[#allocation2 + $0x130] sm:$0x1] %vm152, 0.0
  %173 = vst.msk [vmem:[#allocation2 + $0x9] sm:$0x1] %vm152, 0.0
  %174 = vst.msk [vmem:[#allocation2 + $0x19] sm:$0x1] %vm152, 0.0
  %175 = vst.msk [vmem:[#allocation2 + $0x29] sm:$0x1] %vm152, 0.0
  %176 = vst.msk [vmem:[#allocation2 + $0x39] sm:$0x1] %vm152, 0.0
  %177 = vst.msk [vmem:[#allocation2 + $0x49] sm:$0x1] %vm152, 0.0
  %178 = vst.msk [vmem:[#allocation2 + $0x59] sm:$0x1] %vm152, 0.0
  %179 = vst.msk [vmem:[#allocation2 + $0x69] sm:$0x1] %vm152, 0.0
  %180 = vst.msk [vmem:[#allocation2 + $0x79] sm:$0x1] %vm152, 0.0
  %181 = vst.msk [vmem:[#allocation2 + $0x89] sm:$0x1] %vm152, 0.0
  %182 = vst.msk [vmem:[#allocation2 + $0x99] sm:$0x1] %vm152, 0.0
  %183 = vst.msk [vmem:[#allocation2 + $0xa9] sm:$0x1] %vm152, 0.0
  %184 = vst.msk [vmem:[#allocation2 + $0xb9] sm:$0x1] %vm152, 0.0
  %185 = vst.msk [vmem:[#allocation2 + $0xc9] sm:$0x1] %vm152, 0.0
  %186 = vst.msk [vmem:[#allocation2 + $0xd9] sm:$0x1] %vm152, 0.0
  %187 = vst.msk [vmem:[#allocation2 + $0xe9] sm:$0x1] %vm152, 0.0
  %188 = vst.msk [vmem:[#allocation2 + $0xf9] sm:$0x1] %vm152, 0.0
  %189 = vst.msk [vmem:[#allocation2 + $0x109] sm:$0x1] %vm152, 0.0
  %190 = vst.msk [vmem:[#allocation2 + $0x119] sm:$0x1] %vm152, 0.0
  %191 = vst.msk [vmem:[#allocation2 + $0x129] sm:$0x1] %vm152, 0.0
  %192 = vst.msk [vmem:[#allocation2 + $0x139] sm:$0x1] %vm152, 0.0
  %vm193 = vcmask 64512
  %194 = vst.msk [vmem:[#allocation3] sm:$0xff] %vm193, 0.0
  %195 = vst.msk [vmem:[#allocation3 + $0x8] sm:$0xff] %vm193, 0.0
  %196 = vst.msk [vmem:[#allocation3 + $0xa0] sm:$0xff] %vm193, 0.0
  %197 = vst.msk [vmem:[#allocation3 + $0xa8] sm:$0xff] %vm193, 0.0
  %s198 = scalar_lea.vmem [#allocation3], 144
  %199 = vst.msk [vmem:[%s198] sm:$0xff] %vm193, 0.0
  %200 = vst.msk [vmem:[%s198 + $0x8] sm:$0xff] %vm193, 0.0
  %201 = vst.msk [vmem:[%s198 + $0xa0] sm:$0xff] %vm193, 0.0
  %202 = vst.msk [vmem:[%s198 + $0xa8] sm:$0xff] %vm193, 0.0
  %vm203 = vcmask 57344
  %204 = vst.msk [vmem:[#allocation3] sm:$0x1] %vm203, 0.0
  %205 = vst.msk [vmem:[#allocation3 + $0x10] sm:$0x1] %vm203, 0.0
  %206 = vst.msk [vmem:[#allocation3 + $0x20] sm:$0x1] %vm203, 0.0
  %207 = vst.msk [vmem:[#allocation3 + $0x30] sm:$0x1] %vm203, 0.0
  %208 = vst.msk [vmem:[#allocation3 + $0x40] sm:$0x1] %vm203, 0.0
  %209 = vst.msk [vmem:[#allocation3 + $0x50] sm:$0x1] %vm203, 0.0
  %210 = vst.msk [vmem:[#allocation3 + $0x60] sm:$0x1] %vm203, 0.0
  %211 = vst.msk [vmem:[#allocation3 + $0x70] sm:$0x1] %vm203, 0.0
  %212 = vst.msk [vmem:[#allocation3 + $0x80] sm:$0x1] %vm203, 0.0
  %213 = vst.msk [vmem:[#allocation3 + $0x90] sm:$0x1] %vm203, 0.0
  %214 = vst.msk [vmem:[#allocation3 + $0xa0] sm:$0x1] %vm203, 0.0
  %215 = vst.msk [vmem:[#allocation3 + $0xb0] sm:$0x1] %vm203, 0.0
  %216 = vst.msk [vmem:[#allocation3 + $0xc0] sm:$0x1] %vm203, 0.0
  %217 = vst.msk [vmem:[#allocation3 + $0xd0] sm:$0x1] %vm203, 0.0
  %218 = vst.msk [vmem:[#allocation3 + $0xe0] sm:$0x1] %vm203, 0.0
  %219 = vst.msk [vmem:[#allocation3 + $0xf0] sm:$0x1] %vm203, 0.0
  %220 = vst.msk [vmem:[#allocation3 + $0x100] sm:$0x1] %vm203, 0.0
  %221 = vst.msk [vmem:[#allocation3 + $0x110] sm:$0x1] %vm203, 0.0
  %222 = vst.msk [vmem:[#allocation3 + $0x120] sm:$0x1] %vm203, 0.0
  %223 = vst.msk [vmem:[#allocation3 + $0x130] sm:$0x1] %vm203, 0.0
  %224 = vst.msk [vmem:[#allocation3 + $0x9] sm:$0x1] %vm203, 0.0
  %225 = vst.msk [vmem:[#allocation3 + $0x19] sm:$0x1] %vm203, 0.0
  %226 = vst.msk [vmem:[#allocation3 + $0x29] sm:$0x1] %vm203, 0.0
  %227 = vst.msk [vmem:[#allocation3 + $0x39] sm:$0x1] %vm203, 0.0
  %228 = vst.msk [vmem:[#allocation3 + $0x49] sm:$0x1] %vm203, 0.0
  %229 = vst.msk [vmem:[#allocation3 + $0x59] sm:$0x1] %vm203, 0.0
  %230 = vst.msk [vmem:[#allocation3 + $0x69] sm:$0x1] %vm203, 0.0
  %231 = vst.msk [vmem:[#allocation3 + $0x79] sm:$0x1] %vm203, 0.0
  %232 = vst.msk [vmem:[#allocation3 + $0x89] sm:$0x1] %vm203, 0.0
  %233 = vst.msk [vmem:[#allocation3 + $0x99] sm:$0x1] %vm203, 0.0
  %234 = vst.msk [vmem:[#allocation3 + $0xa9] sm:$0x1] %vm203, 0.0
  %235 = vst.msk [vmem:[#allocation3 + $0xb9] sm:$0x1] %vm203, 0.0
  %236 = vst.msk [vmem:[#allocation3 + $0xc9] sm:$0x1] %vm203, 0.0
  %237 = vst.msk [vmem:[#allocation3 + $0xd9] sm:$0x1] %vm203, 0.0
  %238 = vst.msk [vmem:[#allocation3 + $0xe9] sm:$0x1] %vm203, 0.0
  %239 = vst.msk [vmem:[#allocation3 + $0xf9] sm:$0x1] %vm203, 0.0
  %240 = vst.msk [vmem:[#allocation3 + $0x109] sm:$0x1] %vm203, 0.0
  %241 = vst.msk [vmem:[#allocation3 + $0x119] sm:$0x1] %vm203, 0.0
  %242 = vst.msk [vmem:[#allocation3 + $0x129] sm:$0x1] %vm203, 0.0
  %243 = vst.msk [vmem:[#allocation3 + $0x139] sm:$0x1] %vm203, 0.0
  %v244 = vunpack.c.l.bf16 %v126
  %v245 = vunpack.c.l.bf16 %v127
  %v246 = vunpack.c.l.bf16 %v128
  %v247 = vunpack.c.l.bf16 %v129
  %v248 = vunpack.c.l.bf16 %v130
  %v249 = vunpack.c.l.bf16 %v131
  %v250 = vunpack.c.l.bf16 %v132
  %v251 = vunpack.c.l.bf16 %v133
  %v252 = vunpack.c.l.bf16 %v134
  %v253 = vunpack.c.l.bf16 %v135
  %v254 = vunpack.c.l.bf16 %v136
  %v255 = vunpack.c.l.bf16 %v137
  %v256 = vunpack.c.l.bf16 %v138
  %v257 = vunpack.c.l.bf16 %v139
  %v258 = vunpack.c.l.bf16 %v140
  %v259 = vunpack.c.l.bf16 %v141
  %s260 = scalar_lea.vmem [#allocation2], 16
  %261 = vst.msk [vmem:[%s260 + $0x1] sm:$0xff] %vm142, %v244
  %262 = vst.msk [vmem:[%s260 + $0x11] sm:$0xff] %vm142, %v245
  %263 = vst.msk [vmem:[%s260 + $0x21] sm:$0xff] %vm142, %v246
  %264 = vst.msk [vmem:[%s260 + $0x31] sm:$0xff] %vm142, %v247
  %265 = vst.msk [vmem:[%s260 + $0x41] sm:$0xff] %vm142, %v248
  %266 = vst.msk [vmem:[%s260 + $0x51] sm:$0xff] %vm142, %v249
  %267 = vst.msk [vmem:[%s260 + $0x61] sm:$0xff] %vm142, %v250
  %268 = vst.msk [vmem:[%s260 + $0x71] sm:$0xff] %vm142, %v251
  %269 = vst.msk [vmem:[%s260 + $0xa1] sm:$0xff] %vm142, %v252
  %270 = vst.msk [vmem:[%s260 + $0xb1] sm:$0xff] %vm142, %v253
  %271 = vst.msk [vmem:[%s260 + $0xc1] sm:$0xff] %vm142, %v254
  %272 = vst.msk [vmem:[%s260 + $0xd1] sm:$0xff] %vm142, %v255
  %273 = vst.msk [vmem:[%s260 + $0xe1] sm:$0xff] %vm142, %v256
  %274 = vst.msk [vmem:[%s260 + $0xf1] sm:$0xff] %vm142, %v257
  %275 = vst.msk [vmem:[%s260 + $0x101] sm:$0xff] %vm142, %v258
  %276 = vst.msk [vmem:[%s260 + $0x111] sm:$0xff] %vm142, %v259
  $region30: #{downsample_forward.1} parent=0
    #allocation4 [shape = 'u8[32768]{0}', space=vmem, size = 0x8000, scoped, tag = 'scoped memory for downsample_forward.1']
    %v277 = vld [vmem:[#allocation2] sm:$0xff]
    %v278 = vld [vmem:[#allocation2 + $0x10] sm:$0xff]
    %v279 = vld [vmem:[#allocation2 + $0x20] sm:$0xff]
    %v280 = vld [vmem:[#allocation2 + $0x30] sm:$0xff]
    %v281 = vld [vmem:[#allocation2 + $0x40] sm:$0xff]
    %v282 = vld [vmem:[#allocation2 + $0x50] sm:$0xff]
    %v283 = vld [vmem:[#allocation2 + $0x60] sm:$0xff]
    %v284 = vld [vmem:[#allocation2 + $0x70] sm:$0xff]
    %v285 = vld [vmem:[#allocation2 + $0xa0] sm:$0xff]
    %v286 = vld [vmem:[#allocation2 + $0xb0] sm:$0xff]
    %v287 = vld [vmem:[#allocation2 + $0xc0] sm:$0xff]
    %v288 = vld [vmem:[#allocation2 + $0xd0] sm:$0xff]
    %v289 = vld [vmem:[#allocation2 + $0xe0] sm:$0xff]
    %v290 = vld [vmem:[#allocation2 + $0xf0] sm:$0xff]
    %v291 = vld [vmem:[#allocation2 + $0x100] sm:$0xff]
    %v292 = vld [vmem:[#allocation2 + $0x110] sm:$0xff]
    %v293 = vpack.c.bf16 %v277, %v277
    %v294 = vpack.c.bf16 %v278, %v278
    %v295 = vpack.c.bf16 %v279, %v279
    %v296 = vpack.c.bf16 %v280, %v280
    %v297 = vpack.c.bf16 %v281, %v281
    %v298 = vpack.c.bf16 %v282, %v282
    %v299 = vpack.c.bf16 %v283, %v283
    %v300 = vpack.c.bf16 %v284, %v284
    %v301 = vpack.c.bf16 %v285, %v285
    %v302 = vpack.c.bf16 %v286, %v286
    %v303 = vpack.c.bf16 %v287, %v287
    %v304 = vpack.c.bf16 %v288, %v288
    %v305 = vpack.c.bf16 %v289, %v289
    %v306 = vpack.c.bf16 %v290, %v290
    %v307 = vpack.c.bf16 %v291, %v291
    %v308 = vpack.c.bf16 %v292, %v292
    %vm309 = vcmask 27648
    %310 = vst.msk [vmem:[#allocation4] sm:$0xf] %vm309, %v293
    %311 = vst.msk [vmem:[#allocation4 + $0x4] sm:$0xf] %vm309, %v294
    %312 = vst.msk [vmem:[#allocation4 + $0x8] sm:$0xf] %vm309, %v295
    %313 = vst.msk [vmem:[#allocation4 + $0xc] sm:$0xf] %vm309, %v296
    %314 = vst.msk [vmem:[#allocation4 + $0x10] sm:$0xf] %vm309, %v297
    %315 = vst.msk [vmem:[#allocation4 + $0x14] sm:$0xf] %vm309, %v298
    %316 = vst.msk [vmem:[#allocation4 + $0x18] sm:$0xf] %vm309, %v299
    %317 = vst.msk [vmem:[#allocation4 + $0x1c] sm:$0xf] %vm309, %v300
    %318 = vst.msk [vmem:[#allocation4 + $0x20] sm:$0xf] %vm309, %v301
    %319 = vst.msk [vmem:[#allocation4 + $0x24] sm:$0xf] %vm309, %v302
    %320 = vst.msk [vmem:[#allocation4 + $0x28] sm:$0xf] %vm309, %v303
    %321 = vst.msk [vmem:[#allocation4 + $0x2c] sm:$0xf] %vm309, %v304
    %322 = vst.msk [vmem:[#allocation4 + $0x30] sm:$0xf] %vm309, %v305
    %323 = vst.msk [vmem:[#allocation4 + $0x34] sm:$0xf] %vm309, %v306
    %324 = vst.msk [vmem:[#allocation4 + $0x38] sm:$0xf] %vm309, %v307
    %325 = vst.msk [vmem:[#allocation4 + $0x3c] sm:$0xf] %vm309, %v308
    %v326 = vld [vmem:[#allocation2 + $0x1] sm:$0xff]
    %v327 = vld [vmem:[#allocation2 + $0x11] sm:$0xff]
    %v328 = vld [vmem:[#allocation2 + $0x21] sm:$0xff]
    %v329 = vld [vmem:[#allocation2 + $0x31] sm:$0xff]
    %v330 = vld [vmem:[#allocation2 + $0x41] sm:$0xff]
    %v331 = vld [vmem:[#allocation2 + $0x51] sm:$0xff]
    %v332 = vld [vmem:[#allocation2 + $0x61] sm:$0xff]
    %v333 = vld [vmem:[#allocation2 + $0x71] sm:$0xff]
    %v334 = vld [vmem:[#allocation2 + $0xa1] sm:$0xff]
    %v335 = vld [vmem:[#allocation2 + $0xb1] sm:$0xff]
    %v336 = vld [vmem:[#allocation2 + $0xc1] sm:$0xff]
    %v337 = vld [vmem:[#allocation2 + $0xd1] sm:$0xff]
    %v338 = vld [vmem:[#allocation2 + $0xe1] sm:$0xff]
    %v339 = vld [vmem:[#allocation2 + $0xf1] sm:$0xff]
    %v340 = vld [vmem:[#allocation2 + $0x101] sm:$0xff]
    %v341 = vld [vmem:[#allocation2 + $0x111] sm:$0xff]
    %v342 = vpack.c.bf16 %v326, %v326
    %v343 = vpack.c.bf16 %v327, %v327
    %v344 = vpack.c.bf16 %v328, %v328
    %v345 = vpack.c.bf16 %v329, %v329
    %v346 = vpack.c.bf16 %v330, %v330
    %v347 = vpack.c.bf16 %v331, %v331
    %v348 = vpack.c.bf16 %v332, %v332
    %v349 = vpack.c.bf16 %v333, %v333
    %v350 = vpack.c.bf16 %v334, %v334
    %v351 = vpack.c.bf16 %v335, %v335
    %v352 = vpack.c.bf16 %v336, %v336
    %v353 = vpack.c.bf16 %v337, %v337
    %v354 = vpack.c.bf16 %v338, %v338
    %v355 = vpack.c.bf16 %v339, %v339
    %v356 = vpack.c.bf16 %v340, %v340
    %v357 = vpack.c.bf16 %v341, %v341
    %v374 = vunpack.c.l.b16 %v342
    %v375 = vunpack.c.l.b16 %v343
    %v376 = vunpack.c.l.b16 %v344
    %v377 = vunpack.c.l.b16 %v345
    %v378 = vunpack.c.l.b16 %v346
    %v379 = vunpack.c.l.b16 %v347
    %v380 = vunpack.c.l.b16 %v348
    %v381 = vunpack.c.l.b16 %v349
    %v382 = vunpack.c.l.b16 %v350
    %v383 = vunpack.c.l.b16 %v351
    %v384 = vunpack.c.l.b16 %v352
    %v385 = vunpack.c.l.b16 %v353
    %v386 = vunpack.c.l.b16 %v354
    %v387 = vunpack.c.l.b16 %v355
    %v388 = vunpack.c.l.b16 %v356
    %v389 = vunpack.c.l.b16 %v357
    %v390 = vpack.c.b16 %v374, %v374
    %v391 = vpack.c.b16 %v375, %v375
    %v392 = vpack.c.b16 %v376, %v376
    %v393 = vpack.c.b16 %v377, %v377
    %v394 = vpack.c.b16 %v378, %v378
    %v395 = vpack.c.b16 %v379, %v379
    %v396 = vpack.c.b16 %v380, %v380
    %v397 = vpack.c.b16 %v381, %v381
    %v398 = vpack.c.b16 %v382, %v382
    %v399 = vpack.c.b16 %v383, %v383
    %v400 = vpack.c.b16 %v384, %v384
    %v401 = vpack.c.b16 %v385, %v385
    %v402 = vpack.c.b16 %v386, %v386
    %v403 = vpack.c.b16 %v387, %v387
    %v404 = vpack.c.b16 %v388, %v388
    %v405 = vpack.c.b16 %v389, %v389
    %406 = vrot.lane.b32.xlu0 %v390, 4
    %v407 = vpop.permute.xlu0 %406
    %408 = vrot.lane.b32.xlu0 %v391, 4
    %v409 = vpop.permute.xlu0 %408
    %410 = vrot.lane.b32.xlu0 %v392, 4
    %v411 = vpop.permute.xlu0 %410
    %412 = vrot.lane.b32.xlu0 %v393, 4
    %v413 = vpop.permute.xlu0 %412
    %414 = vrot.lane.b32.xlu0 %v394, 4
    %v415 = vpop.permute.xlu0 %414
    %416 = vrot.lane.b32.xlu0 %v395, 4
    %v417 = vpop.permute.xlu0 %416
    %418 = vrot.lane.b32.xlu0 %v396, 4
    %v419 = vpop.permute.xlu0 %418
    %420 = vrot.lane.b32.xlu0 %v397, 4
    %v421 = vpop.permute.xlu0 %420
    %422 = vrot.lane.b32.xlu0 %v398, 4
    %v423 = vpop.permute.xlu0 %422
    %424 = vrot.lane.b32.xlu0 %v399, 4
    %v425 = vpop.permute.xlu0 %424
    %426 = vrot.lane.b32.xlu0 %v400, 4
    %v427 = vpop.permute.xlu0 %426
    %428 = vrot.lane.b32.xlu0 %v401, 4
    %v429 = vpop.permute.xlu0 %428
    %430 = vrot.lane.b32.xlu0 %v402, 4
    %v431 = vpop.permute.xlu0 %430
    %432 = vrot.lane.b32.xlu0 %v403, 4
    %v433 = vpop.permute.xlu0 %432
    %434 = vrot.lane.b32.xlu0 %v404, 4
    %v435 = vpop.permute.xlu0 %434
    %436 = vrot.lane.b32.xlu0 %v405, 4
    %v437 = vpop.permute.xlu0 %436
    %vm454 = vcmask 60448
    %455 = vst.msk [vmem:[#allocation4] sm:$0xf] %vm454, %v407
    %456 = vst.msk [vmem:[#allocation4 + $0x4] sm:$0xf] %vm454, %v409
    %457 = vst.msk [vmem:[#allocation4 + $0x8] sm:$0xf] %vm454, %v411
    %458 = vst.msk [vmem:[#allocation4 + $0xc] sm:$0xf] %vm454, %v413
    %459 = vst.msk [vmem:[#allocation4 + $0x10] sm:$0xf] %vm454, %v415
    %460 = vst.msk [vmem:[#allocation4 + $0x14] sm:$0xf] %vm454, %v417
    %461 = vst.msk [vmem:[#allocation4 + $0x18] sm:$0xf] %vm454, %v419
    %462 = vst.msk [vmem:[#allocation4 + $0x1c] sm:$0xf] %vm454, %v421
    %463 = vst.msk [vmem:[#allocation4 + $0x20] sm:$0xf] %vm454, %v423
    %464 = vst.msk [vmem:[#allocation4 + $0x24] sm:$0xf] %vm454, %v425
    %465 = vst.msk [vmem:[#allocation4 + $0x28] sm:$0xf] %vm454, %v427
    %466 = vst.msk [vmem:[#allocation4 + $0x2c] sm:$0xf] %vm454, %v429
    %467 = vst.msk [vmem:[#allocation4 + $0x30] sm:$0xf] %vm454, %v431
    %468 = vst.msk [vmem:[#allocation4 + $0x34] sm:$0xf] %vm454, %v433
    %469 = vst.msk [vmem:[#allocation4 + $0x38] sm:$0xf] %vm454, %v435
    %470 = vst.msk [vmem:[#allocation4 + $0x3c] sm:$0xf] %vm454, %v437
    %v471 = vld [vmem:[#allocation2 + $0x2] sm:$0xff]
    %v472 = vld [vmem:[#allocation2 + $0x12] sm:$0xff]
    %v473 = vld [vmem:[#allocation2 + $0x22] sm:$0xff]
    %v474 = vld [vmem:[#allocation2 + $0x32] sm:$0xff]
    %v475 = vld [vmem:[#allocation2 + $0x42] sm:$0xff]
    %v476 = vld [vmem:[#allocation2 + $0x52] sm:$0xff]
    %v477 = vld [vmem:[#allocation2 + $0x62] sm:$0xff]
    %v478 = vld [vmem:[#allocation2 + $0x72] sm:$0xff]
    %v479 = vld [vmem:[#allocation2 + $0xa2] sm:$0xff]
    %v480 = vld [vmem:[#allocation2 + $0xb2] sm:$0xff]
    %v481 = vld [vmem:[#allocation2 + $0xc2] sm:$0xff]
    %v482 = vld [vmem:[#allocation2 + $0xd2] sm:$0xff]
    %v483 = vld [vmem:[#allocation2 + $0xe2] sm:$0xff]
    %v484 = vld [vmem:[#allocation2 + $0xf2] sm:$0xff]
    %v485 = vld [vmem:[#allocation2 + $0x102] sm:$0xff]
    %v486 = vld [vmem:[#allocation2 + $0x112] sm:$0xff]
    %v487 = vpack.c.bf16 %v471, %v471
    %v488 = vpack.c.bf16 %v472, %v472
    %v489 = vpack.c.bf16 %v473, %v473
    %v490 = vpack.c.bf16 %v474, %v474
    %v491 = vpack.c.bf16 %v475, %v475
    %v492 = vpack.c.bf16 %v476, %v476
    %v493 = vpack.c.bf16 %v477, %v477
    %v494 = vpack.c.bf16 %v478, %v478
    %v495 = vpack.c.bf16 %v479, %v479
    %v496 = vpack.c.bf16 %v480, %v480
    %v497 = vpack.c.bf16 %v481, %v481
    %v498 = vpack.c.bf16 %v482, %v482
    %v499 = vpack.c.bf16 %v483, %v483
    %v500 = vpack.c.bf16 %v484, %v484
    %v501 = vpack.c.bf16 %v485, %v485
    %v502 = vpack.c.bf16 %v486, %v486
    %v519 = vunpack.c.l.b16 %v487
    %v520 = vunpack.c.l.b16 %v488
    %v521 = vunpack.c.l.b16 %v489
    %v522 = vunpack.c.l.b16 %v490
    %v523 = vunpack.c.l.b16 %v491
    %v524 = vunpack.c.l.b16 %v492
    %v525 = vunpack.c.l.b16 %v493
    %v526 = vunpack.c.l.b16 %v494
    %v527 = vunpack.c.l.b16 %v495
    %v528 = vunpack.c.l.b16 %v496
    %v529 = vunpack.c.l.b16 %v497
    %v530 = vunpack.c.l.b16 %v498
    %v531 = vunpack.c.l.b16 %v499
    %v532 = vunpack.c.l.b16 %v500
    %v533 = vunpack.c.l.b16 %v501
    %v534 = vunpack.c.l.b16 %v502
    %v535 = vpack.c.b16 %v519, %v519
    %v536 = vpack.c.b16 %v520, %v520
    %v537 = vpack.c.b16 %v521, %v521
    %v538 = vpack.c.b16 %v522, %v522
    %v539 = vpack.c.b16 %v523, %v523
    %v540 = vpack.c.b16 %v524, %v524
    %v541 = vpack.c.b16 %v525, %v525
    %v542 = vpack.c.b16 %v526, %v526
    %v543 = vpack.c.b16 %v527, %v527
    %v544 = vpack.c.b16 %v528, %v528
    %v545 = vpack.c.b16 %v529, %v529
    %v546 = vpack.c.b16 %v530, %v530
    %v547 = vpack.c.b16 %v531, %v531
    %v548 = vpack.c.b16 %v532, %v532
    %v549 = vpack.c.b16 %v533, %v533
    %v550 = vpack.c.b16 %v534, %v534
    %551 = vrot.lane.b32.xlu0 %v535, 8
    %v552 = vpop.permute.xlu0 %551
    %553 = vrot.lane.b32.xlu0 %v536, 8
    %v554 = vpop.permute.xlu0 %553
    %555 = vrot.lane.b32.xlu0 %v537, 8
    %v556 = vpop.permute.xlu0 %555
    %557 = vrot.lane.b32.xlu0 %v538, 8
    %v558 = vpop.permute.xlu0 %557
    %559 = vrot.lane.b32.xlu0 %v539, 8
    %v560 = vpop.permute.xlu0 %559
    %561 = vrot.lane.b32.xlu0 %v540, 8
    %v562 = vpop.permute.xlu0 %561
    %563 = vrot.lane.b32.xlu0 %v541, 8
    %v564 = vpop.permute.xlu0 %563
    %565 = vrot.lane.b32.xlu0 %v542, 8
    %v566 = vpop.permute.xlu0 %565
    %567 = vrot.lane.b32.xlu0 %v543, 8
    %v568 = vpop.permute.xlu0 %567
    %569 = vrot.lane.b32.xlu0 %v544, 8
    %v570 = vpop.permute.xlu0 %569
    %571 = vrot.lane.b32.xlu0 %v545, 8
    %v572 = vpop.permute.xlu0 %571
    %573 = vrot.lane.b32.xlu0 %v546, 8
    %v574 = vpop.permute.xlu0 %573
    %575 = vrot.lane.b32.xlu0 %v547, 8
    %v576 = vpop.permute.xlu0 %575
    %577 = vrot.lane.b32.xlu0 %v548, 8
    %v578 = vpop.permute.xlu0 %577
    %579 = vrot.lane.b32.xlu0 %v549, 8
    %v580 = vpop.permute.xlu0 %579
    %581 = vrot.lane.b32.xlu0 %v550, 8
    %v582 = vpop.permute.xlu0 %581
    %vm599 = vcmask 93248
    %600 = vst.msk [vmem:[#allocation4] sm:$0xf] %vm599, %v552
    %601 = vst.msk [vmem:[#allocation4 + $0x4] sm:$0xf] %vm599, %v554
    %602 = vst.msk [vmem:[#allocation4 + $0x8] sm:$0xf] %vm599, %v556
    %603 = vst.msk [vmem:[#allocation4 + $0xc] sm:$0xf] %vm599, %v558
    %604 = vst.msk [vmem:[#allocation4 + $0x10] sm:$0xf] %vm599, %v560
    %605 = vst.msk [vmem:[#allocation4 + $0x14] sm:$0xf] %vm599, %v562
    %606 = vst.msk [vmem:[#allocation4 + $0x18] sm:$0xf] %vm599, %v564
    %607 = vst.msk [vmem:[#allocation4 + $0x1c] sm:$0xf] %vm599, %v566
    %608 = vst.msk [vmem:[#allocation4 + $0x20] sm:$0xf] %vm599, %v568
    %609 = vst.msk [vmem:[#allocation4 + $0x24] sm:$0xf] %vm599, %v570
    %610 = vst.msk [vmem:[#allocation4 + $0x28] sm:$0xf] %vm599, %v572
    %611 = vst.msk [vmem:[#allocation4 + $0x2c] sm:$0xf] %vm599, %v574
    %612 = vst.msk [vmem:[#allocation4 + $0x30] sm:$0xf] %vm599, %v576
    %613 = vst.msk [vmem:[#allocation4 + $0x34] sm:$0xf] %vm599, %v578
    %614 = vst.msk [vmem:[#allocation4 + $0x38] sm:$0xf] %vm599, %v580
    %615 = vst.msk [vmem:[#allocation4 + $0x3c] sm:$0xf] %vm599, %v582
    %v616 = vld [vmem:[#allocation4] sm:$0xf]
    %v617 = vld [vmem:[#allocation4 + $0x4] sm:$0xf]
    %v618 = vld [vmem:[#allocation4 + $0x8] sm:$0xf]
    %v619 = vld [vmem:[#allocation4 + $0xc] sm:$0xf]
    %v620 = vld [vmem:[#allocation4 + $0x10] sm:$0xf]
    %v621 = vld [vmem:[#allocation4 + $0x14] sm:$0xf]
    %v622 = vld [vmem:[#allocation4 + $0x18] sm:$0xf]
    %v623 = vld [vmem:[#allocation4 + $0x1c] sm:$0xf]
    %v624 = vld [vmem:[#allocation4 + $0x20] sm:$0xf]
    %v625 = vld [vmem:[#allocation4 + $0x24] sm:$0xf]
    %v626 = vld [vmem:[#allocation4 + $0x28] sm:$0xf]
    %v627 = vld [vmem:[#allocation4 + $0x2c] sm:$0xf]
    %v628 = vld [vmem:[#allocation4 + $0x30] sm:$0xf]
    %v629 = vld [vmem:[#allocation4 + $0x34] sm:$0xf]
    %v630 = vld [vmem:[#allocation4 + $0x38] sm:$0xf]
    %v631 = vld [vmem:[#allocation4 + $0x3c] sm:$0xf]
    %v632 = vld [vmem:[%s1] sm:$0xf]
    %v633 = vld [vmem:[%s1 + $0x4] sm:$0x3]
    %v634 = vld [vmem:[%s260] sm:$0xff]
    %v635 = vld [vmem:[%s260 + $0x10] sm:$0xff]
    %v636 = vld [vmem:[%s260 + $0x20] sm:$0xff]
    %v637 = vld [vmem:[%s260 + $0x30] sm:$0xff]
    %v638 = vld [vmem:[%s260 + $0x40] sm:$0xff]
    %v639 = vld [vmem:[%s260 + $0x50] sm:$0xff]
    %v640 = vld [vmem:[%s260 + $0x60] sm:$0xff]
    %v641 = vld [vmem:[%s260 + $0x70] sm:$0xff]
    %v642 = vld [vmem:[%s260 + $0xa0] sm:$0xff]
    %v643 = vld [vmem:[%s260 + $0xb0] sm:$0xff]
    %v644 = vld [vmem:[%s260 + $0xc0] sm:$0xff]
    %v645 = vld [vmem:[%s260 + $0xd0] sm:$0xff]
    %v646 = vld [vmem:[%s260 + $0xe0] sm:$0xff]
    %v647 = vld [vmem:[%s260 + $0xf0] sm:$0xff]
    %v648 = vld [vmem:[%s260 + $0x100] sm:$0xff]
    %v649 = vld [vmem:[%s260 + $0x110] sm:$0xff]
    %v650 = vpack.c.bf16 %v634, %v634
    %v651 = vpack.c.bf16 %v635, %v635
    %v652 = vpack.c.bf16 %v636, %v636
    %v653 = vpack.c.bf16 %v637, %v637
    %v654 = vpack.c.bf16 %v638, %v638
    %v655 = vpack.c.bf16 %v639, %v639
    %v656 = vpack.c.bf16 %v640, %v640
    %v657 = vpack.c.bf16 %v641, %v641
    %v658 = vpack.c.bf16 %v642, %v642
    %v659 = vpack.c.bf16 %v643, %v643
    %v660 = vpack.c.bf16 %v644, %v644
    %v661 = vpack.c.bf16 %v645, %v645
    %v662 = vpack.c.bf16 %v646, %v646
    %v663 = vpack.c.bf16 %v647, %v647
    %v664 = vpack.c.bf16 %v648, %v648
    %v665 = vpack.c.bf16 %v649, %v649
    %666 = vst.msk [vmem:[#allocation4] sm:$0xf] %vm309, %v650
    %667 = vst.msk [vmem:[#allocation4 + $0x4] sm:$0xf] %vm309, %v651
    %668 = vst.msk [vmem:[#allocation4 + $0x8] sm:$0xf] %vm309, %v652
    %669 = vst.msk [vmem:[#allocation4 + $0xc] sm:$0xf] %vm309, %v653
    %670 = vst.msk [vmem:[#allocation4 + $0x10] sm:$0xf] %vm309, %v654
    %671 = vst.msk [vmem:[#allocation4 + $0x14] sm:$0xf] %vm309, %v655
    %672 = vst.msk [vmem:[#allocation4 + $0x18] sm:$0xf] %vm309, %v656
    %673 = vst.msk [vmem:[#allocation4 + $0x1c] sm:$0xf] %vm309, %v657
    %674 = vst.msk [vmem:[#allocation4 + $0x20] sm:$0xf] %vm309, %v658
    %675 = vst.msk [vmem:[#allocation4 + $0x24] sm:$0xf] %vm309, %v659
    %676 = vst.msk [vmem:[#allocation4 + $0x28] sm:$0xf] %vm309, %v660
    %677 = vst.msk [vmem:[#allocation4 + $0x2c] sm:$0xf] %vm309, %v661
    %678 = vst.msk [vmem:[#allocation4 + $0x30] sm:$0xf] %vm309, %v662
    %679 = vst.msk [vmem:[#allocation4 + $0x34] sm:$0xf] %vm309, %v663
    %680 = vst.msk [vmem:[#allocation4 + $0x38] sm:$0xf] %vm309, %v664
    %681 = vst.msk [vmem:[#allocation4 + $0x3c] sm:$0xf] %vm309, %v665
    %v682 = vld [vmem:[%s260 + $0x1] sm:$0xff]
    %v683 = vld [vmem:[%s260 + $0x11] sm:$0xff]
    %v684 = vld [vmem:[%s260 + $0x21] sm:$0xff]
    %v685 = vld [vmem:[%s260 + $0x31] sm:$0xff]
    %v686 = vld [vmem:[%s260 + $0x41] sm:$0xff]
    %v687 = vld [vmem:[%s260 + $0x51] sm:$0xff]
    %v688 = vld [vmem:[%s260 + $0x61] sm:$0xff]
    %v689 = vld [vmem:[%s260 + $0x71] sm:$0xff]
    %v690 = vld [vmem:[%s260 + $0xa1] sm:$0xff]
    %v691 = vld [vmem:[%s260 + $0xb1] sm:$0xff]
    %v692 = vld [vmem:[%s260 + $0xc1] sm:$0xff]
    %v693 = vld [vmem:[%s260 + $0xd1] sm:$0xff]
    %v694 = vld [vmem:[%s260 + $0xe1] sm:$0xff]
    %v695 = vld [vmem:[%s260 + $0xf1] sm:$0xff]
    %v696 = vld [vmem:[%s260 + $0x101] sm:$0xff]
    %v697 = vld [vmem:[%s260 + $0x111] sm:$0xff]
    %v698 = vpack.c.bf16 %v682, %v682
    %v699 = vpack.c.bf16 %v683, %v683
    %v700 = vpack.c.bf16 %v684, %v684
    %v701 = vpack.c.bf16 %v685, %v685
    %v702 = vpack.c.bf16 %v686, %v686
    %v703 = vpack.c.bf16 %v687, %v687
    %v704 = vpack.c.bf16 %v688, %v688
    %v705 = vpack.c.bf16 %v689, %v689
    %v706 = vpack.c.bf16 %v690, %v690
    %v707 = vpack.c.bf16 %v691, %v691
    %v708 = vpack.c.bf16 %v692, %v692
    %v709 = vpack.c.bf16 %v693, %v693
    %v710 = vpack.c.bf16 %v694, %v694
    %v711 = vpack.c.bf16 %v695, %v695
    %v712 = vpack.c.bf16 %v696, %v696
    %v713 = vpack.c.bf16 %v697, %v697
    %v730 = vunpack.c.l.b16 %v698
    %v731 = vunpack.c.l.b16 %v699
    %v732 = vunpack.c.l.b16 %v700
    %v733 = vunpack.c.l.b16 %v701
    %v734 = vunpack.c.l.b16 %v702
    %v735 = vunpack.c.l.b16 %v703
    %v736 = vunpack.c.l.b16 %v704
    %v737 = vunpack.c.l.b16 %v705
    %v738 = vunpack.c.l.b16 %v706
    %v739 = vunpack.c.l.b16 %v707
    %v740 = vunpack.c.l.b16 %v708
    %v741 = vunpack.c.l.b16 %v709
    %v742 = vunpack.c.l.b16 %v710
    %v743 = vunpack.c.l.b16 %v711
    %v744 = vunpack.c.l.b16 %v712
    %v745 = vunpack.c.l.b16 %v713
    %v746 = vpack.c.b16 %v730, %v730
    %v747 = vpack.c.b16 %v731, %v731
    %v748 = vpack.c.b16 %v732, %v732
    %v749 = vpack.c.b16 %v733, %v733
    %v750 = vpack.c.b16 %v734, %v734
    %v751 = vpack.c.b16 %v735, %v735
    %v752 = vpack.c.b16 %v736, %v736
    %v753 = vpack.c.b16 %v737, %v737
    %v754 = vpack.c.b16 %v738, %v738
    %v755 = vpack.c.b16 %v739, %v739
    %v756 = vpack.c.b16 %v740, %v740
    %v757 = vpack.c.b16 %v741, %v741
    %v758 = vpack.c.b16 %v742, %v742
    %v759 = vpack.c.b16 %v743, %v743
    %v760 = vpack.c.b16 %v744, %v744
    %v761 = vpack.c.b16 %v745, %v745
    %762 = vrot.lane.b32.xlu0 %v746, 4
    %v763 = vpop.permute.xlu0 %762
    %764 = vrot.lane.b32.xlu0 %v747, 4
    %v765 = vpop.permute.xlu0 %764
    %766 = vrot.lane.b32.xlu0 %v748, 4
    %v767 = vpop.permute.xlu0 %766
    %768 = vrot.lane.b32.xlu0 %v749, 4
    %v769 = vpop.permute.xlu0 %768
    %770 = vrot.lane.b32.xlu0 %v750, 4
    %v771 = vpop.permute.xlu0 %770
    %772 = vrot.lane.b32.xlu0 %v751, 4
    %v773 = vpop.permute.xlu0 %772
    %774 = vrot.lane.b32.xlu0 %v752, 4
    %v775 = vpop.permute.xlu0 %774
    %776 = vrot.lane.b32.xlu0 %v753, 4
    %v777 = vpop.permute.xlu0 %776
    %778 = vrot.lane.b32.xlu0 %v754, 4
    %v779 = vpop.permute.xlu0 %778
    %780 = vrot.lane.b32.xlu0 %v755, 4
    %v781 = vpop.permute.xlu0 %780
    %782 = vrot.lane.b32.xlu0 %v756, 4
    %v783 = vpop.permute.xlu0 %782
    %784 = vrot.lane.b32.xlu0 %v757, 4
    %v785 = vpop.permute.xlu0 %784
    %786 = vrot.lane.b32.xlu0 %v758, 4
    %v787 = vpop.permute.xlu0 %786
    %788 = vrot.lane.b32.xlu0 %v759, 4
    %v789 = vpop.permute.xlu0 %788
    %790 = vrot.lane.b32.xlu0 %v760, 4
    %v791 = vpop.permute.xlu0 %790
    %792 = vrot.lane.b32.xlu0 %v761, 4
    %v793 = vpop.permute.xlu0 %792
    %810 = vst.msk [vmem:[#allocation4] sm:$0xf] %vm454, %v763
    %811 = vst.msk [vmem:[#allocation4 + $0x4] sm:$0xf] %vm454, %v765
    %812 = vst.msk [vmem:[#allocation4 + $0x8] sm:$0xf] %vm454, %v767
    %813 = vst.msk [vmem:[#allocation4 + $0xc] sm:$0xf] %vm454, %v769
    %814 = vst.msk [vmem:[#allocation4 + $0x10] sm:$0xf] %vm454, %v771
    %815 = vst.msk [vmem:[#allocation4 + $0x14] sm:$0xf] %vm454, %v773
    %816 = vst.msk [vmem:[#allocation4 + $0x18] sm:$0xf] %vm454, %v775
    %817 = vst.msk [vmem:[#allocation4 + $0x1c] sm:$0xf] %vm454, %v777
    %818 = vst.msk [vmem:[#allocation4 + $0x20] sm:$0xf] %vm454, %v779
    %819 = vst.msk [vmem:[#allocation4 + $0x24] sm:$0xf] %vm454, %v781
    %820 = vst.msk [vmem:[#allocation4 + $0x28] sm:$0xf] %vm454, %v783
    %821 = vst.msk [vmem:[#allocation4 + $0x2c] sm:$0xf] %vm454, %v785
    %822 = vst.msk [vmem:[#allocation4 + $0x30] sm:$0xf] %vm454, %v787
    %823 = vst.msk [vmem:[#allocation4 + $0x34] sm:$0xf] %vm454, %v789
    %824 = vst.msk [vmem:[#allocation4 + $0x38] sm:$0xf] %vm454, %v791
    %825 = vst.msk [vmem:[#allocation4 + $0x3c] sm:$0xf] %vm454, %v793
    %v826 = vld [vmem:[%s260 + $0x2] sm:$0xff]
    %v827 = vld [vmem:[%s260 + $0x12] sm:$0xff]
    %v828 = vld [vmem:[%s260 + $0x22] sm:$0xff]
    %v829 = vld [vmem:[%s260 + $0x32] sm:$0xff]
    %v830 = vld [vmem:[%s260 + $0x42] sm:$0xff]
    %v831 = vld [vmem:[%s260 + $0x52] sm:$0xff]
    %v832 = vld [vmem:[%s260 + $0x62] sm:$0xff]
    %v833 = vld [vmem:[%s260 + $0x72] sm:$0xff]
    %v834 = vld [vmem:[%s260 + $0xa2] sm:$0xff]
    %v835 = vld [vmem:[%s260 + $0xb2] sm:$0xff]
    %v836 = vld [vmem:[%s260 + $0xc2] sm:$0xff]
    %v837 = vld [vmem:[%s260 + $0xd2] sm:$0xff]
    %v838 = vld [vmem:[%s260 + $0xe2] sm:$0xff]
    %v839 = vld [vmem:[%s260 + $0xf2] sm:$0xff]
    %v840 = vld [vmem:[%s260 + $0x102] sm:$0xff]
    %v841 = vld [vmem:[%s260 + $0x112] sm:$0xff]
    %v842 = vpack.c.bf16 %v826, %v826
    %v843 = vpack.c.bf16 %v827, %v827
    %v844 = vpack.c.bf16 %v828, %v828
    %v845 = vpack.c.bf16 %v829, %v829
    %v846 = vpack.c.bf16 %v830, %v830
    %v847 = vpack.c.bf16 %v831, %v831
    %v848 = vpack.c.bf16 %v832, %v832
    %v849 = vpack.c.bf16 %v833, %v833
    %v850 = vpack.c.bf16 %v834, %v834
    %v851 = vpack.c.bf16 %v835, %v835
    %v852 = vpack.c.bf16 %v836, %v836
    %v853 = vpack.c.bf16 %v837, %v837
    %v854 = vpack.c.bf16 %v838, %v838
    %v855 = vpack.c.bf16 %v839, %v839
    %v856 = vpack.c.bf16 %v840, %v840
    %v857 = vpack.c.bf16 %v841, %v841
    %v874 = vunpack.c.l.b16 %v842
    %v875 = vunpack.c.l.b16 %v843
    %v876 = vunpack.c.l.b16 %v844
    %v877 = vunpack.c.l.b16 %v845
    %v878 = vunpack.c.l.b16 %v846
    %v879 = vunpack.c.l.b16 %v847
    %v880 = vunpack.c.l.b16 %v848
    %v881 = vunpack.c.l.b16 %v849
    %v882 = vunpack.c.l.b16 %v850
    %v883 = vunpack.c.l.b16 %v851
    %v884 = vunpack.c.l.b16 %v852
    %v885 = vunpack.c.l.b16 %v853
    %v886 = vunpack.c.l.b16 %v854
    %v887 = vunpack.c.l.b16 %v855
    %v888 = vunpack.c.l.b16 %v856
    %v889 = vunpack.c.l.b16 %v857
    %v890 = vpack.c.b16 %v874, %v874
    %v891 = vpack.c.b16 %v875, %v875
    %v892 = vpack.c.b16 %v876, %v876
    %v893 = vpack.c.b16 %v877, %v877
    %v894 = vpack.c.b16 %v878, %v878
    %v895 = vpack.c.b16 %v879, %v879
    %v896 = vpack.c.b16 %v880, %v880
    %v897 = vpack.c.b16 %v881, %v881
    %v898 = vpack.c.b16 %v882, %v882
    %v899 = vpack.c.b16 %v883, %v883
    %v900 = vpack.c.b16 %v884, %v884
    %v901 = vpack.c.b16 %v885, %v885
    %v902 = vpack.c.b16 %v886, %v886
    %v903 = vpack.c.b16 %v887, %v887
    %v904 = vpack.c.b16 %v888, %v888
    %v905 = vpack.c.b16 %v889, %v889
    %906 = vrot.lane.b32.xlu0 %v890, 8
    %v907 = vpop.permute.xlu0 %906
    %908 = vrot.lane.b32.xlu0 %v891, 8
    %v909 = vpop.permute.xlu0 %908
    %910 = vrot.lane.b32.xlu0 %v892, 8
    %v911 = vpop.permute.xlu0 %910
    %912 = vrot.lane.b32.xlu0 %v893, 8
    %v913 = vpop.permute.xlu0 %912
    %914 = vrot.lane.b32.xlu0 %v894, 8
    %v915 = vpop.permute.xlu0 %914
    %916 = vrot.lane.b32.xlu0 %v895, 8
    %v917 = vpop.permute.xlu0 %916
    %918 = vrot.lane.b32.xlu0 %v896, 8
    %v919 = vpop.permute.xlu0 %918
    %920 = vrot.lane.b32.xlu0 %v897, 8
    %v921 = vpop.permute.xlu0 %920
    %922 = vrot.lane.b32.xlu0 %v898, 8
    %v923 = vpop.permute.xlu0 %922
    %924 = vrot.lane.b32.xlu0 %v899, 8
    %v925 = vpop.permute.xlu0 %924
    %926 = vrot.lane.b32.xlu0 %v900, 8
    %v927 = vpop.permute.xlu0 %926
    %928 = vrot.lane.b32.xlu0 %v901, 8
    %v929 = vpop.permute.xlu0 %928
    %930 = vrot.lane.b32.xlu0 %v902, 8
    %v931 = vpop.permute.xlu0 %930
    %932 = vrot.lane.b32.xlu0 %v903, 8
    %v933 = vpop.permute.xlu0 %932
    %934 = vrot.lane.b32.xlu0 %v904, 8
    %v935 = vpop.permute.xlu0 %934
    %936 = vrot.lane.b32.xlu0 %v905, 8
    %v937 = vpop.permute.xlu0 %936
    %954 = vst.msk [vmem:[#allocation4] sm:$0xf] %vm599, %v907
    %955 = vst.msk [vmem:[#allocation4 + $0x4] sm:$0xf] %vm599, %v909
    %956 = vst.msk [vmem:[#allocation4 + $0x8] sm:$0xf] %vm599, %v911
    %957 = vst.msk [vmem:[#allocation4 + $0xc] sm:$0xf] %vm599, %v913
    %958 = vst.msk [vmem:[#allocation4 + $0x10] sm:$0xf] %vm599, %v915
    %959 = vst.msk [vmem:[#allocation4 + $0x14] sm:$0xf] %vm599, %v917
    %960 = vst.msk [vmem:[#allocation4 + $0x18] sm:$0xf] %vm599, %v919
    %961 = vst.msk [vmem:[#allocation4 + $0x1c] sm:$0xf] %vm599, %v921
    %962 = vst.msk [vmem:[#allocation4 + $0x20] sm:$0xf] %vm599, %v923
    %963 = vst.msk [vmem:[#allocation4 + $0x24] sm:$0xf] %vm599, %v925
    %964 = vst.msk [vmem:[#allocation4 + $0x28] sm:$0xf] %vm599, %v927
    %965 = vst.msk [vmem:[#allocation4 + $0x2c] sm:$0xf] %vm599, %v929
    %966 = vst.msk [vmem:[#allocation4 + $0x30] sm:$0xf] %vm599, %v931
    %967 = vst.msk [vmem:[#allocation4 + $0x34] sm:$0xf] %vm599, %v933
    %968 = vst.msk [vmem:[#allocation4 + $0x38] sm:$0xf] %vm599, %v935
    %969 = vst.msk [vmem:[#allocation4 + $0x3c] sm:$0xf] %vm599, %v937
    %v970 = vld [vmem:[#allocation4] sm:$0xf]
    %v971 = vld [vmem:[#allocation4 + $0x4] sm:$0xf]
    %v972 = vld [vmem:[#allocation4 + $0x8] sm:$0xf]
    %v973 = vld [vmem:[#allocation4 + $0xc] sm:$0xf]
    %v974 = vld [vmem:[#allocation4 + $0x10] sm:$0xf]
    %v975 = vld [vmem:[#allocation4 + $0x14] sm:$0xf]
    %v976 = vld [vmem:[#allocation4 + $0x18] sm:$0xf]
    %v977 = vld [vmem:[#allocation4 + $0x1c] sm:$0xf]
    %v978 = vld [vmem:[#allocation4 + $0x20] sm:$0xf]
    %v979 = vld [vmem:[#allocation4 + $0x24] sm:$0xf]
    %v980 = vld [vmem:[#allocation4 + $0x28] sm:$0xf]
    %v981 = vld [vmem:[#allocation4 + $0x2c] sm:$0xf]
    %v982 = vld [vmem:[#allocation4 + $0x30] sm:$0xf]
    %v983 = vld [vmem:[#allocation4 + $0x34] sm:$0xf]
    %v984 = vld [vmem:[#allocation4 + $0x38] sm:$0xf]
    %v985 = vld [vmem:[#allocation4 + $0x3c] sm:$0xf]
    %s986 = scalar_lea.vmem %s1, 8
    %v987 = vld [vmem:[%s986] sm:$0xf]
    %v988 = vld [vmem:[%s986 + $0x4] sm:$0x3]
    %v1005 = vunpack.c.l.b16 %v970
    %v1006 = vunpack.c.l.b16 %v971
    %v1007 = vunpack.c.l.b16 %v972
    %v1008 = vunpack.c.l.b16 %v973
    %v1009 = vunpack.c.l.b16 %v974
    %v1010 = vunpack.c.l.b16 %v975
    %v1011 = vunpack.c.l.b16 %v976
    %v1012 = vunpack.c.l.b16 %v977
    %v1013 = vunpack.c.l.b16 %v978
    %v1014 = vunpack.c.l.b16 %v979
    %v1015 = vunpack.c.l.b16 %v980
    %v1016 = vunpack.c.l.b16 %v981
    %v1017 = vunpack.c.l.b16 %v982
    %v1018 = vunpack.c.l.b16 %v983
    %v1019 = vunpack.c.l.b16 %v984
    %v1020 = vunpack.c.l.b16 %v985
    %v1021 = vpack.c.b16 %v1006, %v1005
    %v1022 = vpack.c.b16 %v1008, %v1007
    %v1023 = vpack.c.b16 %v1010, %v1009
    %v1024 = vpack.c.b16 %v1012, %v1011
    %v1025 = vpack.c.b16 %v1014, %v1013
    %v1026 = vpack.c.b16 %v1016, %v1015
    %v1027 = vpack.c.b16 %v1018, %v1017
    %v1028 = vpack.c.b16 %v1020, %v1019
    %v1031 = vunpack.c.l.b16 %v987
    %v1032 = vunpack.c.l.b16 %v988
    %v1033 = vpack.c.b16 %v1032, %v1031
    %vm1034 = vcmask 97280
    %v1036 = vsel %vm1034, %v1021, 0
    %v1039 = vsel %vm1034, %v1022, 0
    %v1042 = vsel %vm1034, %v1023, 0
    %v1045 = vsel %vm1034, %v1024, 0
    %v1048 = vsel %vm1034, %v1025, 0
    %v1051 = vsel %vm1034, %v1026, 0
    %v1054 = vsel %vm1034, %v1027, 0
    %v1057 = vsel %vm1034, %v1028, 0
    %vm1059 = vcmask 1045504
    %v1061 = vsel %vm1059, %v1033, 0
    %1063 = vmatprep.subr.bf16.mxu0 0
    %1064 = vmatpush1.bf16.msra.mxu0 %v1061
    %1065 = vmatprep.subr.bf16.mxu0 0
    %1066 = vmatpush1.bf16.msra.mxu0 0
    %1067 = vmatprep.subr.bf16.mxu0 0
    %1068 = vmatpush1.bf16.msra.mxu0 0
    %1069 = vmatprep.subr.bf16.mxu0 0
    %1070 = vmatpush1.bf16.msra.mxu0 0
    %1071 = vmatprep.subr.bf16.mxu0 0
    %1072 = vmatpush1.bf16.msra.mxu0 0
    %1073 = vmatprep.subr.bf16.mxu0 0
    %1074 = vmatpush1.bf16.msra.mxu0 0
    %1075 = vmatprep.subr.bf16.mxu0 0
    %1076 = vmatpush1.bf16.msra.mxu0 0
    %1077 = vmatprep.subr.bf16.mxu0 0
    %1078 = vmatpush1.bf16.msra.mxu0 0
    %1079 = vmatprep.subr.bf16.mxu0 0
    %1080 = vmatpush1.bf16.msra.mxu0 0
    %1081 = vmatprep.subr.bf16.mxu0 0
    %1082 = vmatpush1.bf16.msra.mxu0 0
    %1083 = vmatprep.subr.bf16.mxu0 0
    %1084 = vmatpush1.bf16.msra.mxu0 0
    %1085 = vmatprep.subr.bf16.mxu0 0
    %1086 = vmatpush1.bf16.msra.mxu0 0
    %1087 = vmatprep.subr.bf16.mxu0 0
    %1088 = vmatpush1.bf16.msra.mxu0 0
    %1089 = vmatprep.subr.bf16.mxu0 0
    %1090 = vmatpush1.bf16.msra.mxu0 0
    %1091 = vmatprep.subr.bf16.mxu0 0
    %1092 = vmatpush1.bf16.msra.mxu0 0
    %1093 = vmatprep.subr.bf16.mxu0 0
    %1094 = vmatpush1.bf16.msra.mxu0 0
    %1095 = vmatprep.mubr.bf16.mxu0 0
    %1096 = vmatmul.mubr.bf16.gmra.mrb[0].mxu0 %v1036
    %v1097 = vpop.f32.mrb[0].mxu0
    %v1098 = vadd.f32 0.0, %v1097
    %v1099 = vpop.f32.mrb[0].mxu0
    %v1100 = vpop.f32.mrb[0].mxu0
    %v1101 = vadd.f32 0.0, %v1100
    %v1102 = vpop.f32.mrb[0].mxu0
    %1103 = vmatprep.mubr.bf16.mxu0 0
    %1104 = vmatmul.mubr.bf16.gmra.mrb[0].mxu0 %v1039
    %v1105 = vpop.f32.mrb[0].mxu0
    %v1106 = vadd.f32 0.0, %v1105
    %v1107 = vpop.f32.mrb[0].mxu0
    %v1108 = vpop.f32.mrb[0].mxu0
    %v1109 = vadd.f32 0.0, %v1108
    %v1110 = vpop.f32.mrb[0].mxu0
    %1111 = vmatprep.mubr.bf16.mxu0 0
    %1112 = vmatmul.mubr.bf16.gmra.mrb[0].mxu0 %v1042
    %v1113 = vpop.f32.mrb[0].mxu0
    %v1114 = vadd.f32 0.0, %v1113
    %v1115 = vpop.f32.mrb[0].mxu0
    %v1116 = vpop.f32.mrb[0].mxu0
    %v1117 = vadd.f32 0.0, %v1116
    %v1118 = vpop.f32.mrb[0].mxu0
    %1119 = vmatprep.mubr.bf16.mxu0 0
    %1120 = vmatmul.mubr.bf16.gmra.mrb[0].mxu0 %v1045
    %v1121 = vpop.f32.mrb[0].mxu0
    %v1122 = vadd.f32 0.0, %v1121
    %v1123 = vpop.f32.mrb[0].mxu0
    %v1124 = vpop.f32.mrb[0].mxu0
    %v1125 = vadd.f32 0.0, %v1124
    %v1126 = vpop.f32.mrb[0].mxu0
    %1127 = vmatprep.mubr.bf16.mxu0 0
    %1128 = vmatmul.mubr.bf16.gmra.mrb[0].mxu0 %v1048
    %v1129 = vpop.f32.mrb[0].mxu0
    %v1130 = vadd.f32 0.0, %v1129
    %v1131 = vpop.f32.mrb[0].mxu0
    %v1132 = vpop.f32.mrb[0].mxu0
    %v1133 = vadd.f32 0.0, %v1132
    %v1134 = vpop.f32.mrb[0].mxu0
    %1135 = vmatprep.mubr.bf16.mxu0 0
    %1136 = vmatmul.mubr.bf16.gmra.mrb[0].mxu0 %v1051
    %v1137 = vpop.f32.mrb[0].mxu0
    %v1138 = vadd.f32 0.0, %v1137
    %v1139 = vpop.f32.mrb[0].mxu0
    %v1140 = vpop.f32.mrb[0].mxu0
    %v1141 = vadd.f32 0.0, %v1140
    %v1142 = vpop.f32.mrb[0].mxu0
    %1143 = vmatprep.mubr.bf16.mxu0 0
    %1144 = vmatmul.mubr.bf16.gmra.mrb[0].mxu0 %v1054
    %v1145 = vpop.f32.mrb[0].mxu0
    %v1146 = vadd.f32 0.0, %v1145
    %v1147 = vpop.f32.mrb[0].mxu0
    %v1148 = vpop.f32.mrb[0].mxu0
    %v1149 = vadd.f32 0.0, %v1148
    %v1150 = vpop.f32.mrb[0].mxu0
    %1151 = vmatprep.mubr.bf16.mxu0 0
    %1152 = vmatmul.mubr.bf16.gmra.mrb[0].mxu0 %v1057
    %v1153 = vpop.f32.mrb[0].mxu0
    %v1154 = vadd.f32 0.0, %v1153
    %v1155 = vpop.f32.mrb[0].mxu0
    %v1156 = vpop.f32.mrb[0].mxu0
    %v1157 = vadd.f32 0.0, %v1156
    %v1158 = vpop.f32.mrb[0].mxu0
    %1159 = vdwg.mxu0
    %v1176 = vunpack.c.l.b16 %v616
    %v1177 = vunpack.c.l.b16 %v617
    %v1178 = vunpack.c.l.b16 %v618
    %v1179 = vunpack.c.l.b16 %v619
    %v1180 = vunpack.c.l.b16 %v620
    %v1181 = vunpack.c.l.b16 %v621
    %v1182 = vunpack.c.l.b16 %v622
    %v1183 = vunpack.c.l.b16 %v623
    %v1184 = vunpack.c.l.b16 %v624
    %v1185 = vunpack.c.l.b16 %v625
    %v1186 = vunpack.c.l.b16 %v626
    %v1187 = vunpack.c.l.b16 %v627
    %v1188 = vunpack.c.l.b16 %v628
    %v1189 = vunpack.c.l.b16 %v629
    %v1190 = vunpack.c.l.b16 %v630
    %v1191 = vunpack.c.l.b16 %v631
    %v1192 = vpack.c.b16 %v1177, %v1176
    %v1193 = vpack.c.b16 %v1179, %v1178
    %v1194 = vpack.c.b16 %v1181, %v1180
    %v1195 = vpack.c.b16 %v1183, %v1182
    %v1196 = vpack.c.b16 %v1185, %v1184
    %v1197 = vpack.c.b16 %v1187, %v1186
    %v1198 = vpack.c.b16 %v1189, %v1188
    %v1199 = vpack.c.b16 %v1191, %v1190
    %v1202 = vunpack.c.l.b16 %v632
    %v1203 = vunpack.c.l.b16 %v633
    %v1204 = vpack.c.b16 %v1203, %v1202
    %v1206 = vsel %vm1034, %v1192, 0
    %v1209 = vsel %vm1034, %v1193, 0
    %v1212 = vsel %vm1034, %v1194, 0
    %v1215 = vsel %vm1034, %v1195, 0
    %v1218 = vsel %vm1034, %v1196, 0
    %v1221 = vsel %vm1034, %v1197, 0
    %v1224 = vsel %vm1034, %v1198, 0
    %v1227 = vsel %vm1034, %v1199, 0
    %v1230 = vsel %vm1059, %v1204, 0
    %1232 = vmatprep.subr.bf16.mxu0 0
    %1233 = vmatpush1.bf16.msra.mxu0 %v1230
    %1234 = vmatprep.subr.bf16.mxu0 0
    %1235 = vmatpush1.bf16.msra.mxu0 0
    %1236 = vmatprep.subr.bf16.mxu0 0
    %1237 = vmatpush1.bf16.msra.mxu0 0
    %1238 = vmatprep.subr.bf16.mxu0 0
    %1239 = vmatpush1.bf16.msra.mxu0 0
    %1240 = vmatprep.subr.bf16.mxu0 0
    %1241 = vmatpush1.bf16.msra.mxu0 0
    %1242 = vmatprep.subr.bf16.mxu0 0
    %1243 = vmatpush1.bf16.msra.mxu0 0
    %1244 = vmatprep.subr.bf16.mxu0 0
    %1245 = vmatpush1.bf16.msra.mxu0 0
    %1246 = vmatprep.subr.bf16.mxu0 0
    %1247 = vmatpush1.bf16.msra.mxu0 0
    %1248 = vmatprep.subr.bf16.mxu0 0
    %1249 = vmatpush1.bf16.msra.mxu0 0
    %1250 = vmatprep.subr.bf16.mxu0 0
    %1251 = vmatpush1.bf16.msra.mxu0 0
    %1252 = vmatprep.subr.bf16.mxu0 0
    %1253 = vmatpush1.bf16.msra.mxu0 0
    %1254 = vmatprep.subr.bf16.mxu0 0
    %1255 = vmatpush1.bf16.msra.mxu0 0
    %1256 = vmatprep.subr.bf16.mxu0 0
    %1257 = vmatpush1.bf16.msra.mxu0 0
    %1258 = vmatprep.subr.bf16.mxu0 0
    %1259 = vmatpush1.bf16.msra.mxu0 0
    %1260 = vmatprep.subr.bf16.mxu0 0
    %1261 = vmatpush1.bf16.msra.mxu0 0
    %1262 = vmatprep.subr.bf16.mxu0 0
    %1263 = vmatpush1.bf16.msra.mxu0 0
    %1264 = vmatprep.mubr.bf16.mxu0 0
    %1265 = vmatmul.mubr.bf16.gmra.mrb[0].mxu0 %v1206
    %v1266 = vpop.f32.mrb[0].mxu0
    %v1267 = vadd.f32 %v1098, %v1266
    %v1268 = vpop.f32.mrb[0].mxu0
    %v1269 = vpop.f32.mrb[0].mxu0
    %v1270 = vadd.f32 %v1101, %v1269
    %v1271 = vpop.f32.mrb[0].mxu0
    %1272 = vmatprep.mubr.bf16.mxu0 0
    %1273 = vmatmul.mubr.bf16.gmra.mrb[0].mxu0 %v1209
    %v1274 = vpop.f32.mrb[0].mxu0
    %v1275 = vadd.f32 %v1106, %v1274
    %v1276 = vpop.f32.mrb[0].mxu0
    %v1277 = vpop.f32.mrb[0].mxu0
    %v1278 = vadd.f32 %v1109, %v1277
    %v1279 = vpop.f32.mrb[0].mxu0
    %1280 = vmatprep.mubr.bf16.mxu0 0
    %1281 = vmatmul.mubr.bf16.gmra.mrb[0].mxu0 %v1212
    %v1282 = vpop.f32.mrb[0].mxu0
    %v1283 = vadd.f32 %v1114, %v1282
    %v1284 = vpop.f32.mrb[0].mxu0
    %v1285 = vpop.f32.mrb[0].mxu0
    %v1286 = vadd.f32 %v1117, %v1285
    %v1287 = vpop.f32.mrb[0].mxu0
    %1288 = vmatprep.mubr.bf16.mxu0 0
    %1289 = vmatmul.mubr.bf16.gmra.mrb[0].mxu0 %v1215
    %v1290 = vpop.f32.mrb[0].mxu0
    %v1291 = vadd.f32 %v1122, %v1290
    %v1292 = vpop.f32.mrb[0].mxu0
    %v1293 = vpop.f32.mrb[0].mxu0
    %v1294 = vadd.f32 %v1125, %v1293
    %v1295 = vpop.f32.mrb[0].mxu0
    %1296 = vmatprep.mubr.bf16.mxu0 0
    %1297 = vmatmul.mubr.bf16.gmra.mrb[0].mxu0 %v1218
    %v1298 = vpop.f32.mrb[0].mxu0
    %v1299 = vadd.f32 %v1130, %v1298
    %v1300 = vpop.f32.mrb[0].mxu0
    %v1301 = vpop.f32.mrb[0].mxu0
    %v1302 = vadd.f32 %v1133, %v1301
    %v1303 = vpop.f32.mrb[0].mxu0
    %1304 = vmatprep.mubr.bf16.mxu0 0
    %1305 = vmatmul.mubr.bf16.gmra.mrb[0].mxu0 %v1221
    %v1306 = vpop.f32.mrb[0].mxu0
    %v1307 = vadd.f32 %v1138, %v1306
    %v1308 = vpop.f32.mrb[0].mxu0
    %v1309 = vpop.f32.mrb[0].mxu0
    %v1310 = vadd.f32 %v1141, %v1309
    %v1311 = vpop.f32.mrb[0].mxu0
    %1312 = vmatprep.mubr.bf16.mxu0 0
    %1313 = vmatmul.mubr.bf16.gmra.mrb[0].mxu0 %v1224
    %v1314 = vpop.f32.mrb[0].mxu0
    %v1315 = vadd.f32 %v1146, %v1314
    %v1316 = vpop.f32.mrb[0].mxu0
    %v1317 = vpop.f32.mrb[0].mxu0
    %v1318 = vadd.f32 %v1149, %v1317
    %v1319 = vpop.f32.mrb[0].mxu0
    %1320 = vmatprep.mubr.bf16.mxu0 0
    %1321 = vmatmul.mubr.bf16.gmra.mrb[0].mxu0 %v1227
    %v1322 = vpop.f32.mrb[0].mxu0
    %v1323 = vadd.f32 %v1154, %v1322
    %v1324 = vpop.f32.mrb[0].mxu0
    %v1325 = vpop.f32.mrb[0].mxu0
    %v1326 = vadd.f32 %v1157, %v1325
    %v1327 = vpop.f32.mrb[0].mxu0
    %1328 = vdwg.mxu0
    %s1329 = scalar_lea.vmem [#allocation2], 32
    %v1330 = vld [vmem:[%s1329] sm:$0xff]
    %v1331 = vld [vmem:[%s1329 + $0x10] sm:$0xff]
    %v1332 = vld [vmem:[%s1329 + $0x20] sm:$0xff]
    %v1333 = vld [vmem:[%s1329 + $0x30] sm:$0xff]
    %v1334 = vld [vmem:[%s1329 + $0x40] sm:$0xff]
    %v1335 = vld [vmem:[%s1329 + $0x50] sm:$0xff]
    %v1336 = vld [vmem:[%s1329 + $0x60] sm:$0xff]
    %v1337 = vld [vmem:[%s1329 + $0x70] sm:$0xff]
    %v1338 = vld [vmem:[%s1329 + $0xa0] sm:$0xff]
    %v1339 = vld [vmem:[%s1329 + $0xb0] sm:$0xff]
    %v1340 = vld [vmem:[%s1329 + $0xc0] sm:$0xff]
    %v1341 = vld [vmem:[%s1329 + $0xd0] sm:$0xff]
    %v1342 = vld [vmem:[%s1329 + $0xe0] sm:$0xff]
    %v1343 = vld [vmem:[%s1329 + $0xf0] sm:$0xff]
    %v1344 = vld [vmem:[%s1329 + $0x100] sm:$0xff]
    %v1345 = vld [vmem:[%s1329 + $0x110] sm:$0xff]
    %v1346 = vpack.c.bf16 %v1330, %v1330
    %v1347 = vpack.c.bf16 %v1331, %v1331
    %v1348 = vpack.c.bf16 %v1332, %v1332
    %v1349 = vpack.c.bf16 %v1333, %v1333
    %v1350 = vpack.c.bf16 %v1334, %v1334
    %v1351 = vpack.c.bf16 %v1335, %v1335
    %v1352 = vpack.c.bf16 %v1336, %v1336
    %v1353 = vpack.c.bf16 %v1337, %v1337
    %v1354 = vpack.c.bf16 %v1338, %v1338
    %v1355 = vpack.c.bf16 %v1339, %v1339
    %v1356 = vpack.c.bf16 %v1340, %v1340
    %v1357 = vpack.c.bf16 %v1341, %v1341
    %v1358 = vpack.c.bf16 %v1342, %v1342
    %v1359 = vpack.c.bf16 %v1343, %v1343
    %v1360 = vpack.c.bf16 %v1344, %v1344
    %v1361 = vpack.c.bf16 %v1345, %v1345
    %1362 = vst.msk [vmem:[#allocation4] sm:$0xf] %vm309, %v1346
    %1363 = vst.msk [vmem:[#allocation4 + $0x4] sm:$0xf] %vm309, %v1347
    %1364 = vst.msk [vmem:[#allocation4 + $0x8] sm:$0xf] %vm309, %v1348
    %1365 = vst.msk [vmem:[#allocation4 + $0xc] sm:$0xf] %vm309, %v1349
    %1366 = vst.msk [vmem:[#allocation4 + $0x10] sm:$0xf] %vm309, %v1350
    %1367 = vst.msk [vmem:[#allocation4 + $0x14] sm:$0xf] %vm309, %v1351
    %1368 = vst.msk [vmem:[#allocation4 + $0x18] sm:$0xf] %vm309, %v1352
    %1369 = vst.msk [vmem:[#allocation4 + $0x1c] sm:$0xf] %vm309, %v1353
    %1370 = vst.msk [vmem:[#allocation4 + $0x20] sm:$0xf] %vm309, %v1354
    %1371 = vst.msk [vmem:[#allocation4 + $0x24] sm:$0xf] %vm309, %v1355
    %1372 = vst.msk [vmem:[#allocation4 + $0x28] sm:$0xf] %vm309, %v1356
    %1373 = vst.msk [vmem:[#allocation4 + $0x2c] sm:$0xf] %vm309, %v1357
    %1374 = vst.msk [vmem:[#allocation4 + $0x30] sm:$0xf] %vm309, %v1358
    %1375 = vst.msk [vmem:[#allocation4 + $0x34] sm:$0xf] %vm309, %v1359
    %1376 = vst.msk [vmem:[#allocation4 + $0x38] sm:$0xf] %vm309, %v1360
    %1377 = vst.msk [vmem:[#allocation4 + $0x3c] sm:$0xf] %vm309, %v1361
    %v1378 = vld [vmem:[%s1329 + $0x1] sm:$0xff]
    %v1379 = vld [vmem:[%s1329 + $0x11] sm:$0xff]
    %v1380 = vld [vmem:[%s1329 + $0x21] sm:$0xff]
    %v1381 = vld [vmem:[%s1329 + $0x31] sm:$0xff]
    %v1382 = vld [vmem:[%s1329 + $0x41] sm:$0xff]
    %v1383 = vld [vmem:[%s1329 + $0x51] sm:$0xff]
    %v1384 = vld [vmem:[%s1329 + $0x61] sm:$0xff]
    %v1385 = vld [vmem:[%s1329 + $0x71] sm:$0xff]
    %v1386 = vld [vmem:[%s1329 + $0xa1] sm:$0xff]
    %v1387 = vld [vmem:[%s1329 + $0xb1] sm:$0xff]
    %v1388 = vld [vmem:[%s1329 + $0xc1] sm:$0xff]
    %v1389 = vld [vmem:[%s1329 + $0xd1] sm:$0xff]
    %v1390 = vld [vmem:[%s1329 + $0xe1] sm:$0xff]
    %v1391 = vld [vmem:[%s1329 + $0xf1] sm:$0xff]
    %v1392 = vld [vmem:[%s1329 + $0x101] sm:$0xff]
    %v1393 = vld [vmem:[%s1329 + $0x111] sm:$0xff]
    %v1394 = vpack.c.bf16 %v1378, %v1378
    %v1395 = vpack.c.bf16 %v1379, %v1379
    %v1396 = vpack.c.bf16 %v1380, %v1380
    %v1397 = vpack.c.bf16 %v1381, %v1381
    %v1398 = vpack.c.bf16 %v1382, %v1382
    %v1399 = vpack.c.bf16 %v1383, %v1383
    %v1400 = vpack.c.bf16 %v1384, %v1384
    %v1401 = vpack.c.bf16 %v1385, %v1385
    %v1402 = vpack.c.bf16 %v1386, %v1386
    %v1403 = vpack.c.bf16 %v1387, %v1387
    %v1404 = vpack.c.bf16 %v1388, %v1388
    %v1405 = vpack.c.bf16 %v1389, %v1389
    %v1406 = vpack.c.bf16 %v1390, %v1390
    %v1407 = vpack.c.bf16 %v1391, %v1391
    %v1408 = vpack.c.bf16 %v1392, %v1392
    %v1409 = vpack.c.bf16 %v1393, %v1393
    %v1426 = vunpack.c.l.b16 %v1394
    %v1427 = vunpack.c.l.b16 %v1395
    %v1428 = vunpack.c.l.b16 %v1396
    %v1429 = vunpack.c.l.b16 %v1397
    %v1430 = vunpack.c.l.b16 %v1398
    %v1431 = vunpack.c.l.b16 %v1399
    %v1432 = vunpack.c.l.b16 %v1400
    %v1433 = vunpack.c.l.b16 %v1401
    %v1434 = vunpack.c.l.b16 %v1402
    %v1435 = vunpack.c.l.b16 %v1403
    %v1436 = vunpack.c.l.b16 %v1404
    %v1437 = vunpack.c.l.b16 %v1405
    %v1438 = vunpack.c.l.b16 %v1406
    %v1439 = vunpack.c.l.b16 %v1407
    %v1440 = vunpack.c.l.b16 %v1408
    %v1441 = vunpack.c.l.b16 %v1409
    %v1442 = vpack.c.b16 %v1426, %v1426
    %v1443 = vpack.c.b16 %v1427, %v1427
    %v1444 = vpack.c.b16 %v1428, %v1428
    %v1445 = vpack.c.b16 %v1429, %v1429
    %v1446 = vpack.c.b16 %v1430, %v1430
    %v1447 = vpack.c.b16 %v1431, %v1431
    %v1448 = vpack.c.b16 %v1432, %v1432
    %v1449 = vpack.c.b16 %v1433, %v1433
    %v1450 = vpack.c.b16 %v1434, %v1434
    %v1451 = vpack.c.b16 %v1435, %v1435
    %v1452 = vpack.c.b16 %v1436, %v1436
    %v1453 = vpack.c.b16 %v1437, %v1437
    %v1454 = vpack.c.b16 %v1438, %v1438
    %v1455 = vpack.c.b16 %v1439, %v1439
    %v1456 = vpack.c.b16 %v1440, %v1440
    %v1457 = vpack.c.b16 %v1441, %v1441
    %1458 = vrot.lane.b32.xlu0 %v1442, 4
    %v1459 = vpop.permute.xlu0 %1458
    %1460 = vrot.lane.b32.xlu0 %v1443, 4
    %v1461 = vpop.permute.xlu0 %1460
    %1462 = vrot.lane.b32.xlu0 %v1444, 4
    %v1463 = vpop.permute.xlu0 %1462
    %1464 = vrot.lane.b32.xlu0 %v1445, 4
    %v1465 = vpop.permute.xlu0 %1464
    %1466 = vrot.lane.b32.xlu0 %v1446, 4
    %v1467 = vpop.permute.xlu0 %1466
    %1468 = vrot.lane.b32.xlu0 %v1447, 4
    %v1469 = vpop.permute.xlu0 %1468
    %1470 = vrot.lane.b32.xlu0 %v1448, 4
    %v1471 = vpop.permute.xlu0 %1470
    %1472 = vrot.lane.b32.xlu0 %v1449, 4
    %v1473 = vpop.permute.xlu0 %1472
    %1474 = vrot.lane.b32.xlu0 %v1450, 4
    %v1475 = vpop.permute.xlu0 %1474
    %1476 = vrot.lane.b32.xlu0 %v1451, 4
    %v1477 = vpop.permute.xlu0 %1476
    %1478 = vrot.lane.b32.xlu0 %v1452, 4
    %v1479 = vpop.permute.xlu0 %1478
    %1480 = vrot.lane.b32.xlu0 %v1453, 4
    %v1481 = vpop.permute.xlu0 %1480
    %1482 = vrot.lane.b32.xlu0 %v1454, 4
    %v1483 = vpop.permute.xlu0 %1482
    %1484 = vrot.lane.b32.xlu0 %v1455, 4
    %v1485 = vpop.permute.xlu0 %1484
    %1486 = vrot.lane.b32.xlu0 %v1456, 4
    %v1487 = vpop.permute.xlu0 %1486
    %1488 = vrot.lane.b32.xlu0 %v1457, 4
    %v1489 = vpop.permute.xlu0 %1488
    %1506 = vst.msk [vmem:[#allocation4] sm:$0xf] %vm454, %v1459
    %1507 = vst.msk [vmem:[#allocation4 + $0x4] sm:$0xf] %vm454, %v1461
    %1508 = vst.msk [vmem:[#allocation4 + $0x8] sm:$0xf] %vm454, %v1463
    %1509 = vst.msk [vmem:[#allocation4 + $0xc] sm:$0xf] %vm454, %v1465
    %1510 = vst.msk [vmem:[#allocation4 + $0x10] sm:$0xf] %vm454, %v1467
    %1511 = vst.msk [vmem:[#allocation4 + $0x14] sm:$0xf] %vm454, %v1469
    %1512 = vst.msk [vmem:[#allocation4 + $0x18] sm:$0xf] %vm454, %v1471
    %1513 = vst.msk [vmem:[#allocation4 + $0x1c] sm:$0xf] %vm454, %v1473
    %1514 = vst.msk [vmem:[#allocation4 + $0x20] sm:$0xf] %vm454, %v1475
    %1515 = vst.msk [vmem:[#allocation4 + $0x24] sm:$0xf] %vm454, %v1477
    %1516 = vst.msk [vmem:[#allocation4 + $0x28] sm:$0xf] %vm454, %v1479
    %1517 = vst.msk [vmem:[#allocation4 + $0x2c] sm:$0xf] %vm454, %v1481
    %1518 = vst.msk [vmem:[#allocation4 + $0x30] sm:$0xf] %vm454, %v1483
    %1519 = vst.msk [vmem:[#allocation4 + $0x34] sm:$0xf] %vm454, %v1485
    %1520 = vst.msk [vmem:[#allocation4 + $0x38] sm:$0xf] %vm454, %v1487
    %1521 = vst.msk [vmem:[#allocation4 + $0x3c] sm:$0xf] %vm454, %v1489
    %v1522 = vld [vmem:[%s1329 + $0x2] sm:$0xff]
    %v1523 = vld [vmem:[%s1329 + $0x12] sm:$0xff]
    %v1524 = vld [vmem:[%s1329 + $0x22] sm:$0xff]
    %v1525 = vld [vmem:[%s1329 + $0x32] sm:$0xff]
    %v1526 = vld [vmem:[%s1329 + $0x42] sm:$0xff]
    %v1527 = vld [vmem:[%s1329 + $0x52] sm:$0xff]
    %v1528 = vld [vmem:[%s1329 + $0x62] sm:$0xff]
    %v1529 = vld [vmem:[%s1329 + $0x72] sm:$0xff]
    %v1530 = vld [vmem:[%s1329 + $0xa2] sm:$0xff]
    %v1531 = vld [vmem:[%s1329 + $0xb2] sm:$0xff]
    %v1532 = vld [vmem:[%s1329 + $0xc2] sm:$0xff]
    %v1533 = vld [vmem:[%s1329 + $0xd2] sm:$0xff]
    %v1534 = vld [vmem:[%s1329 + $0xe2] sm:$0xff]
    %v1535 = vld [vmem:[%s1329 + $0xf2] sm:$0xff]
    %v1536 = vld [vmem:[%s1329 + $0x102] sm:$0xff]
    %v1537 = vld [vmem:[%s1329 + $0x112] sm:$0xff]
    %v1538 = vpack.c.bf16 %v1522, %v1522
    %v1539 = vpack.c.bf16 %v1523, %v1523
    %v1540 = vpack.c.bf16 %v1524, %v1524
    %v1541 = vpack.c.bf16 %v1525, %v1525
    %v1542 = vpack.c.bf16 %v1526, %v1526
    %v1543 = vpack.c.bf16 %v1527, %v1527
    %v1544 = vpack.c.bf16 %v1528, %v1528
    %v1545 = vpack.c.bf16 %v1529, %v1529
    %v1546 = vpack.c.bf16 %v1530, %v1530
    %v1547 = vpack.c.bf16 %v1531, %v1531
    %v1548 = vpack.c.bf16 %v1532, %v1532
    %v1549 = vpack.c.bf16 %v1533, %v1533
    %v1550 = vpack.c.bf16 %v1534, %v1534
    %v1551 = vpack.c.bf16 %v1535, %v1535
    %v1552 = vpack.c.bf16 %v1536, %v1536
    %v1553 = vpack.c.bf16 %v1537, %v1537
    %v1570 = vunpack.c.l.b16 %v1538
    %v1571 = vunpack.c.l.b16 %v1539
    %v1572 = vunpack.c.l.b16 %v1540
    %v1573 = vunpack.c.l.b16 %v1541
    %v1574 = vunpack.c.l.b16 %v1542
    %v1575 = vunpack.c.l.b16 %v1543
    %v1576 = vunpack.c.l.b16 %v1544
    %v1577 = vunpack.c.l.b16 %v1545
    %v1578 = vunpack.c.l.b16 %v1546
    %v1579 = vunpack.c.l.b16 %v1547
    %v1580 = vunpack.c.l.b16 %v1548
    %v1581 = vunpack.c.l.b16 %v1549
    %v1582 = vunpack.c.l.b16 %v1550
    %v1583 = vunpack.c.l.b16 %v1551
    %v1584 = vunpack.c.l.b16 %v1552
    %v1585 = vunpack.c.l.b16 %v1553
    %v1586 = vpack.c.b16 %v1570, %v1570
    %v1587 = vpack.c.b16 %v1571, %v1571
    %v1588 = vpack.c.b16 %v1572, %v1572
    %v1589 = vpack.c.b16 %v1573, %v1573
    %v1590 = vpack.c.b16 %v1574, %v1574
    %v1591 = vpack.c.b16 %v1575, %v1575
    %v1592 = vpack.c.b16 %v1576, %v1576
    %v1593 = vpack.c.b16 %v1577, %v1577
    %v1594 = vpack.c.b16 %v1578, %v1578
    %v1595 = vpack.c.b16 %v1579, %v1579
    %v1596 = vpack.c.b16 %v1580, %v1580
    %v1597 = vpack.c.b16 %v1581, %v1581
    %v1598 = vpack.c.b16 %v1582, %v1582
    %v1599 = vpack.c.b16 %v1583, %v1583
    %v1600 = vpack.c.b16 %v1584, %v1584
    %v1601 = vpack.c.b16 %v1585, %v1585
    %1602 = vrot.lane.b32.xlu0 %v1586, 8
    %v1603 = vpop.permute.xlu0 %1602
    %1604 = vrot.lane.b32.xlu0 %v1587, 8
    %v1605 = vpop.permute.xlu0 %1604
    %1606 = vrot.lane.b32.xlu0 %v1588, 8
    %v1607 = vpop.permute.xlu0 %1606
    %1608 = vrot.lane.b32.xlu0 %v1589, 8
    %v1609 = vpop.permute.xlu0 %1608
    %1610 = vrot.lane.b32.xlu0 %v1590, 8
    %v1611 = vpop.permute.xlu0 %1610
    %1612 = vrot.lane.b32.xlu0 %v1591, 8
    %v1613 = vpop.permute.xlu0 %1612
    %1614 = vrot.lane.b32.xlu0 %v1592, 8
    %v1615 = vpop.permute.xlu0 %1614
    %1616 = vrot.lane.b32.xlu0 %v1593, 8
    %v1617 = vpop.permute.xlu0 %1616
    %1618 = vrot.lane.b32.xlu0 %v1594, 8
    %v1619 = vpop.permute.xlu0 %1618
    %1620 = vrot.lane.b32.xlu0 %v1595, 8
    %v1621 = vpop.permute.xlu0 %1620
    %1622 = vrot.lane.b32.xlu0 %v1596, 8
    %v1623 = vpop.permute.xlu0 %1622
    %1624 = vrot.lane.b32.xlu0 %v1597, 8
    %v1625 = vpop.permute.xlu0 %1624
    %1626 = vrot.lane.b32.xlu0 %v1598, 8
    %v1627 = vpop.permute.xlu0 %1626
    %1628 = vrot.lane.b32.xlu0 %v1599, 8
    %v1629 = vpop.permute.xlu0 %1628
    %1630 = vrot.lane.b32.xlu0 %v1600, 8
    %v1631 = vpop.permute.xlu0 %1630
    %1632 = vrot.lane.b32.xlu0 %v1601, 8
    %v1633 = vpop.permute.xlu0 %1632
    %1650 = vst.msk [vmem:[#allocation4] sm:$0xf] %vm599, %v1603
    %1651 = vst.msk [vmem:[#allocation4 + $0x4] sm:$0xf] %vm599, %v1605
    %1652 = vst.msk [vmem:[#allocation4 + $0x8] sm:$0xf] %vm599, %v1607
    %1653 = vst.msk [vmem:[#allocation4 + $0xc] sm:$0xf] %vm599, %v1609
    %1654 = vst.msk [vmem:[#allocation4 + $0x10] sm:$0xf] %vm599, %v1611
    %1655 = vst.msk [vmem:[#allocation4 + $0x14] sm:$0xf] %vm599, %v1613
    %1656 = vst.msk [vmem:[#allocation4 + $0x18] sm:$0xf] %vm599, %v1615
    %1657 = vst.msk [vmem:[#allocation4 + $0x1c] sm:$0xf] %vm599, %v1617
    %1658 = vst.msk [vmem:[#allocation4 + $0x20] sm:$0xf] %vm599, %v1619
    %1659 = vst.msk [vmem:[#allocation4 + $0x24] sm:$0xf] %vm599, %v1621
    %1660 = vst.msk [vmem:[#allocation4 + $0x28] sm:$0xf] %vm599, %v1623
    %1661 = vst.msk [vmem:[#allocation4 + $0x2c] sm:$0xf] %vm599, %v1625
    %1662 = vst.msk [vmem:[#allocation4 + $0x30] sm:$0xf] %vm599, %v1627
    %1663 = vst.msk [vmem:[#allocation4 + $0x34] sm:$0xf] %vm599, %v1629
    %1664 = vst.msk [vmem:[#allocation4 + $0x38] sm:$0xf] %vm599, %v1631
    %1665 = vst.msk [vmem:[#allocation4 + $0x3c] sm:$0xf] %vm599, %v1633
    %v1666 = vld [vmem:[#allocation4] sm:$0xf]
    %v1667 = vld [vmem:[#allocation4 + $0x4] sm:$0xf]
    %v1668 = vld [vmem:[#allocation4 + $0x8] sm:$0xf]
    %v1669 = vld [vmem:[#allocation4 + $0xc] sm:$0xf]
    %v1670 = vld [vmem:[#allocation4 + $0x10] sm:$0xf]
    %v1671 = vld [vmem:[#allocation4 + $0x14] sm:$0xf]
    %v1672 = vld [vmem:[#allocation4 + $0x18] sm:$0xf]
    %v1673 = vld [vmem:[#allocation4 + $0x1c] sm:$0xf]
    %v1674 = vld [vmem:[#allocation4 + $0x20] sm:$0xf]
    %v1675 = vld [vmem:[#allocation4 + $0x24] sm:$0xf]
    %v1676 = vld [vmem:[#allocation4 + $0x28] sm:$0xf]
    %v1677 = vld [vmem:[#allocation4 + $0x2c] sm:$0xf]
    %v1678 = vld [vmem:[#allocation4 + $0x30] sm:$0xf]
    %v1679 = vld [vmem:[#allocation4 + $0x34] sm:$0xf]
    %v1680 = vld [vmem:[#allocation4 + $0x38] sm:$0xf]
    %v1681 = vld [vmem:[#allocation4 + $0x3c] sm:$0xf]
    %s1682 = scalar_lea.vmem %s1, 16
    %v1683 = vld [vmem:[%s1682] sm:$0xf]
    %v1684 = vld [vmem:[%s1682 + $0x4] sm:$0x3]
    %v1701 = vunpack.c.l.b16 %v1666
    %v1702 = vunpack.c.l.b16 %v1667
    %v1703 = vunpack.c.l.b16 %v1668
    %v1704 = vunpack.c.l.b16 %v1669
    %v1705 = vunpack.c.l.b16 %v1670
    %v1706 = vunpack.c.l.b16 %v1671
    %v1707 = vunpack.c.l.b16 %v1672
    %v1708 = vunpack.c.l.b16 %v1673
    %v1709 = vunpack.c.l.b16 %v1674
    %v1710 = vunpack.c.l.b16 %v1675
    %v1711 = vunpack.c.l.b16 %v1676
    %v1712 = vunpack.c.l.b16 %v1677
    %v1713 = vunpack.c.l.b16 %v1678
    %v1714 = vunpack.c.l.b16 %v1679
    %v1715 = vunpack.c.l.b16 %v1680
    %v1716 = vunpack.c.l.b16 %v1681
    %v1717 = vpack.c.b16 %v1702, %v1701
    %v1718 = vpack.c.b16 %v1704, %v1703
    %v1719 = vpack.c.b16 %v1706, %v1705
    %v1720 = vpack.c.b16 %v1708, %v1707
    %v1721 = vpack.c.b16 %v1710, %v1709
    %v1722 = vpack.c.b16 %v1712, %v1711
    %v1723 = vpack.c.b16 %v1714, %v1713
    %v1724 = vpack.c.b16 %v1716, %v1715
    %v1727 = vunpack.c.l.b16 %v1683
    %v1728 = vunpack.c.l.b16 %v1684
    %v1729 = vpack.c.b16 %v1728, %v1727
    %v1731 = vsel %vm1034, %v1717, 0
    %v1734 = vsel %vm1034, %v1718, 0
    %v1737 = vsel %vm1034, %v1719, 0
    %v1740 = vsel %vm1034, %v1720, 0
    %v1743 = vsel %vm1034, %v1721, 0
    %v1746 = vsel %vm1034, %v1722, 0
    %v1749 = vsel %vm1034, %v1723, 0
    %v1752 = vsel %vm1034, %v1724, 0
    %v1755 = vsel %vm1059, %v1729, 0
    %1757 = vmatprep.subr.bf16.mxu0 0
    %1758 = vmatpush1.bf16.msra.mxu0 %v1755
    %1759 = vmatprep.subr.bf16.mxu0 0
    %1760 = vmatpush1.bf16.msra.mxu0 0
    %1761 = vmatprep.subr.bf16.mxu0 0
    %1762 = vmatpush1.bf16.msra.mxu0 0
    %1763 = vmatprep.subr.bf16.mxu0 0
    %1764 = vmatpush1.bf16.msra.mxu0 0
    %1765 = vmatprep.subr.bf16.mxu0 0
    %1766 = vmatpush1.bf16.msra.mxu0 0
    %1767 = vmatprep.subr.bf16.mxu0 0
    %1768 = vmatpush1.bf16.msra.mxu0 0
    %1769 = vmatprep.subr.bf16.mxu0 0
    %1770 = vmatpush1.bf16.msra.mxu0 0
    %1771 = vmatprep.subr.bf16.mxu0 0
    %1772 = vmatpush1.bf16.msra.mxu0 0
    %1773 = vmatprep.subr.bf16.mxu0 0
    %1774 = vmatpush1.bf16.msra.mxu0 0
    %1775 = vmatprep.subr.bf16.mxu0 0
    %1776 = vmatpush1.bf16.msra.mxu0 0
    %1777 = vmatprep.subr.bf16.mxu0 0
    %1778 = vmatpush1.bf16.msra.mxu0 0
    %1779 = vmatprep.subr.bf16.mxu0 0
    %1780 = vmatpush1.bf16.msra.mxu0 0
    %1781 = vmatprep.subr.bf16.mxu0 0
    %1782 = vmatpush1.bf16.msra.mxu0 0
    %1783 = vmatprep.subr.bf16.mxu0 0
    %1784 = vmatpush1.bf16.msra.mxu0 0
    %1785 = vmatprep.subr.bf16.mxu0 0
    %1786 = vmatpush1.bf16.msra.mxu0 0
    %1787 = vmatprep.subr.bf16.mxu0 0
    %1788 = vmatpush1.bf16.msra.mxu0 0
    %1789 = vmatprep.mubr.bf16.mxu0 0
    %1790 = vmatmul.mubr.bf16.gmra.mrb[0].mxu0 %v1731
    %v1791 = vpop.f32.mrb[0].mxu0
    %v1792 = vadd.f32 0.0, %v1791
    %v1793 = vpop.f32.mrb[0].mxu0
    %v1794 = vpop.f32.mrb[0].mxu0
    %v1795 = vadd.f32 0.0, %v1794
    %v1796 = vpop.f32.mrb[0].mxu0
    %1797 = vmatprep.mubr.bf16.mxu0 0
    %1798 = vmatmul.mubr.bf16.gmra.mrb[0].mxu0 %v1734
    %v1799 = vpop.f32.mrb[0].mxu0
    %v1800 = vadd.f32 0.0, %v1799
    %v1801 = vpop.f32.mrb[0].mxu0
    %v1802 = vpop.f32.mrb[0].mxu0
    %v1803 = vadd.f32 0.0, %v1802
    %v1804 = vpop.f32.mrb[0].mxu0
    %1805 = vmatprep.mubr.bf16.mxu0 0
    %1806 = vmatmul.mubr.bf16.gmra.mrb[0].mxu0 %v1737
    %v1807 = vpop.f32.mrb[0].mxu0
    %v1808 = vadd.f32 0.0, %v1807
    %v1809 = vpop.f32.mrb[0].mxu0
    %v1810 = vpop.f32.mrb[0].mxu0
    %v1811 = vadd.f32 0.0, %v1810
    %v1812 = vpop.f32.mrb[0].mxu0
    %1813 = vmatprep.mubr.bf16.mxu0 0
    %1814 = vmatmul.mubr.bf16.gmra.mrb[0].mxu0 %v1740
    %v1815 = vpop.f32.mrb[0].mxu0
    %v1816 = vadd.f32 0.0, %v1815
    %v1817 = vpop.f32.mrb[0].mxu0
    %v1818 = vpop.f32.mrb[0].mxu0
    %v1819 = vadd.f32 0.0, %v1818
    %v1820 = vpop.f32.mrb[0].mxu0
    %1821 = vmatprep.mubr.bf16.mxu0 0
    %1822 = vmatmul.mubr.bf16.gmra.mrb[0].mxu0 %v1743
    %v1823 = vpop.f32.mrb[0].mxu0
    %v1824 = vadd.f32 0.0, %v1823
    %v1825 = vpop.f32.mrb[0].mxu0
    %v1826 = vpop.f32.mrb[0].mxu0
    %v1827 = vadd.f32 0.0, %v1826
    %v1828 = vpop.f32.mrb[0].mxu0
    %1829 = vmatprep.mubr.bf16.mxu0 0
    %1830 = vmatmul.mubr.bf16.gmra.mrb[0].mxu0 %v1746
    %v1831 = vpop.f32.mrb[0].mxu0
    %v1832 = vadd.f32 0.0, %v1831
    %v1833 = vpop.f32.mrb[0].mxu0
    %v1834 = vpop.f32.mrb[0].mxu0
    %v1835 = vadd.f32 0.0, %v1834
    %v1836 = vpop.f32.mrb[0].mxu0
    %1837 = vmatprep.mubr.bf16.mxu0 0
    %1838 = vmatmul.mubr.bf16.gmra.mrb[0].mxu0 %v1749
    %v1839 = vpop.f32.mrb[0].mxu0
    %v1840 = vadd.f32 0.0, %v1839
    %v1841 = vpop.f32.mrb[0].mxu0
    %v1842 = vpop.f32.mrb[0].mxu0
    %v1843 = vadd.f32 0.0, %v1842
    %v1844 = vpop.f32.mrb[0].mxu0
    %1845 = vmatprep.mubr.bf16.mxu0 0
    %1846 = vmatmul.mubr.bf16.gmra.mrb[0].mxu0 %v1752
    %v1847 = vpop.f32.mrb[0].mxu0
    %v1848 = vadd.f32 0.0, %v1847
    %v1849 = vpop.f32.mrb[0].mxu0
    %v1850 = vpop.f32.mrb[0].mxu0
    %v1851 = vadd.f32 0.0, %v1850
    %v1852 = vpop.f32.mrb[0].mxu0
    %1853 = vdwg.mxu0
    %v1854 = vadd.f32 %v1267, %v1792
    %v1855 = vadd.f32 %v1270, %v1795
    %v1856 = vadd.f32 %v1275, %v1800
    %v1857 = vadd.f32 %v1278, %v1803
    %v1858 = vadd.f32 %v1283, %v1808
    %v1859 = vadd.f32 %v1286, %v1811
    %v1860 = vadd.f32 %v1291, %v1816
    %v1861 = vadd.f32 %v1294, %v1819
    %v1862 = vadd.f32 %v1299, %v1824
    %v1863 = vadd.f32 %v1302, %v1827
    %v1864 = vadd.f32 %v1307, %v1832
    %v1865 = vadd.f32 %v1310, %v1835
    %v1866 = vadd.f32 %v1315, %v1840
    %v1867 = vadd.f32 %v1318, %v1843
    %v1868 = vadd.f32 %v1323, %v1848
    %v1869 = vadd.f32 %v1326, %v1851
    %v1870 = vsel %vm193, %v1854, 0.0
    %v1871 = vsel %vm193, %v1855, 0.0
    %v1872 = vadd.f32 %v1870, %v1871
    %v1873 = vsel %vm193, %v1856, 0.0
    %v1874 = vadd.f32 %v1872, %v1873
    %v1875 = vsel %vm193, %v1857, 0.0
    %v1876 = vadd.f32 %v1874, %v1875
    %v1877 = vsel %vm193, %v1858, 0.0
    %v1878 = vadd.f32 %v1876, %v1877
    %v1879 = vsel %vm193, %v1859, 0.0
    %v1880 = vadd.f32 %v1878, %v1879
    %v1881 = vsel %vm193, %v1860, 0.0
    %v1882 = vadd.f32 %v1880, %v1881
    %v1883 = vsel %vm193, %v1861, 0.0
    %v1884 = vadd.f32 %v1882, %v1883
    %v1885 = vsel %vm193, %v1862, 0.0
    %v1886 = vadd.f32 %v1884, %v1885
    %v1887 = vsel %vm193, %v1863, 0.0
    %v1888 = vadd.f32 %v1886, %v1887
    %v1889 = vsel %vm193, %v1864, 0.0
    %v1890 = vadd.f32 %v1888, %v1889
    %v1891 = vsel %vm193, %v1865, 0.0
    %v1892 = vadd.f32 %v1890, %v1891
    %v1893 = vsel %vm193, %v1866, 0.0
    %v1894 = vadd.f32 %v1892, %v1893
    %v1895 = vsel %vm193, %v1867, 0.0
    %v1896 = vadd.f32 %v1894, %v1895
    %v1897 = vsel %vm193, %v1868, 0.0
    %v1898 = vadd.f32 %v1896, %v1897
    %v1899 = vsel %vm193, %v1869, 0.0
    %v1900 = vadd.f32 %v1898, %v1899
    %v1901 = vrot.slane %v1900, 4
    %v1902 = vadd.f32 %v1900, %v1901
    %v1903 = vrot.slane %v1902, 2
    %v1904 = vadd.f32 %v1902, %v1903
    %v1905 = vrot.slane %v1904, 1
    %v1906 = vadd.f32 %v1904, %v1905
    %v1907 = vrcp.pop 128.0
    %v1908 = vmul.f32 %v1906, %v1907
    %v1909 = vsub.f32 %v1854, %v1908
    %v1910 = vsub.f32 %v1855, %v1908
    %v1911 = vsub.f32 %v1856, %v1908
    %v1912 = vsub.f32 %v1857, %v1908
    %v1913 = vsub.f32 %v1858, %v1908
    %v1914 = vsub.f32 %v1859, %v1908
    %v1915 = vsub.f32 %v1860, %v1908
    %v1916 = vsub.f32 %v1861, %v1908
    %v1917 = vsub.f32 %v1862, %v1908
    %v1918 = vsub.f32 %v1863, %v1908
    %v1919 = vsub.f32 %v1864, %v1908
    %v1920 = vsub.f32 %v1865, %v1908
    %v1921 = vsub.f32 %v1866, %v1908
    %v1922 = vsub.f32 %v1867, %v1908
    %v1923 = vsub.f32 %v1868, %v1908
    %v1924 = vsub.f32 %v1869, %v1908
    %v1925 = vmul.f32 %v1909, %v1909
    %v1926 = vmul.f32 %v1910, %v1910
    %v1927 = vmul.f32 %v1911, %v1911
    %v1928 = vmul.f32 %v1912, %v1912
    %v1929 = vmul.f32 %v1913, %v1913
    %v1930 = vmul.f32 %v1914, %v1914
    %v1931 = vmul.f32 %v1915, %v1915
    %v1932 = vmul.f32 %v1916, %v1916
    %v1933 = vmul.f32 %v1917, %v1917
    %v1934 = vmul.f32 %v1918, %v1918
    %v1935 = vmul.f32 %v1919, %v1919
    %v1936 = vmul.f32 %v1920, %v1920
    %v1937 = vmul.f32 %v1921, %v1921
    %v1938 = vmul.f32 %v1922, %v1922
    %v1939 = vmul.f32 %v1923, %v1923
    %v1940 = vmul.f32 %v1924, %v1924
    %v1941 = vsel %vm193, %v1925, 0.0
    %v1942 = vsel %vm193, %v1926, 0.0
    %v1943 = vadd.f32 %v1941, %v1942
    %v1944 = vsel %vm193, %v1927, 0.0
    %v1945 = vadd.f32 %v1943, %v1944
    %v1946 = vsel %vm193, %v1928, 0.0
    %v1947 = vadd.f32 %v1945, %v1946
    %v1948 = vsel %vm193, %v1929, 0.0
    %v1949 = vadd.f32 %v1947, %v1948
    %v1950 = vsel %vm193, %v1930, 0.0
    %v1951 = vadd.f32 %v1949, %v1950
    %v1952 = vsel %vm193, %v1931, 0.0
    %v1953 = vadd.f32 %v1951, %v1952
    %v1954 = vsel %vm193, %v1932, 0.0
    %v1955 = vadd.f32 %v1953, %v1954
    %v1956 = vsel %vm193, %v1933, 0.0
    %v1957 = vadd.f32 %v1955, %v1956
    %v1958 = vsel %vm193, %v1934, 0.0
    %v1959 = vadd.f32 %v1957, %v1958
    %v1960 = vsel %vm193, %v1935, 0.0
    %v1961 = vadd.f32 %v1959, %v1960
    %v1962 = vsel %vm193, %v1936, 0.0
    %v1963 = vadd.f32 %v1961, %v1962
    %v1964 = vsel %vm193, %v1937, 0.0
    %v1965 = vadd.f32 %v1963, %v1964
    %v1966 = vsel %vm193, %v1938, 0.0
    %v1967 = vadd.f32 %v1965, %v1966
    %v1968 = vsel %vm193, %v1939, 0.0
    %v1969 = vadd.f32 %v1967, %v1968
    %v1970 = vsel %vm193, %v1940, 0.0
    %v1971 = vadd.f32 %v1969, %v1970
    %v1972 = vrot.slane %v1971, 4
    %v1973 = vadd.f32 %v1971, %v1972
    %v1974 = vrot.slane %v1973, 2
    %v1975 = vadd.f32 %v1973, %v1974
    %v1976 = vrot.slane %v1975, 1
    %v1977 = vadd.f32 %v1975, %v1976
    %v1978 = vmul.f32 %v1977, %v1907
    %v1979 = vadd.f32 %v1978, 1e-05
    %v1980 = vrsqrt.pop %v1979
    %v1981 = vmul.f32 %v1909, %v1980
    %v1982 = vmul.f32 %v1910, %v1980
    %v1983 = vmul.f32 %v1911, %v1980
    %v1984 = vmul.f32 %v1912, %v1980
    %v1985 = vmul.f32 %v1913, %v1980
    %v1986 = vmul.f32 %v1914, %v1980
    %v1987 = vmul.f32 %v1915, %v1980
    %v1988 = vmul.f32 %v1916, %v1980
    %v1989 = vmul.f32 %v1917, %v1980
    %v1990 = vmul.f32 %v1918, %v1980
    %v1991 = vmul.f32 %v1919, %v1980
    %v1992 = vmul.f32 %v1920, %v1980
    %v1993 = vmul.f32 %v1921, %v1980
    %v1994 = vmul.f32 %v1922, %v1980
    %v1995 = vmul.f32 %v1923, %v1980
    %v1996 = vmul.f32 %v1924, %v1980
    %v1997 = vld [vmem:[%s2] sm:$0x1]
    %v1999 = vlaneseq
    %v2000 = vshrl.u32 %v1999, 7
    %v2001 = vsub.s32 0, %v2000
    %v2002 = vrot.slane %v1997, %v2001
    %v2004 = vmul.f32 %v1981, %v2002
    %v2005 = vmul.f32 %v1982, %v2002
    %v2006 = vmul.f32 %v1983, %v2002
    %v2007 = vmul.f32 %v1984, %v2002
    %v2008 = vmul.f32 %v1985, %v2002
    %v2009 = vmul.f32 %v1986, %v2002
    %v2010 = vmul.f32 %v1987, %v2002
    %v2011 = vmul.f32 %v1988, %v2002
    %v2012 = vmul.f32 %v1989, %v2002
    %v2013 = vmul.f32 %v1990, %v2002
    %v2014 = vmul.f32 %v1991, %v2002
    %v2015 = vmul.f32 %v1992, %v2002
    %v2016 = vmul.f32 %v1993, %v2002
    %v2017 = vmul.f32 %v1994, %v2002
    %v2018 = vmul.f32 %v1995, %v2002
    %v2019 = vmul.f32 %v1996, %v2002
    %v2020 = vld [vmem:[%s3] sm:$0x1]
    %v2022 = vlaneseq
    %v2023 = vshrl.u32 %v2022, 7
    %v2024 = vsub.s32 0, %v2023
    %v2025 = vrot.slane %v2020, %v2024
    %v2027 = vadd.f32 %v2004, %v2025
    %v2028 = vadd.f32 %v2005, %v2025
    %v2029 = vadd.f32 %v2006, %v2025
    %v2030 = vadd.f32 %v2007, %v2025
    %v2031 = vadd.f32 %v2008, %v2025
    %v2032 = vadd.f32 %v2009, %v2025
    %v2033 = vadd.f32 %v2010, %v2025
    %v2034 = vadd.f32 %v2011, %v2025
    %v2035 = vadd.f32 %v2012, %v2025
    %v2036 = vadd.f32 %v2013, %v2025
    %v2037 = vadd.f32 %v2014, %v2025
    %v2038 = vadd.f32 %v2015, %v2025
    %v2039 = vadd.f32 %v2016, %v2025
    %v2040 = vadd.f32 %v2017, %v2025
    %v2041 = vadd.f32 %v2018, %v2025
    %v2042 = vadd.f32 %v2019, %v2025
    %v2043 = vmax.f32 %v2027, 0.0
    %v2044 = vmax.f32 %v2028, 0.0
    %v2045 = vmax.f32 %v2029, 0.0
    %v2046 = vmax.f32 %v2030, 0.0
    %v2047 = vmax.f32 %v2031, 0.0
    %v2048 = vmax.f32 %v2032, 0.0
    %v2049 = vmax.f32 %v2033, 0.0
    %v2050 = vmax.f32 %v2034, 0.0
    %v2051 = vmax.f32 %v2035, 0.0
    %v2052 = vmax.f32 %v2036, 0.0
    %v2053 = vmax.f32 %v2037, 0.0
    %v2054 = vmax.f32 %v2038, 0.0
    %v2055 = vmax.f32 %v2039, 0.0
    %v2056 = vmax.f32 %v2040, 0.0
    %v2057 = vmax.f32 %v2041, 0.0
    %v2058 = vmax.f32 %v2042, 0.0
    %s2059 = scalar_lea.vmem [#allocation3], 16
    %2060 = vst.msk [vmem:[%s2059 + $0x1] sm:$0xff] %vm193, %v2043
    %2061 = vst.msk [vmem:[%s2059 + $0x11] sm:$0xff] %vm193, %v2044
    %2062 = vst.msk [vmem:[%s2059 + $0x21] sm:$0xff] %vm193, %v2045
    %2063 = vst.msk [vmem:[%s2059 + $0x31] sm:$0xff] %vm193, %v2046
    %2064 = vst.msk [vmem:[%s2059 + $0x41] sm:$0xff] %vm193, %v2047
    %2065 = vst.msk [vmem:[%s2059 + $0x51] sm:$0xff] %vm193, %v2048
    %2066 = vst.msk [vmem:[%s2059 + $0x61] sm:$0xff] %vm193, %v2049
    %2067 = vst.msk [vmem:[%s2059 + $0x71] sm:$0xff] %vm193, %v2050
    %2068 = vst.msk [vmem:[%s2059 + $0xa1] sm:$0xff] %vm193, %v2051
    %2069 = vst.msk [vmem:[%s2059 + $0xb1] sm:$0xff] %vm193, %v2052
    %2070 = vst.msk [vmem:[%s2059 + $0xc1] sm:$0xff] %vm193, %v2053
    %2071 = vst.msk [vmem:[%s2059 + $0xd1] sm:$0xff] %vm193, %v2054
    %2072 = vst.msk [vmem:[%s2059 + $0xe1] sm:$0xff] %vm193, %v2055
    %2073 = vst.msk [vmem:[%s2059 + $0xf1] sm:$0xff] %vm193, %v2056
    %2074 = vst.msk [vmem:[%s2059 + $0x101] sm:$0xff] %vm193, %v2057
    %2075 = vst.msk [vmem:[%s2059 + $0x111] sm:$0xff] %vm193, %v2058
  $region31: #{downsample_forward.1} parent=0
    #allocation5 [shape = 'u8[32768]{0}', space=vmem, size = 0x8000, scoped, tag = 'scoped memory for downsample_forward.1']
    %v2076 = vld [vmem:[#allocation3] sm:$0xff]
    %v2077 = vld [vmem:[#allocation3 + $0x10] sm:$0xff]
    %v2078 = vld [vmem:[#allocation3 + $0x20] sm:$0xff]
    %v2079 = vld [vmem:[#allocation3 + $0x30] sm:$0xff]
    %v2080 = vld [vmem:[#allocation3 + $0x40] sm:$0xff]
    %v2081 = vld [vmem:[#allocation3 + $0x50] sm:$0xff]
    %v2082 = vld [vmem:[#allocation3 + $0x60] sm:$0xff]
    %v2083 = vld [vmem:[#allocation3 + $0x70] sm:$0xff]
    %v2084 = vld [vmem:[#allocation3 + $0xa0] sm:$0xff]
    %v2085 = vld [vmem:[#allocation3 + $0xb0] sm:$0xff]
    %v2086 = vld [vmem:[#allocation3 + $0xc0] sm:$0xff]
    %v2087 = vld [vmem:[#allocation3 + $0xd0] sm:$0xff]
    %v2088 = vld [vmem:[#allocation3 + $0xe0] sm:$0xff]
    %v2089 = vld [vmem:[#allocation3 + $0xf0] sm:$0xff]
    %v2090 = vld [vmem:[#allocation3 + $0x100] sm:$0xff]
    %v2091 = vld [vmem:[#allocation3 + $0x110] sm:$0xff]
    %v2092 = vpack.c.bf16 %v2076, %v2076
    %v2093 = vpack.c.bf16 %v2077, %v2077
    %v2094 = vpack.c.bf16 %v2078, %v2078
    %v2095 = vpack.c.bf16 %v2079, %v2079
    %v2096 = vpack.c.bf16 %v2080, %v2080
    %v2097 = vpack.c.bf16 %v2081, %v2081
    %v2098 = vpack.c.bf16 %v2082, %v2082
    %v2099 = vpack.c.bf16 %v2083, %v2083
    %v2100 = vpack.c.bf16 %v2084, %v2084
    %v2101 = vpack.c.bf16 %v2085, %v2085
    %v2102 = vpack.c.bf16 %v2086, %v2086
    %v2103 = vpack.c.bf16 %v2087, %v2087
    %v2104 = vpack.c.bf16 %v2088, %v2088
    %v2105 = vpack.c.bf16 %v2089, %v2089
    %v2106 = vpack.c.bf16 %v2090, %v2090
    %v2107 = vpack.c.bf16 %v2091, %v2091
    %vm2108 = vcmask 60416
    %2109 = vst.msk [vmem:[#allocation5] sm:$0xf] %vm2108, %v2092
    %2110 = vst.msk [vmem:[#allocation5 + $0x4] sm:$0xf] %vm2108, %v2093
    %2111 = vst.msk [vmem:[#allocation5 + $0x8] sm:$0xf] %vm2108, %v2094
    %2112 = vst.msk [vmem:[#allocation5 + $0xc] sm:$0xf] %vm2108, %v2095
    %2113 = vst.msk [vmem:[#allocation5 + $0x10] sm:$0xf] %vm2108, %v2096
    %2114 = vst.msk [vmem:[#allocation5 + $0x14] sm:$0xf] %vm2108, %v2097
    %2115 = vst.msk [vmem:[#allocation5 + $0x18] sm:$0xf] %vm2108, %v2098
    %2116 = vst.msk [vmem:[#allocation5 + $0x1c] sm:$0xf] %vm2108, %v2099
    %2117 = vst.msk [vmem:[#allocation5 + $0x20] sm:$0xf] %vm2108, %v2100
    %2118 = vst.msk [vmem:[#allocation5 + $0x24] sm:$0xf] %vm2108, %v2101
    %2119 = vst.msk [vmem:[#allocation5 + $0x28] sm:$0xf] %vm2108, %v2102
    %2120 = vst.msk [vmem:[#allocation5 + $0x2c] sm:$0xf] %vm2108, %v2103
    %2121 = vst.msk [vmem:[#allocation5 + $0x30] sm:$0xf] %vm2108, %v2104
    %2122 = vst.msk [vmem:[#allocation5 + $0x34] sm:$0xf] %vm2108, %v2105
    %2123 = vst.msk [vmem:[#allocation5 + $0x38] sm:$0xf] %vm2108, %v2106
    %2124 = vst.msk [vmem:[#allocation5 + $0x3c] sm:$0xf] %vm2108, %v2107
    %v2125 = vld [vmem:[#allocation3 + $0x1] sm:$0xff]
    %v2126 = vld [vmem:[#allocation3 + $0x11] sm:$0xff]
    %v2127 = vld [vmem:[#allocation3 + $0x21] sm:$0xff]
    %v2128 = vld [vmem:[#allocation3 + $0x31] sm:$0xff]
    %v2129 = vld [vmem:[#allocation3 + $0x41] sm:$0xff]
    %v2130 = vld [vmem:[#allocation3 + $0x51] sm:$0xff]
    %v2131 = vld [vmem:[#allocation3 + $0x61] sm:$0xff]
    %v2132 = vld [vmem:[#allocation3 + $0x71] sm:$0xff]
    %v2133 = vld [vmem:[#allocation3 + $0xa1] sm:$0xff]
    %v2134 = vld [vmem:[#allocation3 + $0xb1] sm:$0xff]
    %v2135 = vld [vmem:[#allocation3 + $0xc1] sm:$0xff]
    %v2136 = vld [vmem:[#allocation3 + $0xd1] sm:$0xff]
    %v2137 = vld [vmem:[#allocation3 + $0xe1] sm:$0xff]
    %v2138 = vld [vmem:[#allocation3 + $0xf1] sm:$0xff]
    %v2139 = vld [vmem:[#allocation3 + $0x101] sm:$0xff]
    %v2140 = vld [vmem:[#allocation3 + $0x111] sm:$0xff]
    %v2141 = vpack.c.bf16 %v2125, %v2125
    %v2142 = vpack.c.bf16 %v2126, %v2126
    %v2143 = vpack.c.bf16 %v2127, %v2127
    %v2144 = vpack.c.bf16 %v2128, %v2128
    %v2145 = vpack.c.bf16 %v2129, %v2129
    %v2146 = vpack.c.bf16 %v2130, %v2130
    %v2147 = vpack.c.bf16 %v2131, %v2131
    %v2148 = vpack.c.bf16 %v2132, %v2132
    %v2149 = vpack.c.bf16 %v2133, %v2133
    %v2150 = vpack.c.bf16 %v2134, %v2134
    %v2151 = vpack.c.bf16 %v2135, %v2135
    %v2152 = vpack.c.bf16 %v2136, %v2136
    %v2153 = vpack.c.bf16 %v2137, %v2137
    %v2154 = vpack.c.bf16 %v2138, %v2138
    %v2155 = vpack.c.bf16 %v2139, %v2139
    %v2156 = vpack.c.bf16 %v2140, %v2140
    %v2173 = vunpack.c.l.b16 %v2141
    %v2174 = vunpack.c.l.b16 %v2142
    %v2175 = vunpack.c.l.b16 %v2143
    %v2176 = vunpack.c.l.b16 %v2144
    %v2177 = vunpack.c.l.b16 %v2145
    %v2178 = vunpack.c.l.b16 %v2146
    %v2179 = vunpack.c.l.b16 %v2147
    %v2180 = vunpack.c.l.b16 %v2148
    %v2181 = vunpack.c.l.b16 %v2149
    %v2182 = vunpack.c.l.b16 %v2150
    %v2183 = vunpack.c.l.b16 %v2151
    %v2184 = vunpack.c.l.b16 %v2152
    %v2185 = vunpack.c.l.b16 %v2153
    %v2186 = vunpack.c.l.b16 %v2154
    %v2187 = vunpack.c.l.b16 %v2155
    %v2188 = vunpack.c.l.b16 %v2156
    %v2189 = vpack.c.b16 %v2173, %v2173
    %v2190 = vpack.c.b16 %v2174, %v2174
    %v2191 = vpack.c.b16 %v2175, %v2175
    %v2192 = vpack.c.b16 %v2176, %v2176
    %v2193 = vpack.c.b16 %v2177, %v2177
    %v2194 = vpack.c.b16 %v2178, %v2178
    %v2195 = vpack.c.b16 %v2179, %v2179
    %v2196 = vpack.c.b16 %v2180, %v2180
    %v2197 = vpack.c.b16 %v2181, %v2181
    %v2198 = vpack.c.b16 %v2182, %v2182
    %v2199 = vpack.c.b16 %v2183, %v2183
    %v2200 = vpack.c.b16 %v2184, %v2184
    %v2201 = vpack.c.b16 %v2185, %v2185
    %v2202 = vpack.c.b16 %v2186, %v2186
    %v2203 = vpack.c.b16 %v2187, %v2187
    %v2204 = vpack.c.b16 %v2188, %v2188
    %2205 = vrot.lane.b32.xlu0 %v2189, 8
    %v2206 = vpop.permute.xlu0 %2205
    %2207 = vrot.lane.b32.xlu0 %v2190, 8
    %v2208 = vpop.permute.xlu0 %2207
    %2209 = vrot.lane.b32.xlu0 %v2191, 8
    %v2210 = vpop.permute.xlu0 %2209
    %2211 = vrot.lane.b32.xlu0 %v2192, 8
    %v2212 = vpop.permute.xlu0 %2211
    %2213 = vrot.lane.b32.xlu0 %v2193, 8
    %v2214 = vpop.permute.xlu0 %2213
    %2215 = vrot.lane.b32.xlu0 %v2194, 8
    %v2216 = vpop.permute.xlu0 %2215
    %2217 = vrot.lane.b32.xlu0 %v2195, 8
    %v2218 = vpop.permute.xlu0 %2217
    %2219 = vrot.lane.b32.xlu0 %v2196, 8
    %v2220 = vpop.permute.xlu0 %2219
    %2221 = vrot.lane.b32.xlu0 %v2197, 8
    %v2222 = vpop.permute.xlu0 %2221
    %2223 = vrot.lane.b32.xlu0 %v2198, 8
    %v2224 = vpop.permute.xlu0 %2223
    %2225 = vrot.lane.b32.xlu0 %v2199, 8
    %v2226 = vpop.permute.xlu0 %2225
    %2227 = vrot.lane.b32.xlu0 %v2200, 8
    %v2228 = vpop.permute.xlu0 %2227
    %2229 = vrot.lane.b32.xlu0 %v2201, 8
    %v2230 = vpop.permute.xlu0 %2229
    %2231 = vrot.lane.b32.xlu0 %v2202, 8
    %v2232 = vpop.permute.xlu0 %2231
    %2233 = vrot.lane.b32.xlu0 %v2203, 8
    %v2234 = vpop.permute.xlu0 %2233
    %2235 = vrot.lane.b32.xlu0 %v2204, 8
    %v2236 = vpop.permute.xlu0 %2235
    %vm2253 = vcmask 126016
    %2254 = vst.msk [vmem:[#allocation5] sm:$0xf] %vm2253, %v2206
    %2255 = vst.msk [vmem:[#allocation5 + $0x4] sm:$0xf] %vm2253, %v2208
    %2256 = vst.msk [vmem:[#allocation5 + $0x8] sm:$0xf] %vm2253, %v2210
    %2257 = vst.msk [vmem:[#allocation5 + $0xc] sm:$0xf] %vm2253, %v2212
    %2258 = vst.msk [vmem:[#allocation5 + $0x10] sm:$0xf] %vm2253, %v2214
    %2259 = vst.msk [vmem:[#allocation5 + $0x14] sm:$0xf] %vm2253, %v2216
    %2260 = vst.msk [vmem:[#allocation5 + $0x18] sm:$0xf] %vm2253, %v2218
    %2261 = vst.msk [vmem:[#allocation5 + $0x1c] sm:$0xf] %vm2253, %v2220
    %2262 = vst.msk [vmem:[#allocation5 + $0x20] sm:$0xf] %vm2253, %v2222
    %2263 = vst.msk [vmem:[#allocation5 + $0x24] sm:$0xf] %vm2253, %v2224
    %2264 = vst.msk [vmem:[#allocation5 + $0x28] sm:$0xf] %vm2253, %v2226
    %2265 = vst.msk [vmem:[#allocation5 + $0x2c] sm:$0xf] %vm2253, %v2228
    %2266 = vst.msk [vmem:[#allocation5 + $0x30] sm:$0xf] %vm2253, %v2230
    %2267 = vst.msk [vmem:[#allocation5 + $0x34] sm:$0xf] %vm2253, %v2232
    %2268 = vst.msk [vmem:[#allocation5 + $0x38] sm:$0xf] %vm2253, %v2234
    %2269 = vst.msk [vmem:[#allocation5 + $0x3c] sm:$0xf] %vm2253, %v2236
    %v2270 = vld [vmem:[#allocation3 + $0x2] sm:$0xff]
    %v2271 = vld [vmem:[#allocation3 + $0x12] sm:$0xff]
    %v2272 = vld [vmem:[#allocation3 + $0x22] sm:$0xff]
    %v2273 = vld [vmem:[#allocation3 + $0x32] sm:$0xff]
    %v2274 = vld [vmem:[#allocation3 + $0x42] sm:$0xff]
    %v2275 = vld [vmem:[#allocation3 + $0x52] sm:$0xff]
    %v2276 = vld [vmem:[#allocation3 + $0x62] sm:$0xff]
    %v2277 = vld [vmem:[#allocation3 + $0x72] sm:$0xff]
    %v2278 = vld [vmem:[#allocation3 + $0xa2] sm:$0xff]
    %v2279 = vld [vmem:[#allocation3 + $0xb2] sm:$0xff]
    %v2280 = vld [vmem:[#allocation3 + $0xc2] sm:$0xff]
    %v2281 = vld [vmem:[#allocation3 + $0xd2] sm:$0xff]
    %v2282 = vld [vmem:[#allocation3 + $0xe2] sm:$0xff]
    %v2283 = vld [vmem:[#allocation3 + $0xf2] sm:$0xff]
    %v2284 = vld [vmem:[#allocation3 + $0x102] sm:$0xff]
    %v2285 = vld [vmem:[#allocation3 + $0x112] sm:$0xff]
    %v2286 = vpack.c.bf16 %v2270, %v2270
    %v2287 = vpack.c.bf16 %v2271, %v2271
    %v2288 = vpack.c.bf16 %v2272, %v2272
    %v2289 = vpack.c.bf16 %v2273, %v2273
    %v2290 = vpack.c.bf16 %v2274, %v2274
    %v2291 = vpack.c.bf16 %v2275, %v2275
    %v2292 = vpack.c.bf16 %v2276, %v2276
    %v2293 = vpack.c.bf16 %v2277, %v2277
    %v2294 = vpack.c.bf16 %v2278, %v2278
    %v2295 = vpack.c.bf16 %v2279, %v2279
    %v2296 = vpack.c.bf16 %v2280, %v2280
    %v2297 = vpack.c.bf16 %v2281, %v2281
    %v2298 = vpack.c.bf16 %v2282, %v2282
    %v2299 = vpack.c.bf16 %v2283, %v2283
    %v2300 = vpack.c.bf16 %v2284, %v2284
    %v2301 = vpack.c.bf16 %v2285, %v2285
    %v2318 = vunpack.c.l.b16 %v2286
    %v2319 = vunpack.c.l.b16 %v2287
    %v2320 = vunpack.c.l.b16 %v2288
    %v2321 = vunpack.c.l.b16 %v2289
    %v2322 = vunpack.c.l.b16 %v2290
    %v2323 = vunpack.c.l.b16 %v2291
    %v2324 = vunpack.c.l.b16 %v2292
    %v2325 = vunpack.c.l.b16 %v2293
    %v2326 = vunpack.c.l.b16 %v2294
    %v2327 = vunpack.c.l.b16 %v2295
    %v2328 = vunpack.c.l.b16 %v2296
    %v2329 = vunpack.c.l.b16 %v2297
    %v2330 = vunpack.c.l.b16 %v2298
    %v2331 = vunpack.c.l.b16 %v2299
    %v2332 = vunpack.c.l.b16 %v2300
    %v2333 = vunpack.c.l.b16 %v2301
    %v2334 = vpack.c.b16 %v2318, %v2318
    %v2335 = vpack.c.b16 %v2319, %v2319
    %v2336 = vpack.c.b16 %v2320, %v2320
    %v2337 = vpack.c.b16 %v2321, %v2321
    %v2338 = vpack.c.b16 %v2322, %v2322
    %v2339 = vpack.c.b16 %v2323, %v2323
    %v2340 = vpack.c.b16 %v2324, %v2324
    %v2341 = vpack.c.b16 %v2325, %v2325
    %v2342 = vpack.c.b16 %v2326, %v2326
    %v2343 = vpack.c.b16 %v2327, %v2327
    %v2344 = vpack.c.b16 %v2328, %v2328
    %v2345 = vpack.c.b16 %v2329, %v2329
    %v2346 = vpack.c.b16 %v2330, %v2330
    %v2347 = vpack.c.b16 %v2331, %v2331
    %v2348 = vpack.c.b16 %v2332, %v2332
    %v2349 = vpack.c.b16 %v2333, %v2333
    %2350 = vrot.lane.b32.xlu0 %v2334, 16
    %v2351 = vpop.permute.xlu0 %2350
    %2352 = vrot.lane.b32.xlu0 %v2335, 16
    %v2353 = vpop.permute.xlu0 %2352
    %2354 = vrot.lane.b32.xlu0 %v2336, 16
    %v2355 = vpop.permute.xlu0 %2354
    %2356 = vrot.lane.b32.xlu0 %v2337, 16
    %v2357 = vpop.permute.xlu0 %2356
    %2358 = vrot.lane.b32.xlu0 %v2338, 16
    %v2359 = vpop.permute.xlu0 %2358
    %2360 = vrot.lane.b32.xlu0 %v2339, 16
    %v2361 = vpop.permute.xlu0 %2360
    %2362 = vrot.lane.b32.xlu0 %v2340, 16
    %v2363 = vpop.permute.xlu0 %2362
    %2364 = vrot.lane.b32.xlu0 %v2341, 16
    %v2365 = vpop.permute.xlu0 %2364
    %2366 = vrot.lane.b32.xlu0 %v2342, 16
    %v2367 = vpop.permute.xlu0 %2366
    %2368 = vrot.lane.b32.xlu0 %v2343, 16
    %v2369 = vpop.permute.xlu0 %2368
    %2370 = vrot.lane.b32.xlu0 %v2344, 16
    %v2371 = vpop.permute.xlu0 %2370
    %2372 = vrot.lane.b32.xlu0 %v2345, 16
    %v2373 = vpop.permute.xlu0 %2372
    %2374 = vrot.lane.b32.xlu0 %v2346, 16
    %v2375 = vpop.permute.xlu0 %2374
    %2376 = vrot.lane.b32.xlu0 %v2347, 16
    %v2377 = vpop.permute.xlu0 %2376
    %2378 = vrot.lane.b32.xlu0 %v2348, 16
    %v2379 = vpop.permute.xlu0 %2378
    %2380 = vrot.lane.b32.xlu0 %v2349, 16
    %v2381 = vpop.permute.xlu0 %2380
    %vm2398 = vcmask 191616
    %2399 = vst.msk [vmem:[#allocation5] sm:$0xf] %vm2398, %v2351
    %2400 = vst.msk [vmem:[#allocation5 + $0x4] sm:$0xf] %vm2398, %v2353
    %2401 = vst.msk [vmem:[#allocation5 + $0x8] sm:$0xf] %vm2398, %v2355
    %2402 = vst.msk [vmem:[#allocation5 + $0xc] sm:$0xf] %vm2398, %v2357
    %2403 = vst.msk [vmem:[#allocation5 + $0x10] sm:$0xf] %vm2398, %v2359
    %2404 = vst.msk [vmem:[#allocation5 + $0x14] sm:$0xf] %vm2398, %v2361
    %2405 = vst.msk [vmem:[#allocation5 + $0x18] sm:$0xf] %vm2398, %v2363
    %2406 = vst.msk [vmem:[#allocation5 + $0x1c] sm:$0xf] %vm2398, %v2365
    %2407 = vst.msk [vmem:[#allocation5 + $0x20] sm:$0xf] %vm2398, %v2367
    %2408 = vst.msk [vmem:[#allocation5 + $0x24] sm:$0xf] %vm2398, %v2369
    %2409 = vst.msk [vmem:[#allocation5 + $0x28] sm:$0xf] %vm2398, %v2371
    %2410 = vst.msk [vmem:[#allocation5 + $0x2c] sm:$0xf] %vm2398, %v2373
    %2411 = vst.msk [vmem:[#allocation5 + $0x30] sm:$0xf] %vm2398, %v2375
    %2412 = vst.msk [vmem:[#allocation5 + $0x34] sm:$0xf] %vm2398, %v2377
    %2413 = vst.msk [vmem:[#allocation5 + $0x38] sm:$0xf] %vm2398, %v2379
    %2414 = vst.msk [vmem:[#allocation5 + $0x3c] sm:$0xf] %vm2398, %v2381
    %v2415 = vld [vmem:[#allocation5] sm:$0xf]
    %v2416 = vld [vmem:[#allocation5 + $0x4] sm:$0xf]
    %v2417 = vld [vmem:[#allocation5 + $0x8] sm:$0xf]
    %v2418 = vld [vmem:[#allocation5 + $0xc] sm:$0xf]
    %v2419 = vld [vmem:[#allocation5 + $0x10] sm:$0xf]
    %v2420 = vld [vmem:[#allocation5 + $0x14] sm:$0xf]
    %v2421 = vld [vmem:[#allocation5 + $0x18] sm:$0xf]
    %v2422 = vld [vmem:[#allocation5 + $0x1c] sm:$0xf]
    %v2423 = vld [vmem:[#allocation5 + $0x20] sm:$0xf]
    %v2424 = vld [vmem:[#allocation5 + $0x24] sm:$0xf]
    %v2425 = vld [vmem:[#allocation5 + $0x28] sm:$0xf]
    %v2426 = vld [vmem:[#allocation5 + $0x2c] sm:$0xf]
    %v2427 = vld [vmem:[#allocation5 + $0x30] sm:$0xf]
    %v2428 = vld [vmem:[#allocation5 + $0x34] sm:$0xf]
    %v2429 = vld [vmem:[#allocation5 + $0x38] sm:$0xf]
    %v2430 = vld [vmem:[#allocation5 + $0x3c] sm:$0xf]
    %v2431 = vld [vmem:[%s4] sm:$0xf]
    %v2432 = vld [vmem:[%s4 + $0x4] sm:$0xf]
    %v2433 = vld [vmem:[%s4 + $0x8] sm:$0xf]
    %s2434 = scalar_lea.vmem [#allocation3], 16
    %v2435 = vld [vmem:[%s2434] sm:$0xff]
    %v2436 = vld [vmem:[%s2434 + $0x10] sm:$0xff]
    %v2437 = vld [vmem:[%s2434 + $0x20] sm:$0xff]
    %v2438 = vld [vmem:[%s2434 + $0x30] sm:$0xff]
    %v2439 = vld [vmem:[%s2434 + $0x40] sm:$0xff]
    %v2440 = vld [vmem:[%s2434 + $0x50] sm:$0xff]
    %v2441 = vld [vmem:[%s2434 + $0x60] sm:$0xff]
    %v2442 = vld [vmem:[%s2434 + $0x70] sm:$0xff]
    %v2443 = vld [vmem:[%s2434 + $0xa0] sm:$0xff]
    %v2444 = vld [vmem:[%s2434 + $0xb0] sm:$0xff]
    %v2445 = vld [vmem:[%s2434 + $0xc0] sm:$0xff]
    %v2446 = vld [vmem:[%s2434 + $0xd0] sm:$0xff]
    %v2447 = vld [vmem:[%s2434 + $0xe0] sm:$0xff]
    %v2448 = vld [vmem:[%s2434 + $0xf0] sm:$0xff]
    %v2449 = vld [vmem:[%s2434 + $0x100] sm:$0xff]
    %v2450 = vld [vmem:[%s2434 + $0x110] sm:$0xff]
    %v2451 = vpack.c.bf16 %v2435, %v2435
    %v2452 = vpack.c.bf16 %v2436, %v2436
    %v2453 = vpack.c.bf16 %v2437, %v2437
    %v2454 = vpack.c.bf16 %v2438, %v2438
    %v2455 = vpack.c.bf16 %v2439, %v2439
    %v2456 = vpack.c.bf16 %v2440, %v2440
    %v2457 = vpack.c.bf16 %v2441, %v2441
    %v2458 = vpack.c.bf16 %v2442, %v2442
    %v2459 = vpack.c.bf16 %v2443, %v2443
    %v2460 = vpack.c.bf16 %v2444, %v2444
    %v2461 = vpack.c.bf16 %v2445, %v2445
    %v2462 = vpack.c.bf16 %v2446, %v2446
    %v2463 = vpack.c.bf16 %v2447, %v2447
    %v2464 = vpack.c.bf16 %v2448, %v2448
    %v2465 = vpack.c.bf16 %v2449, %v2449
    %v2466 = vpack.c.bf16 %v2450, %v2450
    %2467 = vst.msk [vmem:[#allocation5] sm:$0xf] %vm2108, %v2451
    %2468 = vst.msk [vmem:[#allocation5 + $0x4] sm:$0xf] %vm2108, %v2452
    %2469 = vst.msk [vmem:[#allocation5 + $0x8] sm:$0xf] %vm2108, %v2453
    %2470 = vst.msk [vmem:[#allocation5 + $0xc] sm:$0xf] %vm2108, %v2454
    %2471 = vst.msk [vmem:[#allocation5 + $0x10] sm:$0xf] %vm2108, %v2455
    %2472 = vst.msk [vmem:[#allocation5 + $0x14] sm:$0xf] %vm2108, %v2456
    %2473 = vst.msk [vmem:[#allocation5 + $0x18] sm:$0xf] %vm2108, %v2457
    %2474 = vst.msk [vmem:[#allocation5 + $0x1c] sm:$0xf] %vm2108, %v2458
    %2475 = vst.msk [vmem:[#allocation5 + $0x20] sm:$0xf] %vm2108, %v2459
    %2476 = vst.msk [vmem:[#allocation5 + $0x24] sm:$0xf] %vm2108, %v2460
    %2477 = vst.msk [vmem:[#allocation5 + $0x28] sm:$0xf] %vm2108, %v2461
    %2478 = vst.msk [vmem:[#allocation5 + $0x2c] sm:$0xf] %vm2108, %v2462
    %2479 = vst.msk [vmem:[#allocation5 + $0x30] sm:$0xf] %vm2108, %v2463
    %2480 = vst.msk [vmem:[#allocation5 + $0x34] sm:$0xf] %vm2108, %v2464
    %2481 = vst.msk [vmem:[#allocation5 + $0x38] sm:$0xf] %vm2108, %v2465
    %2482 = vst.msk [vmem:[#allocation5 + $0x3c] sm:$0xf] %vm2108, %v2466
    %v2483 = vld [vmem:[%s2434 + $0x1] sm:$0xff]
    %v2484 = vld [vmem:[%s2434 + $0x11] sm:$0xff]
    %v2485 = vld [vmem:[%s2434 + $0x21] sm:$0xff]
    %v2486 = vld [vmem:[%s2434 + $0x31] sm:$0xff]
    %v2487 = vld [vmem:[%s2434 + $0x41] sm:$0xff]
    %v2488 = vld [vmem:[%s2434 + $0x51] sm:$0xff]
    %v2489 = vld [vmem:[%s2434 + $0x61] sm:$0xff]
    %v2490 = vld [vmem:[%s2434 + $0x71] sm:$0xff]
    %v2491 = vld [vmem:[%s2434 + $0xa1] sm:$0xff]
    %v2492 = vld [vmem:[%s2434 + $0xb1] sm:$0xff]
    %v2493 = vld [vmem:[%s2434 + $0xc1] sm:$0xff]
    %v2494 = vld [vmem:[%s2434 + $0xd1] sm:$0xff]
    %v2495 = vld [vmem:[%s2434 + $0xe1] sm:$0xff]
    %v2496 = vld [vmem:[%s2434 + $0xf1] sm:$0xff]
    %v2497 = vld [vmem:[%s2434 + $0x101] sm:$0xff]
    %v2498 = vld [vmem:[%s2434 + $0x111] sm:$0xff]
    %v2499 = vpack.c.bf16 %v2483, %v2483
    %v2500 = vpack.c.bf16 %v2484, %v2484
    %v2501 = vpack.c.bf16 %v2485, %v2485
    %v2502 = vpack.c.bf16 %v2486, %v2486
    %v2503 = vpack.c.bf16 %v2487, %v2487
    %v2504 = vpack.c.bf16 %v2488, %v2488
    %v2505 = vpack.c.bf16 %v2489, %v2489
    %v2506 = vpack.c.bf16 %v2490, %v2490
    %v2507 = vpack.c.bf16 %v2491, %v2491
    %v2508 = vpack.c.bf16 %v2492, %v2492
    %v2509 = vpack.c.bf16 %v2493, %v2493
    %v2510 = vpack.c.bf16 %v2494, %v2494
    %v2511 = vpack.c.bf16 %v2495, %v2495
    %v2512 = vpack.c.bf16 %v2496, %v2496
    %v2513 = vpack.c.bf16 %v2497, %v2497
    %v2514 = vpack.c.bf16 %v2498, %v2498
    %v2531 = vunpack.c.l.b16 %v2499
    %v2532 = vunpack.c.l.b16 %v2500
    %v2533 = vunpack.c.l.b16 %v2501
    %v2534 = vunpack.c.l.b16 %v2502
    %v2535 = vunpack.c.l.b16 %v2503
    %v2536 = vunpack.c.l.b16 %v2504
    %v2537 = vunpack.c.l.b16 %v2505
    %v2538 = vunpack.c.l.b16 %v2506
    %v2539 = vunpack.c.l.b16 %v2507
    %v2540 = vunpack.c.l.b16 %v2508
    %v2541 = vunpack.c.l.b16 %v2509
    %v2542 = vunpack.c.l.b16 %v2510
    %v2543 = vunpack.c.l.b16 %v2511
    %v2544 = vunpack.c.l.b16 %v2512
    %v2545 = vunpack.c.l.b16 %v2513
    %v2546 = vunpack.c.l.b16 %v2514
    %v2547 = vpack.c.b16 %v2531, %v2531
    %v2548 = vpack.c.b16 %v2532, %v2532
    %v2549 = vpack.c.b16 %v2533, %v2533
    %v2550 = vpack.c.b16 %v2534, %v2534
    %v2551 = vpack.c.b16 %v2535, %v2535
    %v2552 = vpack.c.b16 %v2536, %v2536
    %v2553 = vpack.c.b16 %v2537, %v2537
    %v2554 = vpack.c.b16 %v2538, %v2538
    %v2555 = vpack.c.b16 %v2539, %v2539
    %v2556 = vpack.c.b16 %v2540, %v2540
    %v2557 = vpack.c.b16 %v2541, %v2541
    %v2558 = vpack.c.b16 %v2542, %v2542
    %v2559 = vpack.c.b16 %v2543, %v2543
    %v2560 = vpack.c.b16 %v2544, %v2544
    %v2561 = vpack.c.b16 %v2545, %v2545
    %v2562 = vpack.c.b16 %v2546, %v2546
    %2563 = vrot.lane.b32.xlu0 %v2547, 8
    %v2564 = vpop.permute.xlu0 %2563
    %2565 = vrot.lane.b32.xlu0 %v2548, 8
    %v2566 = vpop.permute.xlu0 %2565
    %2567 = vrot.lane.b32.xlu0 %v2549, 8
    %v2568 = vpop.permute.xlu0 %2567
    %2569 = vrot.lane.b32.xlu0 %v2550, 8
    %v2570 = vpop.permute.xlu0 %2569
    %2571 = vrot.lane.b32.xlu0 %v2551, 8
    %v2572 = vpop.permute.xlu0 %2571
    %2573 = vrot.lane.b32.xlu0 %v2552, 8
    %v2574 = vpop.permute.xlu0 %2573
    %2575 = vrot.lane.b32.xlu0 %v2553, 8
    %v2576 = vpop.permute.xlu0 %2575
    %2577 = vrot.lane.b32.xlu0 %v2554, 8
    %v2578 = vpop.permute.xlu0 %2577
    %2579 = vrot.lane.b32.xlu0 %v2555, 8
    %v2580 = vpop.permute.xlu0 %2579
    %2581 = vrot.lane.b32.xlu0 %v2556, 8
    %v2582 = vpop.permute.xlu0 %2581
    %2583 = vrot.lane.b32.xlu0 %v2557, 8
    %v2584 = vpop.permute.xlu0 %2583
    %2585 = vrot.lane.b32.xlu0 %v2558, 8
    %v2586 = vpop.permute.xlu0 %2585
    %2587 = vrot.lane.b32.xlu0 %v2559, 8
    %v2588 = vpop.permute.xlu0 %2587
    %2589 = vrot.lane.b32.xlu0 %v2560, 8
    %v2590 = vpop.permute.xlu0 %2589
    %2591 = vrot.lane.b32.xlu0 %v2561, 8
    %v2592 = vpop.permute.xlu0 %2591
    %2593 = vrot.lane.b32.xlu0 %v2562, 8
    %v2594 = vpop.permute.xlu0 %2593
    %2611 = vst.msk [vmem:[#allocation5] sm:$0xf] %vm2253, %v2564
    %2612 = vst.msk [vmem:[#allocation5 + $0x4] sm:$0xf] %vm2253, %v2566
    %2613 = vst.msk [vmem:[#allocation5 + $0x8] sm:$0xf] %vm2253, %v2568
    %2614 = vst.msk [vmem:[#allocation5 + $0xc] sm:$0xf] %vm2253, %v2570
    %2615 = vst.msk [vmem:[#allocation5 + $0x10] sm:$0xf] %vm2253, %v2572
    %2616 = vst.msk [vmem:[#allocation5 + $0x14] sm:$0xf] %vm2253, %v2574
    %2617 = vst.msk [vmem:[#allocation5 + $0x18] sm:$0xf] %vm2253, %v2576
    %2618 = vst.msk [vmem:[#allocation5 + $0x1c] sm:$0xf] %vm2253, %v2578
    %2619 = vst.msk [vmem:[#allocation5 + $0x20] sm:$0xf] %vm2253, %v2580
    %2620 = vst.msk [vmem:[#allocation5 + $0x24] sm:$0xf] %vm2253, %v2582
    %2621 = vst.msk [vmem:[#allocation5 + $0x28] sm:$0xf] %vm2253, %v2584
    %2622 = vst.msk [vmem:[#allocation5 + $0x2c] sm:$0xf] %vm2253, %v2586
    %2623 = vst.msk [vmem:[#allocation5 + $0x30] sm:$0xf] %vm2253, %v2588
    %2624 = vst.msk [vmem:[#allocation5 + $0x34] sm:$0xf] %vm2253, %v2590
    %2625 = vst.msk [vmem:[#allocation5 + $0x38] sm:$0xf] %vm2253, %v2592
    %2626 = vst.msk [vmem:[#allocation5 + $0x3c] sm:$0xf] %vm2253, %v2594
    %v2627 = vld [vmem:[%s2434 + $0x2] sm:$0xff]
    %v2628 = vld [vmem:[%s2434 + $0x12] sm:$0xff]
    %v2629 = vld [vmem:[%s2434 + $0x22] sm:$0xff]
    %v2630 = vld [vmem:[%s2434 + $0x32] sm:$0xff]
    %v2631 = vld [vmem:[%s2434 + $0x42] sm:$0xff]
    %v2632 = vld [vmem:[%s2434 + $0x52] sm:$0xff]
    %v2633 = vld [vmem:[%s2434 + $0x62] sm:$0xff]
    %v2634 = vld [vmem:[%s2434 + $0x72] sm:$0xff]
    %v2635 = vld [vmem:[%s2434 + $0xa2] sm:$0xff]
    %v2636 = vld [vmem:[%s2434 + $0xb2] sm:$0xff]
    %v2637 = vld [vmem:[%s2434 + $0xc2] sm:$0xff]
    %v2638 = vld [vmem:[%s2434 + $0xd2] sm:$0xff]
    %v2639 = vld [vmem:[%s2434 + $0xe2] sm:$0xff]
    %v2640 = vld [vmem:[%s2434 + $0xf2] sm:$0xff]
    %v2641 = vld [vmem:[%s2434 + $0x102] sm:$0xff]
    %v2642 = vld [vmem:[%s2434 + $0x112] sm:$0xff]
    %v2643 = vpack.c.bf16 %v2627, %v2627
    %v2644 = vpack.c.bf16 %v2628, %v2628
    %v2645 = vpack.c.bf16 %v2629, %v2629
    %v2646 = vpack.c.bf16 %v2630, %v2630
    %v2647 = vpack.c.bf16 %v2631, %v2631
    %v2648 = vpack.c.bf16 %v2632, %v2632
    %v2649 = vpack.c.bf16 %v2633, %v2633
    %v2650 = vpack.c.bf16 %v2634, %v2634
    %v2651 = vpack.c.bf16 %v2635, %v2635
    %v2652 = vpack.c.bf16 %v2636, %v2636
    %v2653 = vpack.c.bf16 %v2637, %v2637
    %v2654 = vpack.c.bf16 %v2638, %v2638
    %v2655 = vpack.c.bf16 %v2639, %v2639
    %v2656 = vpack.c.bf16 %v2640, %v2640
    %v2657 = vpack.c.bf16 %v2641, %v2641
    %v2658 = vpack.c.bf16 %v2642, %v2642
    %v2675 = vunpack.c.l.b16 %v2643
    %v2676 = vunpack.c.l.b16 %v2644
    %v2677 = vunpack.c.l.b16 %v2645
    %v2678 = vunpack.c.l.b16 %v2646
    %v2679 = vunpack.c.l.b16 %v2647
    %v2680 = vunpack.c.l.b16 %v2648
    %v2681 = vunpack.c.l.b16 %v2649
    %v2682 = vunpack.c.l.b16 %v2650
    %v2683 = vunpack.c.l.b16 %v2651
    %v2684 = vunpack.c.l.b16 %v2652
    %v2685 = vunpack.c.l.b16 %v2653
    %v2686 = vunpack.c.l.b16 %v2654
    %v2687 = vunpack.c.l.b16 %v2655
    %v2688 = vunpack.c.l.b16 %v2656
    %v2689 = vunpack.c.l.b16 %v2657
    %v2690 = vunpack.c.l.b16 %v2658
    %v2691 = vpack.c.b16 %v2675, %v2675
    %v2692 = vpack.c.b16 %v2676, %v2676
    %v2693 = vpack.c.b16 %v2677, %v2677
    %v2694 = vpack.c.b16 %v2678, %v2678
    %v2695 = vpack.c.b16 %v2679, %v2679
    %v2696 = vpack.c.b16 %v2680, %v2680
    %v2697 = vpack.c.b16 %v2681, %v2681
    %v2698 = vpack.c.b16 %v2682, %v2682
    %v2699 = vpack.c.b16 %v2683, %v2683
    %v2700 = vpack.c.b16 %v2684, %v2684
    %v2701 = vpack.c.b16 %v2685, %v2685
    %v2702 = vpack.c.b16 %v2686, %v2686
    %v2703 = vpack.c.b16 %v2687, %v2687
    %v2704 = vpack.c.b16 %v2688, %v2688
    %v2705 = vpack.c.b16 %v2689, %v2689
    %v2706 = vpack.c.b16 %v2690, %v2690
    %2707 = vrot.lane.b32.xlu0 %v2691, 16
    %v2708 = vpop.permute.xlu0 %2707
    %2709 = vrot.lane.b32.xlu0 %v2692, 16
    %v2710 = vpop.permute.xlu0 %2709
    %2711 = vrot.lane.b32.xlu0 %v2693, 16
    %v2712 = vpop.permute.xlu0 %2711
    %2713 = vrot.lane.b32.xlu0 %v2694, 16
    %v2714 = vpop.permute.xlu0 %2713
    %2715 = vrot.lane.b32.xlu0 %v2695, 16
    %v2716 = vpop.permute.xlu0 %2715
    %2717 = vrot.lane.b32.xlu0 %v2696, 16
    %v2718 = vpop.permute.xlu0 %2717
    %2719 = vrot.lane.b32.xlu0 %v2697, 16
    %v2720 = vpop.permute.xlu0 %2719
    %2721 = vrot.lane.b32.xlu0 %v2698, 16
    %v2722 = vpop.permute.xlu0 %2721
    %2723 = vrot.lane.b32.xlu0 %v2699, 16
    %v2724 = vpop.permute.xlu0 %2723
    %2725 = vrot.lane.b32.xlu0 %v2700, 16
    %v2726 = vpop.permute.xlu0 %2725
    %2727 = vrot.lane.b32.xlu0 %v2701, 16
    %v2728 = vpop.permute.xlu0 %2727
    %2729 = vrot.lane.b32.xlu0 %v2702, 16
    %v2730 = vpop.permute.xlu0 %2729
    %2731 = vrot.lane.b32.xlu0 %v2703, 16
    %v2732 = vpop.permute.xlu0 %2731
    %2733 = vrot.lane.b32.xlu0 %v2704, 16
    %v2734 = vpop.permute.xlu0 %2733
    %2735 = vrot.lane.b32.xlu0 %v2705, 16
    %v2736 = vpop.permute.xlu0 %2735
    %2737 = vrot.lane.b32.xlu0 %v2706, 16
    %v2738 = vpop.permute.xlu0 %2737
    %2755 = vst.msk [vmem:[#allocation5] sm:$0xf] %vm2398, %v2708
    %2756 = vst.msk [vmem:[#allocation5 + $0x4] sm:$0xf] %vm2398, %v2710
    %2757 = vst.msk [vmem:[#allocation5 + $0x8] sm:$0xf] %vm2398, %v2712
    %2758 = vst.msk [vmem:[#allocation5 + $0xc] sm:$0xf] %vm2398, %v2714
    %2759 = vst.msk [vmem:[#allocation5 + $0x10] sm:$0xf] %vm2398, %v2716
    %2760 = vst.msk [vmem:[#allocation5 + $0x14] sm:$0xf] %vm2398, %v2718
    %2761 = vst.msk [vmem:[#allocation5 + $0x18] sm:$0xf] %vm2398, %v2720
    %2762 = vst.msk [vmem:[#allocation5 + $0x1c] sm:$0xf] %vm2398, %v2722
    %2763 = vst.msk [vmem:[#allocation5 + $0x20] sm:$0xf] %vm2398, %v2724
    %2764 = vst.msk [vmem:[#allocation5 + $0x24] sm:$0xf] %vm2398, %v2726
    %2765 = vst.msk [vmem:[#allocation5 + $0x28] sm:$0xf] %vm2398, %v2728
    %2766 = vst.msk [vmem:[#allocation5 + $0x2c] sm:$0xf] %vm2398, %v2730
    %2767 = vst.msk [vmem:[#allocation5 + $0x30] sm:$0xf] %vm2398, %v2732
    %2768 = vst.msk [vmem:[#allocation5 + $0x34] sm:$0xf] %vm2398, %v2734
    %2769 = vst.msk [vmem:[#allocation5 + $0x38] sm:$0xf] %vm2398, %v2736
    %2770 = vst.msk [vmem:[#allocation5 + $0x3c] sm:$0xf] %vm2398, %v2738
    %v2771 = vld [vmem:[#allocation5] sm:$0xf]
    %v2772 = vld [vmem:[#allocation5 + $0x4] sm:$0xf]
    %v2773 = vld [vmem:[#allocation5 + $0x8] sm:$0xf]
    %v2774 = vld [vmem:[#allocation5 + $0xc] sm:$0xf]
    %v2775 = vld [vmem:[#allocation5 + $0x10] sm:$0xf]
    %v2776 = vld [vmem:[#allocation5 + $0x14] sm:$0xf]
    %v2777 = vld [vmem:[#allocation5 + $0x18] sm:$0xf]
    %v2778 = vld [vmem:[#allocation5 + $0x1c] sm:$0xf]
    %v2779 = vld [vmem:[#allocation5 + $0x20] sm:$0xf]
    %v2780 = vld [vmem:[#allocation5 + $0x24] sm:$0xf]
    %v2781 = vld [vmem:[#allocation5 + $0x28] sm:$0xf]
    %v2782 = vld [vmem:[#allocation5 + $0x2c] sm:$0xf]
    %v2783 = vld [vmem:[#allocation5 + $0x30] sm:$0xf]
    %v2784 = vld [vmem:[#allocation5 + $0x34] sm:$0xf]
    %v2785 = vld [vmem:[#allocation5 + $0x38] sm:$0xf]
    %v2786 = vld [vmem:[#allocation5 + $0x3c] sm:$0xf]
    %s2787 = scalar_lea.vmem %s4, 12
    %v2788 = vld [vmem:[%s2787] sm:$0xf]
    %v2789 = vld [vmem:[%s2787 + $0x4] sm:$0xf]
    %v2790 = vld [vmem:[%s2787 + $0x8] sm:$0xf]
    %v2807 = vunpack.c.l.b16 %v2771
    %v2808 = vunpack.c.l.b16 %v2772
    %v2809 = vunpack.c.l.b16 %v2773
    %v2810 = vunpack.c.l.b16 %v2774
    %v2811 = vunpack.c.l.b16 %v2775
    %v2812 = vunpack.c.l.b16 %v2776
    %v2813 = vunpack.c.l.b16 %v2777
    %v2814 = vunpack.c.l.b16 %v2778
    %v2815 = vunpack.c.l.b16 %v2779
    %v2816 = vunpack.c.l.b16 %v2780
    %v2817 = vunpack.c.l.b16 %v2781
    %v2818 = vunpack.c.l.b16 %v2782
    %v2819 = vunpack.c.l.b16 %v2783
    %v2820 = vunpack.c.l.b16 %v2784
    %v2821 = vunpack.c.l.b16 %v2785
    %v2822 = vunpack.c.l.b16 %v2786
    %v2823 = vpack.c.b16 %v2808, %v2807
    %v2824 = vpack.c.b16 %v2810, %v2809
    %v2825 = vpack.c.b16 %v2812, %v2811
    %v2826 = vpack.c.b16 %v2814, %v2813
    %v2827 = vpack.c.b16 %v2816, %v2815
    %v2828 = vpack.c.b16 %v2818, %v2817
    %v2829 = vpack.c.b16 %v2820, %v2819
    %v2830 = vpack.c.b16 %v2822, %v2821
    %v2834 = vunpack.c.l.b16 %v2788
    %v2835 = vunpack.c.l.b16 %v2789
    %v2836 = vunpack.c.l.b16 %v2790
    %v2837 = vpack.c.b16 %v2835, %v2834
    %v2838 = vpack.c.b16 %v2836, %v2836
    %vm2840 = vcmask 195584
    %v2842 = vsel %vm2840, %v2823, 0
    %v2845 = vsel %vm2840, %v2824, 0
    %v2848 = vsel %vm2840, %v2825, 0
    %v2851 = vsel %vm2840, %v2826, 0
    %v2854 = vsel %vm2840, %v2827, 0
    %v2857 = vsel %vm2840, %v2828, 0
    %v2860 = vsel %vm2840, %v2829, 0
    %v2863 = vsel %vm2840, %v2830, 0
    %vm2865 = vcmask 1043456
    %v2867 = vsel %vm2865, %v2838, 0
    %2869 = vmatprep.subr.bf16.mxu0 0
    %2870 = vmatpush1.bf16.msra.mxu0 %v2837
    %2871 = vmatprep.subr.bf16.mxu0 0
    %2872 = vmatpush1.bf16.msra.mxu0 %v2867
    %2873 = vmatprep.subr.bf16.mxu0 0
    %2874 = vmatpush1.bf16.msra.mxu0 0
    %2875 = vmatprep.subr.bf16.mxu0 0
    %2876 = vmatpush1.bf16.msra.mxu0 0
    %2877 = vmatprep.subr.bf16.mxu0 0
    %2878 = vmatpush1.bf16.msra.mxu0 0
    %2879 = vmatprep.subr.bf16.mxu0 0
    %2880 = vmatpush1.bf16.msra.mxu0 0
    %2881 = vmatprep.subr.bf16.mxu0 0
    %2882 = vmatpush1.bf16.msra.mxu0 0
    %2883 = vmatprep.subr.bf16.mxu0 0
    %2884 = vmatpush1.bf16.msra.mxu0 0
    %2885 = vmatprep.subr.bf16.mxu0 0
    %2886 = vmatpush1.bf16.msra.mxu0 0
    %2887 = vmatprep.subr.bf16.mxu0 0
    %2888 = vmatpush1.bf16.msra.mxu0 0
    %2889 = vmatprep.subr.bf16.mxu0 0
    %2890 = vmatpush1.bf16.msra.mxu0 0
    %2891 = vmatprep.subr.bf16.mxu0 0
    %2892 = vmatpush1.bf16.msra.mxu0 0
    %2893 = vmatprep.subr.bf16.mxu0 0
    %2894 = vmatpush1.bf16.msra.mxu0 0
    %2895 = vmatprep.subr.bf16.mxu0 0
    %2896 = vmatpush1.bf16.msra.mxu0 0
    %2897 = vmatprep.subr.bf16.mxu0 0
    %2898 = vmatpush1.bf16.msra.mxu0 0
    %2899 = vmatprep.subr.bf16.mxu0 0
    %2900 = vmatpush1.bf16.msra.mxu0 0
    %2901 = vmatprep.mubr.bf16.mxu0 0
    %2902 = vmatmul.mubr.bf16.gmra.mrb[0].mxu0 %v2842
    %v2903 = vpop.f32.mrb[0].mxu0
    %v2904 = vadd.f32 0.0, %v2903
    %v2905 = vpop.f32.mrb[0].mxu0
    %v2906 = vpop.f32.mrb[0].mxu0
    %v2907 = vadd.f32 0.0, %v2906
    %v2908 = vpop.f32.mrb[0].mxu0
    %2909 = vmatprep.mubr.bf16.mxu0 0
    %2910 = vmatmul.mubr.bf16.gmra.mrb[0].mxu0 %v2845
    %v2911 = vpop.f32.mrb[0].mxu0
    %v2912 = vadd.f32 0.0, %v2911
    %v2913 = vpop.f32.mrb[0].mxu0
    %v2914 = vpop.f32.mrb[0].mxu0
    %v2915 = vadd.f32 0.0, %v2914
    %v2916 = vpop.f32.mrb[0].mxu0
    %2917 = vmatprep.mubr.bf16.mxu0 0
    %2918 = vmatmul.mubr.bf16.gmra.mrb[0].mxu0 %v2848
    %v2919 = vpop.f32.mrb[0].mxu0
    %v2920 = vadd.f32 0.0, %v2919
    %v2921 = vpop.f32.mrb[0].mxu0
    %v2922 = vpop.f32.mrb[0].mxu0
    %v2923 = vadd.f32 0.0, %v2922
    %v2924 = vpop.f32.mrb[0].mxu0
    %2925 = vmatprep.mubr.bf16.mxu0 0
    %2926 = vmatmul.mubr.bf16.gmra.mrb[0].mxu0 %v2851
    %v2927 = vpop.f32.mrb[0].mxu0
    %v2928 = vadd.f32 0.0, %v2927
    %v2929 = vpop.f32.mrb[0].mxu0
    %v2930 = vpop.f32.mrb[0].mxu0
    %v2931 = vadd.f32 0.0, %v2930
    %v2932 = vpop.f32.mrb[0].mxu0
    %2933 = vmatprep.mubr.bf16.mxu0 0
    %2934 = vmatmul.mubr.bf16.gmra.mrb[0].mxu0 %v2854
    %v2935 = vpop.f32.mrb[0].mxu0
    %v2936 = vadd.f32 0.0, %v2935
    %v2937 = vpop.f32.mrb[0].mxu0
    %v2938 = vpop.f32.mrb[0].mxu0
    %v2939 = vadd.f32 0.0, %v2938
    %v2940 = vpop.f32.mrb[0].mxu0
    %2941 = vmatprep.mubr.bf16.mxu0 0
    %2942 = vmatmul.mubr.bf16.gmra.mrb[0].mxu0 %v2857
    %v2943 = vpop.f32.mrb[0].mxu0
    %v2944 = vadd.f32 0.0, %v2943
    %v2945 = vpop.f32.mrb[0].mxu0
    %v2946 = vpop.f32.mrb[0].mxu0
    %v2947 = vadd.f32 0.0, %v2946
    %v2948 = vpop.f32.mrb[0].mxu0
    %2949 = vmatprep.mubr.bf16.mxu0 0
    %2950 = vmatmul.mubr.bf16.gmra.mrb[0].mxu0 %v2860
    %v2951 = vpop.f32.mrb[0].mxu0
    %v2952 = vadd.f32 0.0, %v2951
    %v2953 = vpop.f32.mrb[0].mxu0
    %v2954 = vpop.f32.mrb[0].mxu0
    %v2955 = vadd.f32 0.0, %v2954
    %v2956 = vpop.f32.mrb[0].mxu0
    %2957 = vmatprep.mubr.bf16.mxu0 0
    %2958 = vmatmul.mubr.bf16.gmra.mrb[0].mxu0 %v2863
    %v2959 = vpop.f32.mrb[0].mxu0
    %v2960 = vadd.f32 0.0, %v2959
    %v2961 = vpop.f32.mrb[0].mxu0
    %v2962 = vpop.f32.mrb[0].mxu0
    %v2963 = vadd.f32 0.0, %v2962
    %v2964 = vpop.f32.mrb[0].mxu0
    %2965 = vdwg.mxu0
    %v2982 = vunpack.c.l.b16 %v2415
    %v2983 = vunpack.c.l.b16 %v2416
    %v2984 = vunpack.c.l.b16 %v2417
    %v2985 = vunpack.c.l.b16 %v2418
    %v2986 = vunpack.c.l.b16 %v2419
    %v2987 = vunpack.c.l.b16 %v2420
    %v2988 = vunpack.c.l.b16 %v2421
    %v2989 = vunpack.c.l.b16 %v2422
    %v2990 = vunpack.c.l.b16 %v2423
    %v2991 = vunpack.c.l.b16 %v2424
    %v2992 = vunpack.c.l.b16 %v2425
    %v2993 = vunpack.c.l.b16 %v2426
    %v2994 = vunpack.c.l.b16 %v2427
    %v2995 = vunpack.c.l.b16 %v2428
    %v2996 = vunpack.c.l.b16 %v2429
    %v2997 = vunpack.c.l.b16 %v2430
    %v2998 = vpack.c.b16 %v2983, %v2982
    %v2999 = vpack.c.b16 %v2985, %v2984
    %v3000 = vpack.c.b16 %v2987, %v2986
    %v3001 = vpack.c.b16 %v2989, %v2988
    %v3002 = vpack.c.b16 %v2991, %v2990
    %v3003 = vpack.c.b16 %v2993, %v2992
    %v3004 = vpack.c.b16 %v2995, %v2994
    %v3005 = vpack.c.b16 %v2997, %v2996
    %v3009 = vunpack.c.l.b16 %v2431
    %v3010 = vunpack.c.l.b16 %v2432
    %v3011 = vunpack.c.l.b16 %v2433
    %v3012 = vpack.c.b16 %v3010, %v3009
    %v3013 = vpack.c.b16 %v3011, %v3011
    %v3016 = vsel %vm2840, %v2998, 0
    %v3019 = vsel %vm2840, %v2999, 0
    %v3022 = vsel %vm2840, %v3000, 0
    %v3025 = vsel %vm2840, %v3001, 0
    %v3028 = vsel %vm2840, %v3002, 0
    %v3031 = vsel %vm2840, %v3003, 0
    %v3034 = vsel %vm2840, %v3004, 0
    %v3037 = vsel %vm2840, %v3005, 0
    %v3040 = vsel %vm2865, %v3013, 0
    %3042 = vmatprep.subr.bf16.mxu0 0
    %3043 = vmatpush1.bf16.msra.mxu0 %v3012
    %3044 = vmatprep.subr.bf16.mxu0 0
    %3045 = vmatpush1.bf16.msra.mxu0 %v3040
    %3046 = vmatprep.subr.bf16.mxu0 0
    %3047 = vmatpush1.bf16.msra.mxu0 0
    %3048 = vmatprep.subr.bf16.mxu0 0
    %3049 = vmatpush1.bf16.msra.mxu0 0
    %3050 = vmatprep.subr.bf16.mxu0 0
    %3051 = vmatpush1.bf16.msra.mxu0 0
    %3052 = vmatprep.subr.bf16.mxu0 0
    %3053 = vmatpush1.bf16.msra.mxu0 0
    %3054 = vmatprep.subr.bf16.mxu0 0
    %3055 = vmatpush1.bf16.msra.mxu0 0
    %3056 = vmatprep.subr.bf16.mxu0 0
    %3057 = vmatpush1.bf16.msra.mxu0 0
    %3058 = vmatprep.subr.bf16.mxu0 0
    %3059 = vmatpush1.bf16.msra.mxu0 0
    %3060 = vmatprep.subr.bf16.mxu0 0
    %3061 = vmatpush1.bf16.msra.mxu0 0
    %3062 = vmatprep.subr.bf16.mxu0 0
    %3063 = vmatpush1.bf16.msra.mxu0 0
    %3064 = vmatprep.subr.bf16.mxu0 0
    %3065 = vmatpush1.bf16.msra.mxu0 0
    %3066 = vmatprep.subr.bf16.mxu0 0
    %3067 = vmatpush1.bf16.msra.mxu0 0
    %3068 = vmatprep.subr.bf16.mxu0 0
    %3069 = vmatpush1.bf16.msra.mxu0 0
    %3070 = vmatprep.subr.bf16.mxu0 0
    %3071 = vmatpush1.bf16.msra.mxu0 0
    %3072 = vmatprep.subr.bf16.mxu0 0
    %3073 = vmatpush1.bf16.msra.mxu0 0
    %3074 = vmatprep.mubr.bf16.mxu0 0
    %3075 = vmatmul.mubr.bf16.gmra.mrb[0].mxu0 %v3016
    %v3076 = vpop.f32.mrb[0].mxu0
    %v3077 = vadd.f32 %v2904, %v3076
    %v3078 = vpop.f32.mrb[0].mxu0
    %v3079 = vpop.f32.mrb[0].mxu0
    %v3080 = vadd.f32 %v2907, %v3079
    %v3081 = vpop.f32.mrb[0].mxu0
    %3082 = vmatprep.mubr.bf16.mxu0 0
    %3083 = vmatmul.mubr.bf16.gmra.mrb[0].mxu0 %v3019
    %v3084 = vpop.f32.mrb[0].mxu0
    %v3085 = vadd.f32 %v2912, %v3084
    %v3086 = vpop.f32.mrb[0].mxu0
    %v3087 = vpop.f32.mrb[0].mxu0
    %v3088 = vadd.f32 %v2915, %v3087
    %v3089 = vpop.f32.mrb[0].mxu0
    %3090 = vmatprep.mubr.bf16.mxu0 0
    %3091 = vmatmul.mubr.bf16.gmra.mrb[0].mxu0 %v3022
    %v3092 = vpop.f32.mrb[0].mxu0
    %v3093 = vadd.f32 %v2920, %v3092
    %v3094 = vpop.f32.mrb[0].mxu0
    %v3095 = vpop.f32.mrb[0].mxu0
    %v3096 = vadd.f32 %v2923, %v3095
    %v3097 = vpop.f32.mrb[0].mxu0
    %3098 = vmatprep.mubr.bf16.mxu0 0
    %3099 = vmatmul.mubr.bf16.gmra.mrb[0].mxu0 %v3025
    %v3100 = vpop.f32.mrb[0].mxu0
    %v3101 = vadd.f32 %v2928, %v3100
    %v3102 = vpop.f32.mrb[0].mxu0
    %v3103 = vpop.f32.mrb[0].mxu0
    %v3104 = vadd.f32 %v2931, %v3103
    %v3105 = vpop.f32.mrb[0].mxu0
    %3106 = vmatprep.mubr.bf16.mxu0 0
    %3107 = vmatmul.mubr.bf16.gmra.mrb[0].mxu0 %v3028
    %v3108 = vpop.f32.mrb[0].mxu0
    %v3109 = vadd.f32 %v2936, %v3108
    %v3110 = vpop.f32.mrb[0].mxu0
    %v3111 = vpop.f32.mrb[0].mxu0
    %v3112 = vadd.f32 %v2939, %v3111
    %v3113 = vpop.f32.mrb[0].mxu0
    %3114 = vmatprep.mubr.bf16.mxu0 0
    %3115 = vmatmul.mubr.bf16.gmra.mrb[0].mxu0 %v3031
    %v3116 = vpop.f32.mrb[0].mxu0
    %v3117 = vadd.f32 %v2944, %v3116
    %v3118 = vpop.f32.mrb[0].mxu0
    %v3119 = vpop.f32.mrb[0].mxu0
    %v3120 = vadd.f32 %v2947, %v3119
    %v3121 = vpop.f32.mrb[0].mxu0
    %3122 = vmatprep.mubr.bf16.mxu0 0
    %3123 = vmatmul.mubr.bf16.gmra.mrb[0].mxu0 %v3034
    %v3124 = vpop.f32.mrb[0].mxu0
    %v3125 = vadd.f32 %v2952, %v3124
    %v3126 = vpop.f32.mrb[0].mxu0
    %v3127 = vpop.f32.mrb[0].mxu0
    %v3128 = vadd.f32 %v2955, %v3127
    %v3129 = vpop.f32.mrb[0].mxu0
    %3130 = vmatprep.mubr.bf16.mxu0 0
    %3131 = vmatmul.mubr.bf16.gmra.mrb[0].mxu0 %v3037
    %v3132 = vpop.f32.mrb[0].mxu0
    %v3133 = vadd.f32 %v2960, %v3132
    %v3134 = vpop.f32.mrb[0].mxu0
    %v3135 = vpop.f32.mrb[0].mxu0
    %v3136 = vadd.f32 %v2963, %v3135
    %v3137 = vpop.f32.mrb[0].mxu0
    %3138 = vdwg.mxu0
    %s3139 = scalar_lea.vmem [#allocation3], 32
    %v3140 = vld [vmem:[%s3139] sm:$0xff]
    %v3141 = vld [vmem:[%s3139 + $0x10] sm:$0xff]
    %v3142 = vld [vmem:[%s3139 + $0x20] sm:$0xff]
    %v3143 = vld [vmem:[%s3139 + $0x30] sm:$0xff]
    %v3144 = vld [vmem:[%s3139 + $0x40] sm:$0xff]
    %v3145 = vld [vmem:[%s3139 + $0x50] sm:$0xff]
    %v3146 = vld [vmem:[%s3139 + $0x60] sm:$0xff]
    %v3147 = vld [vmem:[%s3139 + $0x70] sm:$0xff]
    %v3148 = vld [vmem:[%s3139 + $0xa0] sm:$0xff]
    %v3149 = vld [vmem:[%s3139 + $0xb0] sm:$0xff]
    %v3150 = vld [vmem:[%s3139 + $0xc0] sm:$0xff]
    %v3151 = vld [vmem:[%s3139 + $0xd0] sm:$0xff]
    %v3152 = vld [vmem:[%s3139 + $0xe0] sm:$0xff]
    %v3153 = vld [vmem:[%s3139 + $0xf0] sm:$0xff]
    %v3154 = vld [vmem:[%s3139 + $0x100] sm:$0xff]
    %v3155 = vld [vmem:[%s3139 + $0x110] sm:$0xff]
    %v3156 = vpack.c.bf16 %v3140, %v3140
    %v3157 = vpack.c.bf16 %v3141, %v3141
    %v3158 = vpack.c.bf16 %v3142, %v3142
    %v3159 = vpack.c.bf16 %v3143, %v3143
    %v3160 = vpack.c.bf16 %v3144, %v3144
    %v3161 = vpack.c.bf16 %v3145, %v3145
    %v3162 = vpack.c.bf16 %v3146, %v3146
    %v3163 = vpack.c.bf16 %v3147, %v3147
    %v3164 = vpack.c.bf16 %v3148, %v3148
    %v3165 = vpack.c.bf16 %v3149, %v3149
    %v3166 = vpack.c.bf16 %v3150, %v3150
    %v3167 = vpack.c.bf16 %v3151, %v3151
    %v3168 = vpack.c.bf16 %v3152, %v3152
    %v3169 = vpack.c.bf16 %v3153, %v3153
    %v3170 = vpack.c.bf16 %v3154, %v3154
    %v3171 = vpack.c.bf16 %v3155, %v3155
    %3172 = vst.msk [vmem:[#allocation5] sm:$0xf] %vm2108, %v3156
    %3173 = vst.msk [vmem:[#allocation5 + $0x4] sm:$0xf] %vm2108, %v3157
    %3174 = vst.msk [vmem:[#allocation5 + $0x8] sm:$0xf] %vm2108, %v3158
    %3175 = vst.msk [vmem:[#allocation5 + $0xc] sm:$0xf] %vm2108, %v3159
    %3176 = vst.msk [vmem:[#allocation5 + $0x10] sm:$0xf] %vm2108, %v3160
    %3177 = vst.msk [vmem:[#allocation5 + $0x14] sm:$0xf] %vm2108, %v3161
    %3178 = vst.msk [vmem:[#allocation5 + $0x18] sm:$0xf] %vm2108, %v3162
    %3179 = vst.msk [vmem:[#allocation5 + $0x1c] sm:$0xf] %vm2108, %v3163
    %3180 = vst.msk [vmem:[#allocation5 + $0x20] sm:$0xf] %vm2108, %v3164
    %3181 = vst.msk [vmem:[#allocation5 + $0x24] sm:$0xf] %vm2108, %v3165
    %3182 = vst.msk [vmem:[#allocation5 + $0x28] sm:$0xf] %vm2108, %v3166
    %3183 = vst.msk [vmem:[#allocation5 + $0x2c] sm:$0xf] %vm2108, %v3167
    %3184 = vst.msk [vmem:[#allocation5 + $0x30] sm:$0xf] %vm2108, %v3168
    %3185 = vst.msk [vmem:[#allocation5 + $0x34] sm:$0xf] %vm2108, %v3169
    %3186 = vst.msk [vmem:[#allocation5 + $0x38] sm:$0xf] %vm2108, %v3170
    %3187 = vst.msk [vmem:[#allocation5 + $0x3c] sm:$0xf] %vm2108, %v3171
    %v3188 = vld [vmem:[%s3139 + $0x1] sm:$0xff]
    %v3189 = vld [vmem:[%s3139 + $0x11] sm:$0xff]
    %v3190 = vld [vmem:[%s3139 + $0x21] sm:$0xff]
    %v3191 = vld [vmem:[%s3139 + $0x31] sm:$0xff]
    %v3192 = vld [vmem:[%s3139 + $0x41] sm:$0xff]
    %v3193 = vld [vmem:[%s3139 + $0x51] sm:$0xff]
    %v3194 = vld [vmem:[%s3139 + $0x61] sm:$0xff]
    %v3195 = vld [vmem:[%s3139 + $0x71] sm:$0xff]
    %v3196 = vld [vmem:[%s3139 + $0xa1] sm:$0xff]
    %v3197 = vld [vmem:[%s3139 + $0xb1] sm:$0xff]
    %v3198 = vld [vmem:[%s3139 + $0xc1] sm:$0xff]
    %v3199 = vld [vmem:[%s3139 + $0xd1] sm:$0xff]
    %v3200 = vld [vmem:[%s3139 + $0xe1] sm:$0xff]
    %v3201 = vld [vmem:[%s3139 + $0xf1] sm:$0xff]
    %v3202 = vld [vmem:[%s3139 + $0x101] sm:$0xff]
    %v3203 = vld [vmem:[%s3139 + $0x111] sm:$0xff]
    %v3204 = vpack.c.bf16 %v3188, %v3188
    %v3205 = vpack.c.bf16 %v3189, %v3189
    %v3206 = vpack.c.bf16 %v3190, %v3190
    %v3207 = vpack.c.bf16 %v3191, %v3191
    %v3208 = vpack.c.bf16 %v3192, %v3192
    %v3209 = vpack.c.bf16 %v3193, %v3193
    %v3210 = vpack.c.bf16 %v3194, %v3194
    %v3211 = vpack.c.bf16 %v3195, %v3195
    %v3212 = vpack.c.bf16 %v3196, %v3196
    %v3213 = vpack.c.bf16 %v3197, %v3197
    %v3214 = vpack.c.bf16 %v3198, %v3198
    %v3215 = vpack.c.bf16 %v3199, %v3199
    %v3216 = vpack.c.bf16 %v3200, %v3200
    %v3217 = vpack.c.bf16 %v3201, %v3201
    %v3218 = vpack.c.bf16 %v3202, %v3202
    %v3219 = vpack.c.bf16 %v3203, %v3203
    %v3236 = vunpack.c.l.b16 %v3204
    %v3237 = vunpack.c.l.b16 %v3205
    %v3238 = vunpack.c.l.b16 %v3206
    %v3239 = vunpack.c.l.b16 %v3207
    %v3240 = vunpack.c.l.b16 %v3208
    %v3241 = vunpack.c.l.b16 %v3209
    %v3242 = vunpack.c.l.b16 %v3210
    %v3243 = vunpack.c.l.b16 %v3211
    %v3244 = vunpack.c.l.b16 %v3212
    %v3245 = vunpack.c.l.b16 %v3213
    %v3246 = vunpack.c.l.b16 %v3214
    %v3247 = vunpack.c.l.b16 %v3215
    %v3248 = vunpack.c.l.b16 %v3216
    %v3249 = vunpack.c.l.b16 %v3217
    %v3250 = vunpack.c.l.b16 %v3218
    %v3251 = vunpack.c.l.b16 %v3219
    %v3252 = vpack.c.b16 %v3236, %v3236
    %v3253 = vpack.c.b16 %v3237, %v3237
    %v3254 = vpack.c.b16 %v3238, %v3238
    %v3255 = vpack.c.b16 %v3239, %v3239
    %v3256 = vpack.c.b16 %v3240, %v3240
    %v3257 = vpack.c.b16 %v3241, %v3241
    %v3258 = vpack.c.b16 %v3242, %v3242
    %v3259 = vpack.c.b16 %v3243, %v3243
    %v3260 = vpack.c.b16 %v3244, %v3244
    %v3261 = vpack.c.b16 %v3245, %v3245
    %v3262 = vpack.c.b16 %v3246, %v3246
    %v3263 = vpack.c.b16 %v3247, %v3247
    %v3264 = vpack.c.b16 %v3248, %v3248
    %v3265 = vpack.c.b16 %v3249, %v3249
    %v3266 = vpack.c.b16 %v3250, %v3250
    %v3267 = vpack.c.b16 %v3251, %v3251
    %3268 = vrot.lane.b32.xlu0 %v3252, 8
    %v3269 = vpop.permute.xlu0 %3268
    %3270 = vrot.lane.b32.xlu0 %v3253, 8
    %v3271 = vpop.permute.xlu0 %3270
    %3272 = vrot.lane.b32.xlu0 %v3254, 8
    %v3273 = vpop.permute.xlu0 %3272
    %3274 = vrot.lane.b32.xlu0 %v3255, 8
    %v3275 = vpop.permute.xlu0 %3274
    %3276 = vrot.lane.b32.xlu0 %v3256, 8
    %v3277 = vpop.permute.xlu0 %3276
    %3278 = vrot.lane.b32.xlu0 %v3257, 8
    %v3279 = vpop.permute.xlu0 %3278
    %3280 = vrot.lane.b32.xlu0 %v3258, 8
    %v3281 = vpop.permute.xlu0 %3280
    %3282 = vrot.lane.b32.xlu0 %v3259, 8
    %v3283 = vpop.permute.xlu0 %3282
    %3284 = vrot.lane.b32.xlu0 %v3260, 8
    %v3285 = vpop.permute.xlu0 %3284
    %3286 = vrot.lane.b32.xlu0 %v3261, 8
    %v3287 = vpop.permute.xlu0 %3286
    %3288 = vrot.lane.b32.xlu0 %v3262, 8
    %v3289 = vpop.permute.xlu0 %3288
    %3290 = vrot.lane.b32.xlu0 %v3263, 8
    %v3291 = vpop.permute.xlu0 %3290
    %3292 = vrot.lane.b32.xlu0 %v3264, 8
    %v3293 = vpop.permute.xlu0 %3292
    %3294 = vrot.lane.b32.xlu0 %v3265, 8
    %v3295 = vpop.permute.xlu0 %3294
    %3296 = vrot.lane.b32.xlu0 %v3266, 8
    %v3297 = vpop.permute.xlu0 %3296
    %3298 = vrot.lane.b32.xlu0 %v3267, 8
    %v3299 = vpop.permute.xlu0 %3298
    %3316 = vst.msk [vmem:[#allocation5] sm:$0xf] %vm2253, %v3269
    %3317 = vst.msk [vmem:[#allocation5 + $0x4] sm:$0xf] %vm2253, %v3271
    %3318 = vst.msk [vmem:[#allocation5 + $0x8] sm:$0xf] %vm2253, %v3273
    %3319 = vst.msk [vmem:[#allocation5 + $0xc] sm:$0xf] %vm2253, %v3275
    %3320 = vst.msk [vmem:[#allocation5 + $0x10] sm:$0xf] %vm2253, %v3277
    %3321 = vst.msk [vmem:[#allocation5 + $0x14] sm:$0xf] %vm2253, %v3279
    %3322 = vst.msk [vmem:[#allocation5 + $0x18] sm:$0xf] %vm2253, %v3281
    %3323 = vst.msk [vmem:[#allocation5 + $0x1c] sm:$0xf] %vm2253, %v3283
    %3324 = vst.msk [vmem:[#allocation5 + $0x20] sm:$0xf] %vm2253, %v3285
    %3325 = vst.msk [vmem:[#allocation5 + $0x24] sm:$0xf] %vm2253, %v3287
    %3326 = vst.msk [vmem:[#allocation5 + $0x28] sm:$0xf] %vm2253, %v3289
    %3327 = vst.msk [vmem:[#allocation5 + $0x2c] sm:$0xf] %vm2253, %v3291
    %3328 = vst.msk [vmem:[#allocation5 + $0x30] sm:$0xf] %vm2253, %v3293
    %3329 = vst.msk [vmem:[#allocation5 + $0x34] sm:$0xf] %vm2253, %v3295
    %3330 = vst.msk [vmem:[#allocation5 + $0x38] sm:$0xf] %vm2253, %v3297
    %3331 = vst.msk [vmem:[#allocation5 + $0x3c] sm:$0xf] %vm2253, %v3299
    %v3332 = vld [vmem:[%s3139 + $0x2] sm:$0xff]
    %v3333 = vld [vmem:[%s3139 + $0x12] sm:$0xff]
    %v3334 = vld [vmem:[%s3139 + $0x22] sm:$0xff]
    %v3335 = vld [vmem:[%s3139 + $0x32] sm:$0xff]
    %v3336 = vld [vmem:[%s3139 + $0x42] sm:$0xff]
    %v3337 = vld [vmem:[%s3139 + $0x52] sm:$0xff]
    %v3338 = vld [vmem:[%s3139 + $0x62] sm:$0xff]
    %v3339 = vld [vmem:[%s3139 + $0x72] sm:$0xff]
    %v3340 = vld [vmem:[%s3139 + $0xa2] sm:$0xff]
    %v3341 = vld [vmem:[%s3139 + $0xb2] sm:$0xff]
    %v3342 = vld [vmem:[%s3139 + $0xc2] sm:$0xff]
    %v3343 = vld [vmem:[%s3139 + $0xd2] sm:$0xff]
    %v3344 = vld [vmem:[%s3139 + $0xe2] sm:$0xff]
    %v3345 = vld [vmem:[%s3139 + $0xf2] sm:$0xff]
    %v3346 = vld [vmem:[%s3139 + $0x102] sm:$0xff]
    %v3347 = vld [vmem:[%s3139 + $0x112] sm:$0xff]
    %v3348 = vpack.c.bf16 %v3332, %v3332
    %v3349 = vpack.c.bf16 %v3333, %v3333
    %v3350 = vpack.c.bf16 %v3334, %v3334
    %v3351 = vpack.c.bf16 %v3335, %v3335
    %v3352 = vpack.c.bf16 %v3336, %v3336
    %v3353 = vpack.c.bf16 %v3337, %v3337
    %v3354 = vpack.c.bf16 %v3338, %v3338
    %v3355 = vpack.c.bf16 %v3339, %v3339
    %v3356 = vpack.c.bf16 %v3340, %v3340
    %v3357 = vpack.c.bf16 %v3341, %v3341
    %v3358 = vpack.c.bf16 %v3342, %v3342
    %v3359 = vpack.c.bf16 %v3343, %v3343
    %v3360 = vpack.c.bf16 %v3344, %v3344
    %v3361 = vpack.c.bf16 %v3345, %v3345
    %v3362 = vpack.c.bf16 %v3346, %v3346
    %v3363 = vpack.c.bf16 %v3347, %v3347
    %v3380 = vunpack.c.l.b16 %v3348
    %v3381 = vunpack.c.l.b16 %v3349
    %v3382 = vunpack.c.l.b16 %v3350
    %v3383 = vunpack.c.l.b16 %v3351
    %v3384 = vunpack.c.l.b16 %v3352
    %v3385 = vunpack.c.l.b16 %v3353
    %v3386 = vunpack.c.l.b16 %v3354
    %v3387 = vunpack.c.l.b16 %v3355
    %v3388 = vunpack.c.l.b16 %v3356
    %v3389 = vunpack.c.l.b16 %v3357
    %v3390 = vunpack.c.l.b16 %v3358
    %v3391 = vunpack.c.l.b16 %v3359
    %v3392 = vunpack.c.l.b16 %v3360
    %v3393 = vunpack.c.l.b16 %v3361
    %v3394 = vunpack.c.l.b16 %v3362
    %v3395 = vunpack.c.l.b16 %v3363
    %v3396 = vpack.c.b16 %v3380, %v3380
    %v3397 = vpack.c.b16 %v3381, %v3381
    %v3398 = vpack.c.b16 %v3382, %v3382
    %v3399 = vpack.c.b16 %v3383, %v3383
    %v3400 = vpack.c.b16 %v3384, %v3384
    %v3401 = vpack.c.b16 %v3385, %v3385
    %v3402 = vpack.c.b16 %v3386, %v3386
    %v3403 = vpack.c.b16 %v3387, %v3387
    %v3404 = vpack.c.b16 %v3388, %v3388
    %v3405 = vpack.c.b16 %v3389, %v3389
    %v3406 = vpack.c.b16 %v3390, %v3390
    %v3407 = vpack.c.b16 %v3391, %v3391
    %v3408 = vpack.c.b16 %v3392, %v3392
    %v3409 = vpack.c.b16 %v3393, %v3393
    %v3410 = vpack.c.b16 %v3394, %v3394
    %v3411 = vpack.c.b16 %v3395, %v3395
    %3412 = vrot.lane.b32.xlu0 %v3396, 16
    %v3413 = vpop.permute.xlu0 %3412
    %3414 = vrot.lane.b32.xlu0 %v3397, 16
    %v3415 = vpop.permute.xlu0 %3414
    %3416 = vrot.lane.b32.xlu0 %v3398, 16
    %v3417 = vpop.permute.xlu0 %3416
    %3418 = vrot.lane.b32.xlu0 %v3399, 16
    %v3419 = vpop.permute.xlu0 %3418
    %3420 = vrot.lane.b32.xlu0 %v3400, 16
    %v3421 = vpop.permute.xlu0 %3420
    %3422 = vrot.lane.b32.xlu0 %v3401, 16
    %v3423 = vpop.permute.xlu0 %3422
    %3424 = vrot.lane.b32.xlu0 %v3402, 16
    %v3425 = vpop.permute.xlu0 %3424
    %3426 = vrot.lane.b32.xlu0 %v3403, 16
    %v3427 = vpop.permute.xlu0 %3426
    %3428 = vrot.lane.b32.xlu0 %v3404, 16
    %v3429 = vpop.permute.xlu0 %3428
    %3430 = vrot.lane.b32.xlu0 %v3405, 16
    %v3431 = vpop.permute.xlu0 %3430
    %3432 = vrot.lane.b32.xlu0 %v3406, 16
    %v3433 = vpop.permute.xlu0 %3432
    %3434 = vrot.lane.b32.xlu0 %v3407, 16
    %v3435 = vpop.permute.xlu0 %3434
    %3436 = vrot.lane.b32.xlu0 %v3408, 16
    %v3437 = vpop.permute.xlu0 %3436
    %3438 = vrot.lane.b32.xlu0 %v3409, 16
    %v3439 = vpop.permute.xlu0 %3438
    %3440 = vrot.lane.b32.xlu0 %v3410, 16
    %v3441 = vpop.permute.xlu0 %3440
    %3442 = vrot.lane.b32.xlu0 %v3411, 16
    %v3443 = vpop.permute.xlu0 %3442
    %3460 = vst.msk [vmem:[#allocation5] sm:$0xf] %vm2398, %v3413
    %3461 = vst.msk [vmem:[#allocation5 + $0x4] sm:$0xf] %vm2398, %v3415
    %3462 = vst.msk [vmem:[#allocation5 + $0x8] sm:$0xf] %vm2398, %v3417
    %3463 = vst.msk [vmem:[#allocation5 + $0xc] sm:$0xf] %vm2398, %v3419
    %3464 = vst.msk [vmem:[#allocation5 + $0x10] sm:$0xf] %vm2398, %v3421
    %3465 = vst.msk [vmem:[#allocation5 + $0x14] sm:$0xf] %vm2398, %v3423
    %3466 = vst.msk [vmem:[#allocation5 + $0x18] sm:$0xf] %vm2398, %v3425
    %3467 = vst.msk [vmem:[#allocation5 + $0x1c] sm:$0xf] %vm2398, %v3427
    %3468 = vst.msk [vmem:[#allocation5 + $0x20] sm:$0xf] %vm2398, %v3429
    %3469 = vst.msk [vmem:[#allocation5 + $0x24] sm:$0xf] %vm2398, %v3431
    %3470 = vst.msk [vmem:[#allocation5 + $0x28] sm:$0xf] %vm2398, %v3433
    %3471 = vst.msk [vmem:[#allocation5 + $0x2c] sm:$0xf] %vm2398, %v3435
    %3472 = vst.msk [vmem:[#allocation5 + $0x30] sm:$0xf] %vm2398, %v3437
    %3473 = vst.msk [vmem:[#allocation5 + $0x34] sm:$0xf] %vm2398, %v3439
    %3474 = vst.msk [vmem:[#allocation5 + $0x38] sm:$0xf] %vm2398, %v3441
    %3475 = vst.msk [vmem:[#allocation5 + $0x3c] sm:$0xf] %vm2398, %v3443
    %v3476 = vld [vmem:[#allocation5] sm:$0xf]
    %v3477 = vld [vmem:[#allocation5 + $0x4] sm:$0xf]
    %v3478 = vld [vmem:[#allocation5 + $0x8] sm:$0xf]
    %v3479 = vld [vmem:[#allocation5 + $0xc] sm:$0xf]
    %v3480 = vld [vmem:[#allocation5 + $0x10] sm:$0xf]
    %v3481 = vld [vmem:[#allocation5 + $0x14] sm:$0xf]
    %v3482 = vld [vmem:[#allocation5 + $0x18] sm:$0xf]
    %v3483 = vld [vmem:[#allocation5 + $0x1c] sm:$0xf]
    %v3484 = vld [vmem:[#allocation5 + $0x20] sm:$0xf]
    %v3485 = vld [vmem:[#allocation5 + $0x24] sm:$0xf]
    %v3486 = vld [vmem:[#allocation5 + $0x28] sm:$0xf]
    %v3487 = vld [vmem:[#allocation5 + $0x2c] sm:$0xf]
    %v3488 = vld [vmem:[#allocation5 + $0x30] sm:$0xf]
    %v3489 = vld [vmem:[#allocation5 + $0x34] sm:$0xf]
    %v3490 = vld [vmem:[#allocation5 + $0x38] sm:$0xf]
    %v3491 = vld [vmem:[#allocation5 + $0x3c] sm:$0xf]
    %s3492 = scalar_lea.vmem %s4, 24
    %v3493 = vld [vmem:[%s3492] sm:$0xf]
    %v3494 = vld [vmem:[%s3492 + $0x4] sm:$0xf]
    %v3495 = vld [vmem:[%s3492 + $0x8] sm:$0xf]
    %v3512 = vunpack.c.l.b16 %v3476
    %v3513 = vunpack.c.l.b16 %v3477
    %v3514 = vunpack.c.l.b16 %v3478
    %v3515 = vunpack.c.l.b16 %v3479
    %v3516 = vunpack.c.l.b16 %v3480
    %v3517 = vunpack.c.l.b16 %v3481
    %v3518 = vunpack.c.l.b16 %v3482
    %v3519 = vunpack.c.l.b16 %v3483
    %v3520 = vunpack.c.l.b16 %v3484
    %v3521 = vunpack.c.l.b16 %v3485
    %v3522 = vunpack.c.l.b16 %v3486
    %v3523 = vunpack.c.l.b16 %v3487
    %v3524 = vunpack.c.l.b16 %v3488
    %v3525 = vunpack.c.l.b16 %v3489
    %v3526 = vunpack.c.l.b16 %v3490
    %v3527 = vunpack.c.l.b16 %v3491
    %v3528 = vpack.c.b16 %v3513, %v3512
    %v3529 = vpack.c.b16 %v3515, %v3514
    %v3530 = vpack.c.b16 %v3517, %v3516
    %v3531 = vpack.c.b16 %v3519, %v3518
    %v3532 = vpack.c.b16 %v3521, %v3520
    %v3533 = vpack.c.b16 %v3523, %v3522
    %v3534 = vpack.c.b16 %v3525, %v3524
    %v3535 = vpack.c.b16 %v3527, %v3526
    %v3539 = vunpack.c.l.b16 %v3493
    %v3540 = vunpack.c.l.b16 %v3494
    %v3541 = vunpack.c.l.b16 %v3495
    %v3542 = vpack.c.b16 %v3540, %v3539
    %v3543 = vpack.c.b16 %v3541, %v3541
    %v3546 = vsel %vm2840, %v3528, 0
    %v3549 = vsel %vm2840, %v3529, 0
    %v3552 = vsel %vm2840, %v3530, 0
    %v3555 = vsel %vm2840, %v3531, 0
    %v3558 = vsel %vm2840, %v3532, 0
    %v3561 = vsel %vm2840, %v3533, 0
    %v3564 = vsel %vm2840, %v3534, 0
    %v3567 = vsel %vm2840, %v3535, 0
    %v3570 = vsel %vm2865, %v3543, 0
    %3572 = vmatprep.subr.bf16.mxu0 0
    %3573 = vmatpush1.bf16.msra.mxu0 %v3542
    %3574 = vmatprep.subr.bf16.mxu0 0
    %3575 = vmatpush1.bf16.msra.mxu0 %v3570
    %3576 = vmatprep.subr.bf16.mxu0 0
    %3577 = vmatpush1.bf16.msra.mxu0 0
    %3578 = vmatprep.subr.bf16.mxu0 0
    %3579 = vmatpush1.bf16.msra.mxu0 0
    %3580 = vmatprep.subr.bf16.mxu0 0
    %3581 = vmatpush1.bf16.msra.mxu0 0
    %3582 = vmatprep.subr.bf16.mxu0 0
    %3583 = vmatpush1.bf16.msra.mxu0 0
    %3584 = vmatprep.subr.bf16.mxu0 0
    %3585 = vmatpush1.bf16.msra.mxu0 0
    %3586 = vmatprep.subr.bf16.mxu0 0
    %3587 = vmatpush1.bf16.msra.mxu0 0
    %3588 = vmatprep.subr.bf16.mxu0 0
    %3589 = vmatpush1.bf16.msra.mxu0 0
    %3590 = vmatprep.subr.bf16.mxu0 0
    %3591 = vmatpush1.bf16.msra.mxu0 0
    %3592 = vmatprep.subr.bf16.mxu0 0
    %3593 = vmatpush1.bf16.msra.mxu0 0
    %3594 = vmatprep.subr.bf16.mxu0 0
    %3595 = vmatpush1.bf16.msra.mxu0 0
    %3596 = vmatprep.subr.bf16.mxu0 0
    %3597 = vmatpush1.bf16.msra.mxu0 0
    %3598 = vmatprep.subr.bf16.mxu0 0
    %3599 = vmatpush1.bf16.msra.mxu0 0
    %3600 = vmatprep.subr.bf16.mxu0 0
    %3601 = vmatpush1.bf16.msra.mxu0 0
    %3602 = vmatprep.subr.bf16.mxu0 0
    %3603 = vmatpush1.bf16.msra.mxu0 0
    %3604 = vmatprep.mubr.bf16.mxu0 0
    %3605 = vmatmul.mubr.bf16.gmra.mrb[0].mxu0 %v3546
    %v3606 = vpop.f32.mrb[0].mxu0
    %v3607 = vadd.f32 0.0, %v3606
    %v3608 = vpop.f32.mrb[0].mxu0
    %v3609 = vpop.f32.mrb[0].mxu0
    %v3610 = vadd.f32 0.0, %v3609
    %v3611 = vpop.f32.mrb[0].mxu0
    %3612 = vmatprep.mubr.bf16.mxu0 0
    %3613 = vmatmul.mubr.bf16.gmra.mrb[0].mxu0 %v3549
    %v3614 = vpop.f32.mrb[0].mxu0
    %v3615 = vadd.f32 0.0, %v3614
    %v3616 = vpop.f32.mrb[0].mxu0
    %v3617 = vpop.f32.mrb[0].mxu0
    %v3618 = vadd.f32 0.0, %v3617
    %v3619 = vpop.f32.mrb[0].mxu0
    %3620 = vmatprep.mubr.bf16.mxu0 0
    %3621 = vmatmul.mubr.bf16.gmra.mrb[0].mxu0 %v3552
    %v3622 = vpop.f32.mrb[0].mxu0
    %v3623 = vadd.f32 0.0, %v3622
    %v3624 = vpop.f32.mrb[0].mxu0
    %v3625 = vpop.f32.mrb[0].mxu0
    %v3626 = vadd.f32 0.0, %v3625
    %v3627 = vpop.f32.mrb[0].mxu0
    %3628 = vmatprep.mubr.bf16.mxu0 0
    %3629 = vmatmul.mubr.bf16.gmra.mrb[0].mxu0 %v3555
    %v3630 = vpop.f32.mrb[0].mxu0
    %v3631 = vadd.f32 0.0, %v3630
    %v3632 = vpop.f32.mrb[0].mxu0
    %v3633 = vpop.f32.mrb[0].mxu0
    %v3634 = vadd.f32 0.0, %v3633
    %v3635 = vpop.f32.mrb[0].mxu0
    %3636 = vmatprep.mubr.bf16.mxu0 0
    %3637 = vmatmul.mubr.bf16.gmra.mrb[0].mxu0 %v3558
    %v3638 = vpop.f32.mrb[0].mxu0
    %v3639 = vadd.f32 0.0, %v3638
    %v3640 = vpop.f32.mrb[0].mxu0
    %v3641 = vpop.f32.mrb[0].mxu0
    %v3642 = vadd.f32 0.0, %v3641
    %v3643 = vpop.f32.mrb[0].mxu0
    %3644 = vmatprep.mubr.bf16.mxu0 0
    %3645 = vmatmul.mubr.bf16.gmra.mrb[0].mxu0 %v3561
    %v3646 = vpop.f32.mrb[0].mxu0
    %v3647 = vadd.f32 0.0, %v3646
    %v3648 = vpop.f32.mrb[0].mxu0
    %v3649 = vpop.f32.mrb[0].mxu0
    %v3650 = vadd.f32 0.0, %v3649
    %v3651 = vpop.f32.mrb[0].mxu0
    %3652 = vmatprep.mubr.bf16.mxu0 0
    %3653 = vmatmul.mubr.bf16.gmra.mrb[0].mxu0 %v3564
    %v3654 = vpop.f32.mrb[0].mxu0
    %v3655 = vadd.f32 0.0, %v3654
    %v3656 = vpop.f32.mrb[0].mxu0
    %v3657 = vpop.f32.mrb[0].mxu0
    %v3658 = vadd.f32 0.0, %v3657
    %v3659 = vpop.f32.mrb[0].mxu0
    %3660 = vmatprep.mubr.bf16.mxu0 0
    %3661 = vmatmul.mubr.bf16.gmra.mrb[0].mxu0 %v3567
    %v3662 = vpop.f32.mrb[0].mxu0
    %v3663 = vadd.f32 0.0, %v3662
    %v3664 = vpop.f32.mrb[0].mxu0
    %v3665 = vpop.f32.mrb[0].mxu0
    %v3666 = vadd.f32 0.0, %v3665
    %v3667 = vpop.f32.mrb[0].mxu0
    %3668 = vdwg.mxu0
    %v3669 = vadd.f32 %v3077, %v3607
    %v3670 = vadd.f32 %v3080, %v3610
    %v3671 = vadd.f32 %v3085, %v3615
    %v3672 = vadd.f32 %v3088, %v3618
    %v3673 = vadd.f32 %v3093, %v3623
    %v3674 = vadd.f32 %v3096, %v3626
    %v3675 = vadd.f32 %v3101, %v3631
    %v3676 = vadd.f32 %v3104, %v3634
    %v3677 = vadd.f32 %v3109, %v3639
    %v3678 = vadd.f32 %v3112, %v3642
    %v3679 = vadd.f32 %v3117, %v3647
    %v3680 = vadd.f32 %v3120, %v3650
    %v3681 = vadd.f32 %v3125, %v3655
    %v3682 = vadd.f32 %v3128, %v3658
    %v3683 = vadd.f32 %v3133, %v3663
    %v3684 = vadd.f32 %v3136, %v3666
    %v3685 = vadd.f32 %v3669, %v3670
    %v3686 = vadd.f32 %v3685, %v3671
    %v3687 = vadd.f32 %v3686, %v3672
    %v3688 = vadd.f32 %v3687, %v3673
    %v3689 = vadd.f32 %v3688, %v3674
    %v3690 = vadd.f32 %v3689, %v3675
    %v3691 = vadd.f32 %v3690, %v3676
    %v3692 = vadd.f32 %v3691, %v3677
    %v3693 = vadd.f32 %v3692, %v3678
    %v3694 = vadd.f32 %v3693, %v3679
    %v3695 = vadd.f32 %v3694, %v3680
    %v3696 = vadd.f32 %v3695, %v3681
    %v3697 = vadd.f32 %v3696, %v3682
    %v3698 = vadd.f32 %v3697, %v3683
    %v3699 = vadd.f32 %v3698, %v3684
    %v3700 = vrot.slane %v3699, 4
    %v3701 = vadd.f32 %v3699, %v3700
    %v3702 = vrot.slane %v3701, 2
    %v3703 = vadd.f32 %v3701, %v3702
    %v3704 = vrot.slane %v3703, 1
    %v3705 = vadd.f32 %v3703, %v3704
    %v3706 = vrcp.pop 128.0
    %v3707 = vmul.f32 %v3705, %v3706
    %v3708 = vsub.f32 %v3669, %v3707
    %v3709 = vsub.f32 %v3670, %v3707
    %v3710 = vsub.f32 %v3671, %v3707
    %v3711 = vsub.f32 %v3672, %v3707
    %v3712 = vsub.f32 %v3673, %v3707
    %v3713 = vsub.f32 %v3674, %v3707
    %v3714 = vsub.f32 %v3675, %v3707
    %v3715 = vsub.f32 %v3676, %v3707
    %v3716 = vsub.f32 %v3677, %v3707
    %v3717 = vsub.f32 %v3678, %v3707
    %v3718 = vsub.f32 %v3679, %v3707
    %v3719 = vsub.f32 %v3680, %v3707
    %v3720 = vsub.f32 %v3681, %v3707
    %v3721 = vsub.f32 %v3682, %v3707
    %v3722 = vsub.f32 %v3683, %v3707
    %v3723 = vsub.f32 %v3684, %v3707
    %v3724 = vmul.f32 %v3708, %v3708
    %v3725 = vmul.f32 %v3709, %v3709
    %v3726 = vmul.f32 %v3710, %v3710
    %v3727 = vmul.f32 %v3711, %v3711
    %v3728 = vmul.f32 %v3712, %v3712
    %v3729 = vmul.f32 %v3713, %v3713
    %v3730 = vmul.f32 %v3714, %v3714
    %v3731 = vmul.f32 %v3715, %v3715
    %v3732 = vmul.f32 %v3716, %v3716
    %v3733 = vmul.f32 %v3717, %v3717
    %v3734 = vmul.f32 %v3718, %v3718
    %v3735 = vmul.f32 %v3719, %v3719
    %v3736 = vmul.f32 %v3720, %v3720
    %v3737 = vmul.f32 %v3721, %v3721
    %v3738 = vmul.f32 %v3722, %v3722
    %v3739 = vmul.f32 %v3723, %v3723
    %v3740 = vadd.f32 %v3724, %v3725
    %v3741 = vadd.f32 %v3740, %v3726
    %v3742 = vadd.f32 %v3741, %v3727
    %v3743 = vadd.f32 %v3742, %v3728
    %v3744 = vadd.f32 %v3743, %v3729
    %v3745 = vadd.f32 %v3744, %v3730
    %v3746 = vadd.f32 %v3745, %v3731
    %v3747 = vadd.f32 %v3746, %v3732
    %v3748 = vadd.f32 %v3747, %v3733
    %v3749 = vadd.f32 %v3748, %v3734
    %v3750 = vadd.f32 %v3749, %v3735
    %v3751 = vadd.f32 %v3750, %v3736
    %v3752 = vadd.f32 %v3751, %v3737
    %v3753 = vadd.f32 %v3752, %v3738
    %v3754 = vadd.f32 %v3753, %v3739
    %v3755 = vrot.slane %v3754, 4
    %v3756 = vadd.f32 %v3754, %v3755
    %v3757 = vrot.slane %v3756, 2
    %v3758 = vadd.f32 %v3756, %v3757
    %v3759 = vrot.slane %v3758, 1
    %v3760 = vadd.f32 %v3758, %v3759
    %v3761 = vmul.f32 %v3760, %v3706
    %v3762 = vadd.f32 %v3761, 1e-05
    %v3763 = vrsqrt.pop %v3762
    %v3764 = vmul.f32 %v3708, %v3763
    %v3765 = vmul.f32 %v3709, %v3763
    %v3766 = vmul.f32 %v3710, %v3763
    %v3767 = vmul.f32 %v3711, %v3763
    %v3768 = vmul.f32 %v3712, %v3763
    %v3769 = vmul.f32 %v3713, %v3763
    %v3770 = vmul.f32 %v3714, %v3763
    %v3771 = vmul.f32 %v3715, %v3763
    %v3772 = vmul.f32 %v3716, %v3763
    %v3773 = vmul.f32 %v3717, %v3763
    %v3774 = vmul.f32 %v3718, %v3763
    %v3775 = vmul.f32 %v3719, %v3763
    %v3776 = vmul.f32 %v3720, %v3763
    %v3777 = vmul.f32 %v3721, %v3763
    %v3778 = vmul.f32 %v3722, %v3763
    %v3779 = vmul.f32 %v3723, %v3763
    %v3780 = vld [vmem:[%s5] sm:$0x1]
    %v3782 = vlaneseq
    %v3783 = vshrl.u32 %v3782, 7
    %v3784 = vsub.s32 0, %v3783
    %v3785 = vrot.slane %v3780, %v3784
    %v3787 = vmul.f32 %v3764, %v3785
    %v3788 = vmul.f32 %v3765, %v3785
    %v3789 = vmul.f32 %v3766, %v3785
    %v3790 = vmul.f32 %v3767, %v3785
    %v3791 = vmul.f32 %v3768, %v3785
    %v3792 = vmul.f32 %v3769, %v3785
    %v3793 = vmul.f32 %v3770, %v3785
    %v3794 = vmul.f32 %v3771, %v3785
    %v3795 = vmul.f32 %v3772, %v3785
    %v3796 = vmul.f32 %v3773, %v3785
    %v3797 = vmul.f32 %v3774, %v3785
    %v3798 = vmul.f32 %v3775, %v3785
    %v3799 = vmul.f32 %v3776, %v3785
    %v3800 = vmul.f32 %v3777, %v3785
    %v3801 = vmul.f32 %v3778, %v3785
    %v3802 = vmul.f32 %v3779, %v3785
    %v3803 = vld [vmem:[%s6] sm:$0x1]
    %v3805 = vlaneseq
    %v3806 = vshrl.u32 %v3805, 7
    %v3807 = vsub.s32 0, %v3806
    %v3808 = vrot.slane %v3803, %v3807
    %v3810 = vadd.f32 %v3787, %v3808
    %v3811 = vadd.f32 %v3788, %v3808
    %v3812 = vadd.f32 %v3789, %v3808
    %v3813 = vadd.f32 %v3790, %v3808
    %v3814 = vadd.f32 %v3791, %v3808
    %v3815 = vadd.f32 %v3792, %v3808
    %v3816 = vadd.f32 %v3793, %v3808
    %v3817 = vadd.f32 %v3794, %v3808
    %v3818 = vadd.f32 %v3795, %v3808
    %v3819 = vadd.f32 %v3796, %v3808
    %v3820 = vadd.f32 %v3797, %v3808
    %v3821 = vadd.f32 %v3798, %v3808
    %v3822 = vadd.f32 %v3799, %v3808
    %v3823 = vadd.f32 %v3800, %v3808
    %v3824 = vadd.f32 %v3801, %v3808
    %v3825 = vadd.f32 %v3802, %v3808
    %v3826 = vmax.f32 %v3810, 0.0
    %v3827 = vmax.f32 %v3811, 0.0
    %v3828 = vmax.f32 %v3812, 0.0
    %v3829 = vmax.f32 %v3813, 0.0
    %v3830 = vmax.f32 %v3814, 0.0
    %v3831 = vmax.f32 %v3815, 0.0
    %v3832 = vmax.f32 %v3816, 0.0
    %v3833 = vmax.f32 %v3817, 0.0
    %v3834 = vmax.f32 %v3818, 0.0
    %v3835 = vmax.f32 %v3819, 0.0
    %v3836 = vmax.f32 %v3820, 0.0
    %v3837 = vmax.f32 %v3821, 0.0
    %v3838 = vmax.f32 %v3822, 0.0
    %v3839 = vmax.f32 %v3823, 0.0
    %v3840 = vmax.f32 %v3824, 0.0
    %v3841 = vmax.f32 %v3825, 0.0
    %3842 = vst [vmem:[%s7] sm:$0xff] %v3826
    %3843 = vst [vmem:[%s7 + $0x8] sm:$0xff] %v3827
    %3844 = vst [vmem:[%s7 + $0x10] sm:$0xff] %v3828
    %3845 = vst [vmem:[%s7 + $0x18] sm:$0xff] %v3829
    %3846 = vst [vmem:[%s7 + $0x20] sm:$0xff] %v3830
    %3847 = vst [vmem:[%s7 + $0x28] sm:$0xff] %v3831
    %3848 = vst [vmem:[%s7 + $0x30] sm:$0xff] %v3832
    %3849 = vst [vmem:[%s7 + $0x38] sm:$0xff] %v3833
    %3850 = vst [vmem:[%s7 + $0x40] sm:$0xff] %v3834
    %3851 = vst [vmem:[%s7 + $0x48] sm:$0xff] %v3835
    %3852 = vst [vmem:[%s7 + $0x50] sm:$0xff] %v3836
    %3853 = vst [vmem:[%s7 + $0x58] sm:$0xff] %v3837
    %3854 = vst [vmem:[%s7 + $0x60] sm:$0xff] %v3838
    %3855 = vst [vmem:[%s7 + $0x68] sm:$0xff] %v3839
    %3856 = vst [vmem:[%s7 + $0x70] sm:$0xff] %v3840
    %3857 = vst [vmem:[%s7 + $0x78] sm:$0xff] %v3841
  // Predicated region
  $region32: #{downsample_forward.1} parent=0 // pred_check
    _
  $region33: #{downsample_forward.1} parent=0 // pred_check_branch
    %3859 = sbr.rel (0) target = $region35
  $region34: #{downsample_forward.1} parent=0 // pred_region
    _
  $region35: #{downsample_forward.1} parent=0 // pred_fallthru
    _
  // Predicated region
  $region36: #{downsample_forward.1} parent=0 // pred_check
    _
  $region37: #{downsample_forward.1} parent=0 // pred_check_branch
    %3861 = sbr.rel (0) target = $region39
  $region38: #{downsample_forward.1} parent=0 // pred_region
    _
  $region39: #{downsample_forward.1} parent=0 // pred_fallthru
    _

</llo_original>
